<compile_context>
chip_gen: v5e
topology: v5e:2x2
jax: 0.10.0
libtpu: 0.0.40
codegen_flags: <defaults>
</compile_context>

<pallas_src>
import functools
import math

import numpy as np
import jax
import jax.numpy as jnp
from jax import lax
from jax.experimental import pallas as pl
from jax.experimental.pallas import tpu as pltpu


# ---------------------------------------------------------------------------
# hardware-aware helpers
# ---------------------------------------------------------------------------
@functools.lru_cache(maxsize=1)
def _device_kind():
    try:
        return jax.devices()[0].device_kind.lower()
    except Exception:
        return ""


@functools.lru_cache(maxsize=1)
def _vmem_limit_bytes():
    cap = 128 << 20
    try:
        cap = int(getattr(pltpu.get_tpu_info(), "vmem_capacity_bytes", cap))
    except Exception:
        pass
    # stay well under physical VMEM (v7x: 64 MiB) but raise the scoped default
    # (16 MiB on v5e) so the legal large tiles below are always allowed.
    return int(min(cap // 2, 64 << 20))


def _is_v5e():
    k = _device_kind()
    return ("v5 lite" in k) or ("v5e" in k) or ("v5lite" in k)


def _largest_tile(m, cap):
    """Largest divisor of m that is <= cap and a multiple of 8 (or m itself)."""
    if m <= cap:
        return m
    for t in range(int(cap), 7, -1):
        if m % t == 0 and t % 8 == 0:
            return t
    return m


def _pick_tn(n):
    # v6e/v7x MXU is 2x256x256 -> prefer 256-wide output tiles; v5e (4x128x128,
    # single vst slot) prefers 128.  Falling back to the full dim is legal.
    if not _is_v5e() and n % 256 == 0:
        return 256
    if n % 128 == 0:
        return 128
    if n % 256 == 0:
        return 256
    return n


def _pick_tm(m, ck, tn, x_bytes, out_bytes, budget=16 << 20):
    """Row tile capped at 512 and by a VMEM byte budget (double buffers)."""
    denom = 2 * ck * x_bytes + 2 * tn * out_bytes + tn * 4   # x + out + acc
    cap = max(8, (budget - 4 * ck * tn) // denom)            # minus bf16 w bufs
    return _largest_tile(m, int(min(cap, 512)))


def _pick_rows(mf, cf, n_streams, budget=8 << 20):
    """Elementwise-pass row tile from a byte budget (f32, double-buffered)."""
    per_row = cf * 4 * n_streams * 2
    return _largest_tile(mf, max(8, int(budget // per_row)))


# ---------------------------------------------------------------------------
# Pallas kernel 1: chunked-K matmul, optional fused LHS BN+ReLU, fused BN stats
# ---------------------------------------------------------------------------
def _mm_stats_kernel(*refs, lhs_bn):
    if lhs_bn:
        x_ref, s_ref, b_ref, w_ref, o_ref, sum_ref, ssq_ref, acc_ref = refs
    else:
        x_ref, w_ref, o_ref, sum_ref, ssq_ref, acc_ref = refs
        s_ref = b_ref = None
    k = pl.program_id(2)

    @pl.when(k == 0)
    def _init():
        acc_ref[...] = jnp.zeros_like(acc_ref)

    x = x_ref[0]
    if lhs_bn:
        # fused BatchNorm-apply + ReLU on the LHS (conv2's raw output)
        x = jnp.maximum(x.astype(jnp.float32) * s_ref[0] + b_ref[0], 0.0)
    acc_ref[...] += jnp.dot(x.astype(jnp.bfloat16), w_ref[0],
                            preferred_element_type=jnp.float32)

    @pl.when(k == pl.num_programs(2) - 1)
    def _fin():
        acc = acc_ref[...]
        o_ref[...] = acc.astype(o_ref.dtype)
        sum_ref[0] = jnp.sum(acc, axis=0, keepdims=True)       # (1, tn)
        ssq_ref[0] = jnp.sum(acc * acc, axis=0, keepdims=True)  # (1, tn)


def pallas_matmul_stats(x_kg, w_kg, lhs_scale=None, lhs_shift=None,
                        out_dtype=jnp.float32):
    """out = [relu(x*scale+shift)] @ w, plus per-column sum / sum-of-squares.

    x_kg: (KG, M, Ck) bf16; w_kg: (KG, Ck, N) bf16;
    lhs_scale/lhs_shift: optional (KG, 1, Ck) f32 (fused BN+ReLU on LHS).
    Returns out (M, N) out_dtype, col_sum (N,) f32, col_ssq (N,) f32.
    """
    KG, M, Ck = x_kg.shape
    _, _, N = w_kg.shape
    tn = _pick_tn(N)
    tm = _pick_tm(M, Ck, tn, jnp.dtype(x_kg.dtype).itemsize,
                  jnp.dtype(out_dtype).itemsize)
    mb, nb = M // tm, N // tn
    lhs_bn = lhs_scale is not None

    in_specs = [pl.BlockSpec((1, tm, Ck), lambda i, j, k: (k, i, 0))]
    args = [x_kg]
    if lhs_bn:
        vec_spec = pl.BlockSpec((1, 1, Ck), lambda i, j, k: (k, 0, 0))
        in_specs += [vec_spec, vec_spec]
        args += [lhs_scale, lhs_shift]
    in_specs.append(pl.BlockSpec((1, Ck, tn), lambda i, j, k: (k, 0, j)))
    args.append(w_kg)

    out, sums, ssqs = pl.pallas_call(
        functools.partial(_mm_stats_kernel, lhs_bn=lhs_bn),
        out_shape=(
            jax.ShapeDtypeStruct((M, N), out_dtype),
            jax.ShapeDtypeStruct((mb, 1, N), jnp.float32),
            jax.ShapeDtypeStruct((mb, 1, N), jnp.float32),
        ),
        grid_spec=pltpu.PrefetchScalarGridSpec(
            num_scalar_prefetch=0,
            grid=(mb, nb, KG),
            in_specs=in_specs,
            out_specs=[
                pl.BlockSpec((tm, tn), lambda i, j, k: (i, j)),
                pl.BlockSpec((1, 1, tn), lambda i, j, k: (i, 0, j)),
                pl.BlockSpec((1, 1, tn), lambda i, j, k: (i, 0, j)),
            ],
            scratch_shapes=[pltpu.VMEM((tm, tn), jnp.float32)],
        ),
        compiler_params=pltpu.CompilerParams(
            dimension_semantics=("parallel", "parallel", "arbitrary"),
            vmem_limit_bytes=_vmem_limit_bytes()),
    )(*args)
    col_sum = jnp.sum(sums[:, 0, :], axis=0)
    col_ssq = jnp.sum(ssqs[:, 0, :], axis=0)
    return out, col_sum, col_ssq


# ---------------------------------------------------------------------------
# Pallas kernel 2: packed-group direct 3x3 conv with fused BN1-apply + ReLU
# ---------------------------------------------------------------------------
def _gconv_kernel(x_ref, m_ref, s_ref, b_ref, w_ref, o_ref, sum_ref, ssq_ref,
                  acc_ref, *, ksize, stride, ho, wo):
    cpk = x_ref.shape[-1]
    rows = ho * wo
    # Fused BN1-apply + ReLU on the raw conv1 activations; the 0/1 mask keeps
    # zero-padded border positions exactly zero after the affine + ReLU.
    xb = x_ref[0].astype(jnp.float32)                    # (ss, 1, Hq, Wq, Cpk)
    xb = jnp.maximum(xb * s_ref[0] + b_ref[0], 0.0)
    xb = (xb * m_ref[...]).astype(jnp.bfloat16)

    acc_ref[...] = jnp.zeros_like(acc_ref)
    for kh in range(ksize):
        for kw in range(ksize):
            p, q = kh % stride, kw % stride
            oh, ow = kh // stride, kw // stride
            # unstrided static slice of the parity-decomposed padded input
            win = xb[p * stride + q, 0, oh:oh + ho, ow:ow + wo, :]
            acc_ref[...] += jnp.dot(win.reshape(rows, cpk), w_ref[0, kh, kw],
                                    preferred_element_type=jnp.float32)
    acc = acc_ref[...]
    o_ref[0] = acc.astype(o_ref.dtype)
    sum_ref[0, 0] = jnp.sum(acc, axis=0, keepdims=True)
    ssq_ref[0, 0] = jnp.sum(acc * acc, axis=0, keepdims=True)


def pallas_grouped_conv3x3(xprep, mask, scale1, shift1, w_bd, *, stride, ho,
                           wo, out_dtype=jnp.bfloat16):
    """Packed-group direct 3x3 conv (no im2col).

    xprep:  (GP, s*s, N, Hq, Wq, Cpk) bf16 raw conv1 output, padded +
            parity-decomposed, packed-group-major channels.
    mask:   (s*s, 1, Hq, Wq, Cpk) f32 validity (1 real pixel / 0 padding).
    scale1/shift1: (GP, 1, 1, 1, 1, Cpk) f32 fused BN1 affine.
    w_bd:   (GP, 3, 3, Cpk, Copk) bf16 block-diagonal packed group weights.
    Returns out (GP, N*Ho*Wo, Copk) and per-(gp, n) channel sum / sumsq.
    """
    GP, ss, Nb, Hq, Wq, Cpk = xprep.shape
    _, K, _, _, Copk = w_bd.shape
    rows = ho * wo
    M = Nb * rows

    # TODO(synk): for very large spatial extents, add an output-row grid axis
    # with a +1-row halo (pl.Element blocks) instead of one image per step.
    kern = functools.partial(_gconv_kernel, ksize=K, stride=stride, ho=ho,
                             wo=wo)
    out, sums, ssqs = pl.pallas_call(
        kern,
        out_shape=(
            jax.ShapeDtypeStruct((GP, M, Copk), out_dtype),
            jax.ShapeDtypeStruct((GP, Nb, 1, Copk), jnp.float32),
            jax.ShapeDtypeStruct((GP, Nb, 1, Copk), jnp.float32),
        ),
        grid_spec=pltpu.PrefetchScalarGridSpec(
            num_scalar_prefetch=0,
            grid=(GP, Nb),
            in_specs=[
                pl.BlockSpec((1, ss, 1, Hq, Wq, Cpk),
                             lambda g, n: (g, 0, n, 0, 0, 0)),
                pl.BlockSpec((ss, 1, Hq, Wq, Cpk),
                             lambda g, n: (0, 0, 0, 0, 0)),
                pl.BlockSpec((1, 1, 1, 1, 1, Cpk),
                             lambda g, n: (g, 0, 0, 0, 0, 0)),
                pl.BlockSpec((1, 1, 1, 1, 1, Cpk),
                             lambda g, n: (g, 0, 0, 0, 0, 0)),
                pl.BlockSpec((1, K, K, Cpk, Copk),
                             lambda g, n: (g, 0, 0, 0, 0)),
            ],
            out_specs=[
                pl.BlockSpec((1, rows, Copk), lambda g, n: (g, n, 0)),
                pl.BlockSpec((1, 1, 1, Copk), lambda g, n: (g, n, 0, 0)),
                pl.BlockSpec((1, 1, 1, Copk), lambda g, n: (g, n, 0, 0)),
            ],
            scratch_shapes=[pltpu.VMEM((rows, Copk), jnp.float32)],
        ),
        compiler_params=pltpu.CompilerParams(
            dimension_semantics=("parallel", "parallel"),
            vmem_limit_bytes=_vmem_limit_bytes()),
    )(xprep, mask, scale1, shift1, w_bd)
    return out, sums, ssqs


# ---------------------------------------------------------------------------
# Pallas kernel 3: fused BN-apply (+ ReLU, + residual, + residual-BN)
# ---------------------------------------------------------------------------
def _affine_kernel(x_ref, s_ref, b_ref, *rest, relu, has_res, res_affine):
    if has_res and res_affine:
        r_ref, rs_ref, rb_ref, o_ref = rest
    elif has_res:
        r_ref, o_ref = rest
        rs_ref = rb_ref = None
    else:
        (o_ref,) = rest
        r_ref = rs_ref = rb_ref = None
    y = x_ref[...] * s_ref[...] + b_ref[...]
    if has_res:
        r = r_ref[...]
        if res_affine:
            r = r * rs_ref[...] + rb_ref[...]
        y = y + r
    if relu:
        y = jnp.maximum(y, 0.0)
    o_ref[...] = y


def pallas_bn_apply(x3, scale, shift, residual=None, res_scale=None,
                    res_shift=None, relu=False):
    """y = x*scale + shift (+ residual[*res_scale + res_shift]) (+ relu).

    x3: (G, M, C) f32; scale/shift: (G, C); residual: (G, M, C) or None.
    When C < 128 rows are folded into the lane dim (lane-dense stores)."""
    G, M, C = x3.shape
    f = 1
    if C < 128 and 128 % C == 0 and M % (128 // C) == 0:
        f = 128 // C
    Mf, Cf = M // f, C * f

    def densify(a):
        return a.reshape(G, Mf, Cf)

    def tile_vec(v):
        return jnp.tile(v.reshape(G, 1, C), (1, 1, f))

    has_res = residual is not None
    res_affine = has_res and res_scale is not None
    n_streams = 2 + (1 if has_res else 0)

    ins = [densify(x3), tile_vec(scale), tile_vec(shift)]
    tm = _pick_rows(Mf, Cf, n_streams)
    row_spec = pl.BlockSpec((1, tm, Cf), lambda g, i: (g, i, 0))
    vec_spec = pl.BlockSpec((1, 1, Cf), lambda g, i: (g, 0, 0))
    in_specs = [row_spec, vec_spec, vec_spec]
    if has_res:
        ins.append(densify(residual))
        in_specs.append(row_spec)
        if res_affine:
            ins += [tile_vec(res_scale), tile_vec(res_shift)]
            in_specs += [vec_spec, vec_spec]

    out = pl.pallas_call(
        functools.partial(_affine_kernel, relu=relu, has_res=has_res,
                          res_affine=res_affine),
        out_shape=jax.ShapeDtypeStruct((G, Mf, Cf), jnp.float32),
        grid_spec=pltpu.PrefetchScalarGridSpec(
            num_scalar_prefetch=0,
            grid=(G, Mf // tm),
            in_specs=in_specs,
            out_specs=row_spec,
        ),
        compiler_params=pltpu.CompilerParams(
            dimension_semantics=("parallel", "parallel"),
            vmem_limit_bytes=_vmem_limit_bytes()),
    )(*ins)
    return out.reshape(G, M, C)


def _bn_scale_shift(col_sum, col_ssq, count, gamma, beta, eps=1e-5):
    """Training-mode BatchNorm (biased batch variance) -> per-channel affine."""
    mean = col_sum / count
    var = jnp.maximum(col_ssq / count - mean * mean, 0.0)
    inv = gamma * lax.rsqrt(var + eps)
    return inv, beta - mean * inv


# ---------------------------------------------------------------------------
# layout helpers for the grouped conv (pad + parity decompose + group packing)
# ---------------------------------------------------------------------------
def _pick_gpack(groups, cg, cog):
    """Smallest divisor of `groups` so packed K and N are >= 128 (MXU-full)."""
    for d in range(1, groups + 1):
        if groups % d == 0 and d * cg >= 128 and d * cog >= 128:
            return d
    return groups


def _pack_block_diag(w2, gpack):
    """(G, k, k, cg, cog) -> block-diagonal (GP, k, k, gpack*cg, gpack*cog)."""
    G, k, _, cg, cog = w2.shape
    GP = G // gpack
    wr = w2.reshape(GP, gpack, k, k, cg, cog)
    w = jnp.zeros((GP, k, k, gpack * cg, gpack * cog), w2.dtype)
    for j in range(gpack):
        w = w.at[:, :, :, j * cg:(j + 1) * cg, j * cog:(j + 1) * cog].set(wr[:, j])
    return w


def _prep_gconv_input(x_nhwc, gp, cpk, stride, padding, ksize):
    """Pad + parity-decompose + packed-group-major transpose so the conv kernel
    only needs unstrided static slices per (kh, kw) tap (no im2col)."""
    # TODO(synk): fold this XLA pad/transpose pass into the conv1 epilogue's
    # stores via an out_spec index_map (needs in-kernel zero-fill of the halo).
    N, H, W, C = x_nhwc.shape
    s = stride
    xp = jnp.pad(x_nhwc, ((0, 0), (padding, padding), (padding, padding), (0, 0)))
    Hp, Wp = H + 2 * padding, W + 2 * padding
    Hq, Wq = -(-Hp // s), -(-Wp // s)
    xp = jnp.pad(xp, ((0, 0), (0, Hq * s - Hp), (0, Wq * s - Wp), (0, 0)))
    xr = xp.reshape(N, Hq, s, Wq, s, gp, cpk)
    xprep = xr.transpose(5, 2, 4, 0, 1, 3, 6).reshape(gp, s * s, N, Hq, Wq, cpk)
    Ho = (Hp - ksize) // s + 1
    Wo = (Wp - ksize) // s + 1
    return xprep, Ho, Wo


def _make_pad_mask(H, W, stride, padding, cpk):
    """0/1 validity mask in the same (s*s, Hq, Wq) parity layout as xprep."""
    s = stride
    Hp, Wp = H + 2 * padding, W + 2 * padding
    Hq, Wq = -(-Hp // s), -(-Wp // s)
    m = np.zeros((Hq * s, Wq * s), np.float32)
    m[padding:padding + H, padding:padding + W] = 1.0
    mr = m.reshape(Hq, s, Wq, s).transpose(1, 3, 0, 2).reshape(s * s, Hq, Wq)
    mr = np.broadcast_to(mr[:, None, :, :, None], (s * s, 1, Hq, Wq, cpk))
    return jnp.asarray(np.ascontiguousarray(mr))


# ---------------------------------------------------------------------------
# Bottleneck forward (Pallas) and a plain-JAX reference
# ---------------------------------------------------------------------------
def bottleneck_forward(params, x_nchw, *, stride, groups, eps=1e-5):
    x = jnp.transpose(x_nchw, (0, 2, 3, 1)).astype(jnp.float32)     # NHWC
    N, H, W, Cin = x.shape
    width = params['w1'].shape[1]
    cout = params['w3'].shape[1]
    cg = width // groups
    cog = width // groups
    M1 = N * H * W

    xb = x.astype(jnp.bfloat16)
    w1 = params['w1'].astype(jnp.bfloat16)

    # ---- conv1 (1x1): bf16 MXU, raw bf16 output + fused BN1 statistics -----
    o1, s1, q1 = pallas_matmul_stats(xb.reshape(1, M1, Cin),
                                     w1.reshape(1, Cin, width),
                                     out_dtype=jnp.bfloat16)
    sc1, sh1 = _bn_scale_shift(s1, q1, M1, params['bn1_g'], params['bn1_b'], eps)

    # ---- conv2 (3x3, grouped, stride): packed block-diagonal direct conv ----
    gpack = _pick_gpack(groups, cg, cog)
    GP = groups // gpack
    Cpk, Copk = gpack * cg, gpack * cog
    xprep, Ho, Wo = _prep_gconv_input(o1.reshape(N, H, W, width), GP, Cpk,
                                      stride, padding=1, ksize=3)
    mask = _make_pad_mask(H, W, stride, 1, Cpk)
    w2_bd = _pack_block_diag(params['w2'], gpack).astype(jnp.bfloat16)
    o2, s2, q2 = pallas_grouped_conv3x3(
        xprep, mask,
        sc1.reshape(GP, 1, 1, 1, 1, Cpk), sh1.reshape(GP, 1, 1, 1, 1, Cpk),
        w2_bd, stride=stride, ho=Ho, wo=Wo)
    M2 = N * Ho * Wo
    col_sum2 = jnp.sum(s2, axis=1).reshape(width)
    col_ssq2 = jnp.sum(q2, axis=1).reshape(width)
    sc2, sh2 = _bn_scale_shift(col_sum2, col_ssq2, M2,
                               params['bn2_g'], params['bn2_b'], eps)

    # ---- conv3 (1x1): dense K-chunks (Ck = Copk >= 128), fused BN2+ReLU LHS -
    w3 = params['w3'].astype(jnp.bfloat16).reshape(GP, Copk, cout)
    o3, s3, q3 = pallas_matmul_stats(o2, w3,
                                     lhs_scale=sc2.reshape(GP, 1, Copk),
                                     lhs_shift=sh2.reshape(GP, 1, Copk),
                                     out_dtype=jnp.float32)
    sc3, sh3 = _bn_scale_shift(s3, q3, M2, params['bn3_g'], params['bn3_b'], eps)

    # ---- residual branch + fused BN3 / residual-BN / add / ReLU -------------
    if params.get('w_ds') is not None:
        # TODO(synk): express the stride in the matmul LHS BlockSpec instead of
        # this XLA strided slice (modest bandwidth win, mostly on v5e).
        xs = xb[:, ::stride, ::stride, :].reshape(1, M2, Cin)
        wd = params['w_ds'].astype(jnp.bfloat16).reshape(1, Cin, cout)
        od, sd, qd = pallas_matmul_stats(xs, wd, out_dtype=jnp.float32)
        scd, shd = _bn_scale_shift(sd, qd, M2, params['bnd_g'], params['bnd_b'],
                                   eps)
        y = pallas_bn_apply(o3.reshape(1, M2, cout), sc3.reshape(1, cout),
                            sh3.reshape(1, cout),
                            residual=od.reshape(1, M2, cout),
                            res_scale=scd.reshape(1, cout),
                            res_shift=shd.reshape(1, cout), relu=True)
    else:
        assert stride == 1 and Cin == cout, (
            "identity residual requires stride==1 and Cin==cout")
        y = pallas_bn_apply(o3.reshape(1, M2, cout), sc3.reshape(1, cout),
                            sh3.reshape(1, cout),
                            residual=x.reshape(1, M2, cout), relu=True)
    y = y.reshape(N, Ho, Wo, cout)
    return jnp.transpose(y, (0, 3, 1, 2))                  # back to NCHW


def bottleneck_reference(params, x_nchw, *, stride, groups, eps=1e-5):
    """Plain-JAX f32 reference (training-mode BatchNorm, biased variance)."""
    x = jnp.transpose(x_nchw, (0, 2, 3, 1)).astype(jnp.float32)
    hp = lax.Precision.HIGHEST

    def bn(t, g, b):
        m = jnp.mean(t, axis=(0, 1, 2))
        v = jnp.var(t, axis=(0, 1, 2))
        return (t - m) * (g / jnp.sqrt(v + eps)) + b

    out = jnp.einsum('nhwc,cd->nhwd', x, params['w1'], precision=hp)
    out = jax.nn.relu(bn(out, params['bn1_g'], params['bn1_b']))

    cg = out.shape[-1] // groups
    pieces = []
    for g in range(groups):
        xg = out[..., g * cg:(g + 1) * cg]
        wg = params['w2'][g]                              # (3, 3, cg, coutg)
        pieces.append(lax.conv_general_dilated(
            xg, wg, (stride, stride), ((1, 1), (1, 1)),
            dimension_numbers=('NHWC', 'HWIO', 'NHWC'), precision=hp))
    out = jnp.concatenate(pieces, axis=-1)
    out = jax.nn.relu(bn(out, params['bn2_g'], params['bn2_b']))

    out = jnp.einsum('nhwc,cd->nhwd', out, params['w3'], precision=hp)
    out = bn(out, params['bn3_g'], params['bn3_b'])

    if params.get('w_ds') is not None:
        idn = x[:, ::stride, ::stride, :]
        idn = jnp.einsum('nhwc,cd->nhwd', idn, params['w_ds'], precision=hp)
        idn = bn(idn, params['bnd_g'], params['bnd_b'])
    else:
        idn = x
    out = jax.nn.relu(out + idn)
    return jnp.transpose(out, (0, 3, 1, 2))


# ---------------------------------------------------------------------------
# Parameter construction (deterministic, synthetic)
# ---------------------------------------------------------------------------
def init_params(key, inplanes, planes, stride, groups, base_width, expansion=4):
    width = int(planes * (base_width / 64.0)) * groups
    cout = planes * expansion
    cg = width // groups
    coutg = width // groups
    ks = jax.random.split(key, 4)

    def w_init(k, shape, fan_in):
        return (jax.random.normal(k, shape, jnp.float32)
                * np.float32(math.sqrt(2.0 / fan_in)))

    params = {
        'w1': w_init(ks[0], (inplanes, width), inplanes),
        'bn1_g': jnp.ones((width,), jnp.float32),
        'bn1_b': jnp.zeros((width,), jnp.float32),
        'w2': w_init(ks[1], (groups, 3, 3, cg, coutg), 9 * cg),
        'bn2_g': jnp.ones((width,), jnp.float32),
        'bn2_b': jnp.zeros((width,), jnp.float32),
        'w3': w_init(ks[2], (width, cout), width),
        'bn3_g': jnp.ones((cout,), jnp.float32),
        'bn3_b': jnp.zeros((cout,), jnp.float32),
        'w_ds': None,
    }
    if stride != 1 or inplanes != cout:
        params['w_ds'] = w_init(ks[3], (inplanes, cout), inplanes)
        params['bnd_g'] = jnp.ones((cout,), jnp.float32)
        params['bnd_b'] = jnp.zeros((cout,), jnp.float32)
    return params


if __name__ == "__main__":
    # Bottleneck(inplanes=128, planes=32, stride=2, groups=4, base_width=64)
    # -> width = 128, output channels = 128, with a conv1x1+BN downsample.
    N, H, W = 2, 16, 16
    inplanes, planes, expansion = 128, 32, 4
    groups, base_width, stride = 4, 64, 2

    key = jax.random.PRNGKey(0)
    kp, kx = jax.random.split(key)
    params = init_params(kp, inplanes, planes, stride, groups, base_width,
                         expansion)
    x = jax.random.normal(kx, (N, inplanes, H, W), jnp.float32)   # NCHW input

    fwd = jax.jit(lambda inp: bottleneck_forward(params, inp,
                                                 stride=stride, groups=groups))
    y = fwd(x)
    jax.block_until_ready(y)

    y_ref = bottleneck_reference(params, x, stride=stride, groups=groups)
    assert y.shape == (N, planes * expansion, H // stride, W // stride), y.shape
    # Tolerance accounts for bf16 MXU operands through a 3-conv chain; real
    # bugs (indexing/layout) produce O(1) errors, far above this threshold.
    np.testing.assert_allclose(np.asarray(y), np.asarray(y_ref),
                               rtol=5e-2, atol=5e-2)
    print("KERNEL_OK")
</pallas_src>

<mosaic_0001>
module attributes {stable_mosaic.version = 11 : i64} {
  func.func @_mm_stats_kernel(%arg0: i32, %arg1: i32, %arg2: i32, %arg3: memref<1x512x128xbf16, #tpu.memory_space<vmem>>, %arg4: memref<1x128x128xbf16, #tpu.memory_space<vmem>>, %arg5: memref<512x128xbf16, #tpu.memory_space<vmem>>, %arg6: memref<1x1x128xf32, #tpu.memory_space<vmem>>, %arg7: memref<1x1x128xf32, #tpu.memory_space<vmem>>, %arg8: memref<512x128xf32, #tpu.memory_space<vmem>>) attributes {dimension_semantics = [#tpu.dimension_semantics<parallel>, #tpu.dimension_semantics<parallel>, #tpu.dimension_semantics<arbitrary>], iteration_bounds = array<i64: 1, 1, 1>, scalar_prefetch = 0 : i64, scratch_operands = 1 : i64, tpu.core_type = #tpu.core_type<tc>, window_params = [{transform_indices = @transform_0, window_bounds = array<i64: 1, 512, 128>}, {transform_indices = @transform_1, window_bounds = array<i64: 1, 128, 128>}, {transform_indices = @transform_2, window_bounds = array<i64: 512, 128>}, {transform_indices = @transform_3, window_bounds = array<i64: 1, 1, 128>}, {transform_indices = @transform_4, window_bounds = array<i64: 1, 1, 128>}]} {
    %c0_i32 = arith.constant 0 : i32
    %0 = arith.cmpi eq, %arg2, %c0_i32 : i32
    %1 = arith.extui %0 : i1 to i32
    %c0_i32_0 = arith.constant 0 : i32
    %2 = arith.cmpi ne, %1, %c0_i32_0 : i32
    scf.if %2 {
      %cst_12 = arith.constant 0.000000e+00 : f32
      %14 = vector.broadcast %cst_12 : f32 to vector<512x128xf32>
      %c0_13 = arith.constant 0 : index
      %c0_14 = arith.constant 0 : index
      %15 = vector.load %arg8[%c0_13, %c0_14] : memref<512x128xf32, #tpu.memory_space<vmem>>, vector<512x128xf32>
      tpu.vector_store %arg8[%c0_13, %c0_14], %14 {strides = array<i32>} : memref<512x128xf32, #tpu.memory_space<vmem>>, vector<512x128xf32>,
    } else {
    }
    %c0 = arith.constant 0 : index
    %c0_1 = arith.constant 0 : index
    %c0_2 = arith.constant 0 : index
    %3 = vector.load %arg3[%c0, %c0_1, %c0_2] : memref<1x512x128xbf16, #tpu.memory_space<vmem>>, vector<1x512x128xbf16>
    %4 = vector.shape_cast %3 : vector<1x512x128xbf16> to vector<512x128xbf16>
    %c0_3 = arith.constant 0 : index
    %c0_4 = arith.constant 0 : index
    %5 = vector.load %arg8[%c0_3, %c0_4] : memref<512x128xf32, #tpu.memory_space<vmem>>, vector<512x128xf32>
    %c0_5 = arith.constant 0 : index
    %c0_6 = arith.constant 0 : index
    %c0_7 = arith.constant 0 : index
    %6 = vector.load %arg4[%c0_5, %c0_6, %c0_7] : memref<1x128x128xbf16, #tpu.memory_space<vmem>>, vector<1x128x128xbf16>
    %7 = vector.shape_cast %6 : vector<1x128x128xbf16> to vector<128x128xbf16>
    %cst = arith.constant dense<0.000000e+00> : vector<512x128xf32>
    %8 = tpu.matmul %4, %7, %cst {dimension_numbers = #tpu.dot_dimension_numbers<[1], [0], [0], [1], [0, 0, 1, 1], [], []>} : vector<512x128xbf16>, vector<128x128xbf16>, vector<512x128xf32> -> vector<512x128xf32>
    %9 = arith.addf %5, %8 : vector<512x128xf32>
    %c0_8 = arith.constant 0 : index
    %c0_9 = arith.constant 0 : index
    %10 = vector.load %arg8[%c0_8, %c0_9] : memref<512x128xf32, #tpu.memory_space<vmem>>, vector<512x128xf32>
    tpu.vector_store %arg8[%c0_8, %c0_9], %9 {strides = array<i32>} : memref<512x128xf32, #tpu.memory_space<vmem>>, vector<512x128xf32>,
    %c0_i32_10 = arith.constant 0 : i32
    %11 = arith.cmpi eq, %arg2, %c0_i32_10 : i32
    %12 = arith.extui %11 : i1 to i32
    %c0_i32_11 = arith.constant 0 : i32
    %13 = arith.cmpi ne, %12, %c0_i32_11 : i32
    scf.if %13 {
      %c0_12 = arith.constant 0 : index
      %c0_13 = arith.constant 0 : index
      %14 = vector.load %arg8[%c0_12, %c0_13] : memref<512x128xf32, #tpu.memory_space<vmem>>, vector<512x128xf32>
      %15 = arith.truncf %14 : vector<512x128xf32> to vector<512x128xbf16>
      %c0_14 = arith.constant 0 : index
      %c0_15 = arith.constant 0 : index
      %16 = vector.load %arg5[%c0_14, %c0_15] : memref<512x128xbf16, #tpu.memory_space<vmem>>, vector<512x128xbf16>
      tpu.vector_store %arg5[%c0_14, %c0_15], %15 {strides = array<i32>} : memref<512x128xbf16, #tpu.memory_space<vmem>>, vector<512x128xbf16>,
      %cst_16 = arith.constant dense<0.000000e+00> : vector<128xf32>
      %17 = vector.multi_reduction <add>, %14, %cst_16 [0] : vector<512x128xf32> to vector<128xf32>
      %18 = vector.shape_cast %17 : vector<128xf32> to vector<1x128xf32>
      %c0_17 = arith.constant 0 : index
      %c0_18 = arith.constant 0 : index
      %c0_19 = arith.constant 0 : index
      %19 = vector.load %arg6[%c0_17, %c0_18, %c0_19] : memref<1x1x128xf32, #tpu.memory_space<vmem>>, vector<1x1x128xf32>
      %20 = vector.shape_cast %19 : vector<1x1x128xf32> to vector<1x128xf32>
      %21 = vector.shape_cast %18 : vector<1x128xf32> to vector<1x1x128xf32>
      tpu.vector_store %arg6[%c0_17, %c0_18, %c0_19], %21 {strides = array<i32>} : memref<1x1x128xf32, #tpu.memory_space<vmem>>, vector<1x1x128xf32>,
      %22 = arith.mulf %14, %14 : vector<512x128xf32>
      %cst_20 = arith.constant dense<0.000000e+00> : vector<128xf32>
      %23 = vector.multi_reduction <add>, %22, %cst_20 [0] : vector<512x128xf32> to vector<128xf32>
      %24 = vector.shape_cast %23 : vector<128xf32> to vector<1x128xf32>
      %c0_21 = arith.constant 0 : index
      %c0_22 = arith.constant 0 : index
      %c0_23 = arith.constant 0 : index
      %25 = vector.load %arg7[%c0_21, %c0_22, %c0_23] : memref<1x1x128xf32, #tpu.memory_space<vmem>>, vector<1x1x128xf32>
      %26 = vector.shape_cast %25 : vector<1x1x128xf32> to vector<1x128xf32>
      %27 = vector.shape_cast %24 : vector<1x128xf32> to vector<1x1x128xf32>
      tpu.vector_store %arg7[%c0_21, %c0_22, %c0_23], %27 {strides = array<i32>} : memref<1x1x128xf32, #tpu.memory_space<vmem>>, vector<1x1x128xf32>,
    } else {
    }
    return
  }
  func.func @transform_0(%arg0: i32, %arg1: i32, %arg2: i32) -> (i32, i32, i32) {
    %c0_i32 = arith.constant 0 : i32
    %c0_i32_0 = arith.constant 0 : i32
    return %arg2, %arg0, %c0_i32 : i32, i32, i32
  }
  func.func @transform_1(%arg0: i32, %arg1: i32, %arg2: i32) -> (i32, i32, i32) {
    %c0_i32 = arith.constant 0 : i32
    %c0_i32_0 = arith.constant 0 : i32
    return %arg2, %c0_i32, %arg1 : i32, i32, i32
  }
  func.func @transform_2(%arg0: i32, %arg1: i32, %arg2: i32) -> (i32, i32) {
    %c0_i32 = arith.constant 0 : i32
    return %arg0, %arg1 : i32, i32
  }
  func.func @transform_3(%arg0: i32, %arg1: i32, %arg2: i32) -> (i32, i32, i32) {
    %c0_i32 = arith.constant 0 : i32
    %c0_i32_0 = arith.constant 0 : i32
    return %arg0, %c0_i32, %arg1 : i32, i32, i32
  }
  func.func @transform_4(%arg0: i32, %arg1: i32, %arg2: i32) -> (i32, i32, i32) {
    %c0_i32 = arith.constant 0 : i32
    %c0_i32_0 = arith.constant 0 : i32
    return %arg0, %c0_i32, %arg1 : i32, i32, i32
  }
}

module attributes {stable_mosaic.version = 11 : i64} {
  func.func @_gconv_kernel(%arg0: i32, %arg1: i32, %arg2: memref<1x4x1x9x9x128xbf16, #tpu.memory_space<vmem>>, %arg3: memref<4x1x9x9x128xf32, #tpu.memory_space<vmem>>, %arg4: memref<1x1x1x1x1x128xf32, #tpu.memory_space<vmem>>, %arg5: memref<1x1x1x1x1x128xf32, #tpu.memory_space<vmem>>, %arg6: memref<1x3x3x128x128xbf16, #tpu.memory_space<vmem>>, %arg7: memref<1x64x128xbf16, #tpu.memory_space<vmem>>, %arg8: memref<1x1x1x128xf32, #tpu.memory_space<vmem>>, %arg9: memref<1x1x1x128xf32, #tpu.memory_space<vmem>>, %arg10: memref<64x128xf32, #tpu.memory_space<vmem>>) attributes {dimension_semantics = [#tpu.dimension_semantics<parallel>, #tpu.dimension_semantics<parallel>], iteration_bounds = array<i64: 1, 2>, scalar_prefetch = 0 : i64, scratch_operands = 1 : i64, tpu.core_type = #tpu.core_type<tc>, window_params = [{transform_indices = @transform_0, window_bounds = array<i64: 1, 4, 1, 9, 9, 128>}, {pipeline_mode = #tpu.pipeline_mode<synchronous>, transform_indices = @transform_1, window_bounds = array<i64: 4, 1, 9, 9, 128>}, {transform_indices = @transform_2, window_bounds = array<i64: 1, 1, 1, 1, 1, 128>}, {transform_indices = @transform_3, window_bounds = array<i64: 1, 1, 1, 1, 1, 128>}, {transform_indices = @transform_4, window_bounds = array<i64: 1, 3, 3, 128, 128>}, {transform_indices = @transform_5, window_bounds = array<i64: 1, 64, 128>}, {transform_indices = @transform_6, window_bounds = array<i64: 1, 1, 1, 128>}, {transform_indices = @transform_7, window_bounds = array<i64: 1, 1, 1, 128>}]} {
    %c0 = arith.constant 0 : index
    %c0_0 = arith.constant 0 : index
    %c0_1 = arith.constant 0 : index
    %c0_2 = arith.constant 0 : index
    %c0_3 = arith.constant 0 : index
    %c0_4 = arith.constant 0 : index
    %0 = vector.load %arg2[%c0, %c0_0, %c0_1, %c0_2, %c0_3, %c0_4] : memref<1x4x1x9x9x128xbf16, #tpu.memory_space<vmem>>, vector<1x4x1x9x9x128xbf16>
    %1 = vector.shape_cast %0 : vector<1x4x1x9x9x128xbf16> to vector<4x1x9x9x128xbf16>
    %2 = arith.extf %1 : vector<4x1x9x9x128xbf16> to vector<4x1x9x9x128xf32>
    %c0_5 = arith.constant 0 : index
    %c0_6 = arith.constant 0 : index
    %c0_7 = arith.constant 0 : index
    %c0_8 = arith.constant 0 : index
    %c0_9 = arith.constant 0 : index
    %c0_10 = arith.constant 0 : index
    %3 = vector.load %arg4[%c0_5, %c0_6, %c0_7, %c0_8, %c0_9, %c0_10] : memref<1x1x1x1x1x128xf32, #tpu.memory_space<vmem>>, vector<1x1x1x1x1x128xf32>
    %4 = vector.shape_cast %3 : vector<1x1x1x1x1x128xf32> to vector<1x1x1x1x128xf32>
    %5 = vector.broadcast %4 : vector<1x1x1x1x128xf32> to vector<4x1x9x9x128xf32>
    %6 = arith.mulf %2, %5 : vector<4x1x9x9x128xf32>
    %c0_11 = arith.constant 0 : index
    %c0_12 = arith.constant 0 : index
    %c0_13 = arith.constant 0 : index
    %c0_14 = arith.constant 0 : index
    %c0_15 = arith.constant 0 : index
    %c0_16 = arith.constant 0 : index
    %7 = vector.load %arg5[%c0_11, %c0_12, %c0_13, %c0_14, %c0_15, %c0_16] : memref<1x1x1x1x1x128xf32, #tpu.memory_space<vmem>>, vector<1x1x1x1x1x128xf32>
    %8 = vector.shape_cast %7 : vector<1x1x1x1x1x128xf32> to vector<1x1x1x1x128xf32>
    %9 = vector.broadcast %8 : vector<1x1x1x1x128xf32> to vector<4x1x9x9x128xf32>
    %10 = arith.addf %6, %9 : vector<4x1x9x9x128xf32>
    %cst = arith.constant 0.000000e+00 : f32
    %11 = vector.broadcast %cst : f32 to vector<4x1x9x9x128xf32>
    %12 = arith.maximumf %10, %11 : vector<4x1x9x9x128xf32>
    %c0_17 = arith.constant 0 : index
    %c0_18 = arith.constant 0 : index
    %c0_19 = arith.constant 0 : index
    %c0_20 = arith.constant 0 : index
    %c0_21 = arith.constant 0 : index
    %13 = vector.load %arg3[%c0_17, %c0_18, %c0_19, %c0_20, %c0_21] : memref<4x1x9x9x128xf32, #tpu.memory_space<vmem>>, vector<4x1x9x9x128xf32>
    %14 = arith.mulf %12, %13 : vector<4x1x9x9x128xf32>
    %15 = arith.truncf %14 : vector<4x1x9x9x128xf32> to vector<4x1x9x9x128xbf16>
    %cst_22 = arith.constant 0.000000e+00 : f32
    %16 = vector.broadcast %cst_22 : f32 to vector<64x128xf32>
    %c0_23 = arith.constant 0 : index
    %c0_24 = arith.constant 0 : index
    %17 = vector.load %arg10[%c0_23, %c0_24] : memref<64x128xf32, #tpu.memory_space<vmem>>, vector<64x128xf32>
    tpu.vector_store %arg10[%c0_23, %c0_24], %16 {strides = array<i32>} : memref<64x128xf32, #tpu.memory_space<vmem>>, vector<64x128xf32>,
    %18 = vector.extract_strided_slice %15 {offsets = [0, 0, 0, 0, 0], sizes = [1, 1, 8, 8, 128], strides = [1, 1, 1, 1, 1]} : vector<4x1x9x9x128xbf16> to vector<1x1x8x8x128xbf16>
    %19 = vector.shape_cast %18 : vector<1x1x8x8x128xbf16> to vector<8x8x128xbf16>
    %c0_25 = arith.constant 0 : index
    %c0_26 = arith.constant 0 : index
    %20 = vector.load %arg10[%c0_25, %c0_26] : memref<64x128xf32, #tpu.memory_space<vmem>>, vector<64x128xf32>
    %21 = vector.shape_cast %19 : vector<8x8x128xbf16> to vector<64x128xbf16>
    %c0_27 = arith.constant 0 : index
    %c0_28 = arith.constant 0 : index
    %c0_29 = arith.constant 0 : index
    %c0_30 = arith.constant 0 : index
    %c0_31 = arith.constant 0 : index
    %22 = vector.load %arg6[%c0_27, %c0_28, %c0_29, %c0_30, %c0_31] : memref<1x3x3x128x128xbf16, #tpu.memory_space<vmem>>, vector<1x1x1x128x128xbf16>
    %23 = vector.shape_cast %22 : vector<1x1x1x128x128xbf16> to vector<128x128xbf16>
    %cst_32 = arith.constant dense<0.000000e+00> : vector<64x128xf32>
    %24 = tpu.matmul %21, %23, %cst_32 {dimension_numbers = #tpu.dot_dimension_numbers<[1], [0], [0], [1], [0, 0, 1, 1], [], []>} : vector<64x128xbf16>, vector<128x128xbf16>, vector<64x128xf32> -> vector<64x128xf32>
    %25 = arith.addf %20, %24 : vector<64x128xf32>
    %c0_33 = arith.constant 0 : index
    %c0_34 = arith.constant 0 : index
    %26 = vector.load %arg10[%c0_33, %c0_34] : memref<64x128xf32, #tpu.memory_space<vmem>>, vector<64x128xf32>
    tpu.vector_store %arg10[%c0_33, %c0_34], %25 {strides = array<i32>} : memref<64x128xf32, #tpu.memory_space<vmem>>, vector<64x128xf32>,
    %27 = vector.extract_strided_slice %15 {offsets = [1, 0, 0, 0, 0], sizes = [1, 1, 8, 8, 128], strides = [1, 1, 1, 1, 1]} : vector<4x1x9x9x128xbf16> to vector<1x1x8x8x128xbf16>
    %28 = vector.shape_cast %27 : vector<1x1x8x8x128xbf16> to vector<8x8x128xbf16>
    %c0_35 = arith.constant 0 : index
    %c0_36 = arith.constant 0 : index
    %29 = vector.load %arg10[%c0_35, %c0_36] : memref<64x128xf32, #tpu.memory_space<vmem>>, vector<64x128xf32>
    %30 = vector.shape_cast %28 : vector<8x8x128xbf16> to vector<64x128xbf16>
    %c0_37 = arith.constant 0 : index
    %c0_38 = arith.constant 0 : index
    %c1 = arith.constant 1 : index
    %c0_39 = arith.constant 0 : index
    %c0_40 = arith.constant 0 : index
    %31 = vector.load %arg6[%c0_37, %c0_38, %c1, %c0_39, %c0_40] : memref<1x3x3x128x128xbf16, #tpu.memory_space<vmem>>, vector<1x1x1x128x128xbf16>
    %32 = vector.shape_cast %31 : vector<1x1x1x128x128xbf16> to vector<128x128xbf16>
    %cst_41 = arith.constant dense<0.000000e+00> : vector<64x128xf32>
    %33 = tpu.matmul %30, %32, %cst_41 {dimension_numbers = #tpu.dot_dimension_numbers<[1], [0], [0], [1], [0, 0, 1, 1], [], []>} : vector<64x128xbf16>, vector<128x128xbf16>, vector<64x128xf32> -> vector<64x128xf32>
    %34 = arith.addf %29, %33 : vector<64x128xf32>
    %c0_42 = arith.constant 0 : index
    %c0_43 = arith.constant 0 : index
    %35 = vector.load %arg10[%c0_42, %c0_43] : memref<64x128xf32, #tpu.memory_space<vmem>>, vector<64x128xf32>
    tpu.vector_store %arg10[%c0_42, %c0_43], %34 {strides = array<i32>} : memref<64x128xf32, #tpu.memory_space<vmem>>, vector<64x128xf32>,
    %36 = vector.extract_strided_slice %15 {offsets = [0, 0, 0, 1, 0], sizes = [1, 1, 8, 8, 128], strides = [1, 1, 1, 1, 1]} : vector<4x1x9x9x128xbf16> to vector<1x1x8x8x128xbf16>
    %37 = vector.shape_cast %36 : vector<1x1x8x8x128xbf16> to vector<8x8x128xbf16>
    %c0_44 = arith.constant 0 : index
    %c0_45 = arith.constant 0 : index
    %38 = vector.load %arg10[%c0_44, %c0_45] : memref<64x128xf32, #tpu.memory_space<vmem>>, vector<64x128xf32>
    %39 = vector.shape_cast %37 : vector<8x8x128xbf16> to vector<64x128xbf16>
    %c0_46 = arith.constant 0 : index
    %c0_47 = arith.constant 0 : index
    %c2 = arith.constant 2 : index
    %c0_48 = arith.constant 0 : index
    %c0_49 = arith.constant 0 : index
    %40 = vector.load %arg6[%c0_46, %c0_47, %c2, %c0_48, %c0_49] : memref<1x3x3x128x128xbf16, #tpu.memory_space<vmem>>, vector<1x1x1x128x128xbf16>
    %41 = vector.shape_cast %40 : vector<1x1x1x128x128xbf16> to vector<128x128xbf16>
    %cst_50 = arith.constant dense<0.000000e+00> : vector<64x128xf32>
    %42 = tpu.matmul %39, %41, %cst_50 {dimension_numbers = #tpu.dot_dimension_numbers<[1], [0], [0], [1], [0, 0, 1, 1], [], []>} : vector<64x128xbf16>, vector<128x128xbf16>, vector<64x128xf32> -> vector<64x128xf32>
    %43 = arith.addf %38, %42 : vector<64x128xf32>
    %c0_51 = arith.constant 0 : index
    %c0_52 = arith.constant 0 : index
    %44 = vector.load %arg10[%c0_51, %c0_52] : memref<64x128xf32, #tpu.memory_space<vmem>>, vector<64x128xf32>
    tpu.vector_store %arg10[%c0_51, %c0_52], %43 {strides = array<i32>} : memref<64x128xf32, #tpu.memory_space<vmem>>, vector<64x128xf32>,
    %45 = vector.extract_strided_slice %15 {offsets = [2, 0, 0, 0, 0], sizes = [1, 1, 8, 8, 128], strides = [1, 1, 1, 1, 1]} : vector<4x1x9x9x128xbf16> to vector<1x1x8x8x128xbf16>
    %46 = vector.shape_cast %45 : vector<1x1x8x8x128xbf16> to vector<8x8x128xbf16>
    %c0_53 = arith.constant 0 : index
    %c0_54 = arith.constant 0 : index
    %47 = vector.load %arg10[%c0_53, %c0_54] : memref<64x128xf32, #tpu.memory_space<vmem>>, vector<64x128xf32>
    %48 = vector.shape_cast %46 : vector<8x8x128xbf16> to vector<64x128xbf16>
    %c0_55 = arith.constant 0 : index
    %c1_56 = arith.constant 1 : index
    %c0_57 = arith.constant 0 : index
    %c0_58 = arith.constant 0 : index
    %c0_59 = arith.constant 0 : index
    %49 = vector.load %arg6[%c0_55, %c1_56, %c0_57, %c0_58, %c0_59] : memref<1x3x3x128x128xbf16, #tpu.memory_space<vmem>>, vector<1x1x1x128x128xbf16>
    %50 = vector.shape_cast %49 : vector<1x1x1x128x128xbf16> to vector<128x128xbf16>
    %cst_60 = arith.constant dense<0.000000e+00> : vector<64x128xf32>
    %51 = tpu.matmul %48, %50, %cst_60 {dimension_numbers = #tpu.dot_dimension_numbers<[1], [0], [0], [1], [0, 0, 1, 1], [], []>} : vector<64x128xbf16>, vector<128x128xbf16>, vector<64x128xf32> -> vector<64x128xf32>
    %52 = arith.addf %47, %51 : vector<64x128xf32>
    %c0_61 = arith.constant 0 : index
    %c0_62 = arith.constant 0 : index
    %53 = vector.load %arg10[%c0_61, %c0_62] : memref<64x128xf32, #tpu.memory_space<vmem>>, vector<64x128xf32>
    tpu.vector_store %arg10[%c0_61, %c0_62], %52 {strides = array<i32>} : memref<64x128xf32, #tpu.memory_space<vmem>>, vector<64x128xf32>,
    %54 = vector.extract_strided_slice %15 {offsets = [3, 0, 0, 0, 0], sizes = [1, 1, 8, 8, 128], strides = [1, 1, 1, 1, 1]} : vector<4x1x9x9x128xbf16> to vector<1x1x8x8x128xbf16>
    %55 = vector.shape_cast %54 : vector<1x1x8x8x128xbf16> to vector<8x8x128xbf16>
    %c0_63 = arith.constant 0 : index
    %c0_64 = arith.constant 0 : index
    %56 = vector.load %arg10[%c0_63, %c0_64] : memref<64x128xf32, #tpu.memory_space<vmem>>, vector<64x128xf32>
    %57 = vector.shape_cast %55 : vector<8x8x128xbf16> to vector<64x128xbf16>
    %c0_65 = arith.constant 0 : index
    %c1_66 = arith.constant 1 : index
    %c1_67 = arith.constant 1 : index
    %c0_68 = arith.constant 0 : index
    %c0_69 = arith.constant 0 : index
    %58 = vector.load %arg6[%c0_65, %c1_66, %c1_67, %c0_68, %c0_69] : memref<1x3x3x128x128xbf16, #tpu.memory_space<vmem>>, vector<1x1x1x128x128xbf16>
    %59 = vector.shape_cast %58 : vector<1x1x1x128x128xbf16> to vector<128x128xbf16>
    %cst_70 = arith.constant dense<0.000000e+00> : vector<64x128xf32>
    %60 = tpu.matmul %57, %59, %cst_70 {dimension_numbers = #tpu.dot_dimension_numbers<[1], [0], [0], [1], [0, 0, 1, 1], [], []>} : vector<64x128xbf16>, vector<128x128xbf16>, vector<64x128xf32> -> vector<64x128xf32>
    %61 = arith.addf %56, %60 : vector<64x128xf32>
    %c0_71 = arith.constant 0 : index
    %c0_72 = arith.constant 0 : index
    %62 = vector.load %arg10[%c0_71, %c0_72] : memref<64x128xf32, #tpu.memory_space<vmem>>, vector<64x128xf32>
    tpu.vector_store %arg10[%c0_71, %c0_72], %61 {strides = array<i32>} : memref<64x128xf32, #tpu.memory_space<vmem>>, vector<64x128xf32>,
    %63 = vector.extract_strided_slice %15 {offsets = [2, 0, 0, 1, 0], sizes = [1, 1, 8, 8, 128], strides = [1, 1, 1, 1, 1]} : vector<4x1x9x9x128xbf16> to vector<1x1x8x8x128xbf16>
    %64 = vector.shape_cast %63 : vector<1x1x8x8x128xbf16> to vector<8x8x128xbf16>
    %c0_73 = arith.constant 0 : index
    %c0_74 = arith.constant 0 : index
    %65 = vector.load %arg10[%c0_73, %c0_74] : memref<64x128xf32, #tpu.memory_space<vmem>>, vector<64x128xf32>
    %66 = vector.shape_cast %64 : vector<8x8x128xbf16> to vector<64x128xbf16>
    %c0_75 = arith.constant 0 : index
    %c1_76 = arith.constant 1 : index
    %c2_77 = arith.constant 2 : index
    %c0_78 = arith.constant 0 : index
    %c0_79 = arith.constant 0 : index
    %67 = vector.load %arg6[%c0_75, %c1_76, %c2_77, %c0_78, %c0_79] : memref<1x3x3x128x128xbf16, #tpu.memory_space<vmem>>, vector<1x1x1x128x128xbf16>
    %68 = vector.shape_cast %67 : vector<1x1x1x128x128xbf16> to vector<128x128xbf16>
    %cst_80 = arith.constant dense<0.000000e+00> : vector<64x128xf32>
    %69 = tpu.matmul %66, %68, %cst_80 {dimension_numbers = #tpu.dot_dimension_numbers<[1], [0], [0], [1], [0, 0, 1, 1], [], []>} : vector<64x128xbf16>, vector<128x128xbf16>, vector<64x128xf32> -> vector<64x128xf32>
    %70 = arith.addf %65, %69 : vector<64x128xf32>
    %c0_81 = arith.constant 0 : index
    %c0_82 = arith.constant 0 : index
    %71 = vector.load %arg10[%c0_81, %c0_82] : memref<64x128xf32, #tpu.memory_space<vmem>>, vector<64x128xf32>
    tpu.vector_store %arg10[%c0_81, %c0_82], %70 {strides = array<i32>} : memref<64x128xf32, #tpu.memory_space<vmem>>, vector<64x128xf32>,
    %72 = vector.extract_strided_slice %15 {offsets = [0, 0, 1, 0, 0], sizes = [1, 1, 8, 8, 128], strides = [1, 1, 1, 1, 1]} : vector<4x1x9x9x128xbf16> to vector<1x1x8x8x128xbf16>
    %73 = vector.shape_cast %72 : vector<1x1x8x8x128xbf16> to vector<8x8x128xbf16>
    %c0_83 = arith.constant 0 : index
    %c0_84 = arith.constant 0 : index
    %74 = vector.load %arg10[%c0_83, %c0_84] : memref<64x128xf32, #tpu.memory_space<vmem>>, vector<64x128xf32>
    %75 = vector.shape_cast %73 : vector<8x8x128xbf16> to vector<64x128xbf16>
    %c0_85 = arith.constant 0 : index
    %c2_86 = arith.constant 2 : index
    %c0_87 = arith.constant 0 : index
    %c0_88 = arith.constant 0 : index
    %c0_89 = arith.constant 0 : index
    %76 = vector.load %arg6[%c0_85, %c2_86, %c0_87, %c0_88, %c0_89] : memref<1x3x3x128x128xbf16, #tpu.memory_space<vmem>>, vector<1x1x1x128x128xbf16>
    %77 = vector.shape_cast %76 : vector<1x1x1x128x128xbf16> to vector<128x128xbf16>
    %cst_90 = arith.constant dense<0.000000e+00> : vector<64x128xf32>
    %78 = tpu.matmul %75, %77, %cst_90 {dimension_numbers = #tpu.dot_dimension_numbers<[1], [0], [0], [1], [0, 0, 1, 1], [], []>} : vector<64x128xbf16>, vector<128x128xbf16>, vector<64x128xf32> -> vector<64x128xf32>
    %79 = arith.addf %74, %78 : vector<64x128xf32>
    %c0_91 = arith.constant 0 : index
    %c0_92 = arith.constant 0 : index
    %80 = vector.load %arg10[%c0_91, %c0_92] : memref<64x128xf32, #tpu.memory_space<vmem>>, vector<64x128xf32>
    tpu.vector_store %arg10[%c0_91, %c0_92], %79 {strides = array<i32>} : memref<64x128xf32, #tpu.memory_space<vmem>>, vector<64x128xf32>,
    %81 = vector.extract_strided_slice %15 {offsets = [1, 0, 1, 0, 0], sizes = [1, 1, 8, 8, 128], strides = [1, 1, 1, 1, 1]} : vector<4x1x9x9x128xbf16> to vector<1x1x8x8x128xbf16>
    %82 = vector.shape_cast %81 : vector<1x1x8x8x128xbf16> to vector<8x8x128xbf16>
    %c0_93 = arith.constant 0 : index
    %c0_94 = arith.constant 0 : index
    %83 = vector.load %arg10[%c0_93, %c0_94] : memref<64x128xf32, #tpu.memory_space<vmem>>, vector<64x128xf32>
    %84 = vector.shape_cast %82 : vector<8x8x128xbf16> to vector<64x128xbf16>
    %c0_95 = arith.constant 0 : index
    %c2_96 = arith.constant 2 : index
    %c1_97 = arith.constant 1 : index
    %c0_98 = arith.constant 0 : index
    %c0_99 = arith.constant 0 : index
    %85 = vector.load %arg6[%c0_95, %c2_96, %c1_97, %c0_98, %c0_99] : memref<1x3x3x128x128xbf16, #tpu.memory_space<vmem>>, vector<1x1x1x128x128xbf16>
    %86 = vector.shape_cast %85 : vector<1x1x1x128x128xbf16> to vector<128x128xbf16>
    %cst_100 = arith.constant dense<0.000000e+00> : vector<64x128xf32>
    %87 = tpu.matmul %84, %86, %cst_100 {dimension_numbers = #tpu.dot_dimension_numbers<[1], [0], [0], [1], [0, 0, 1, 1], [], []>} : vector<64x128xbf16>, vector<128x128xbf16>, vector<64x128xf32> -> vector<64x128xf32>
    %88 = arith.addf %83, %87 : vector<64x128xf32>
    %c0_101 = arith.constant 0 : index
    %c0_102 = arith.constant 0 : index
    %89 = vector.load %arg10[%c0_101, %c0_102] : memref<64x128xf32, #tpu.memory_space<vmem>>, vector<64x128xf32>
    tpu.vector_store %arg10[%c0_101, %c0_102], %88 {strides = array<i32>} : memref<64x128xf32, #tpu.memory_space<vmem>>, vector<64x128xf32>,
    %90 = vector.extract_strided_slice %15 {offsets = [0, 0, 1, 1, 0], sizes = [1, 1, 8, 8, 128], strides = [1, 1, 1, 1, 1]} : vector<4x1x9x9x128xbf16> to vector<1x1x8x8x128xbf16>
    %91 = vector.shape_cast %90 : vector<1x1x8x8x128xbf16> to vector<8x8x128xbf16>
    %c0_103 = arith.constant 0 : index
    %c0_104 = arith.constant 0 : index
    %92 = vector.load %arg10[%c0_103, %c0_104] : memref<64x128xf32, #tpu.memory_space<vmem>>, vector<64x128xf32>
    %93 = vector.shape_cast %91 : vector<8x8x128xbf16> to vector<64x128xbf16>
    %c0_105 = arith.constant 0 : index
    %c2_106 = arith.constant 2 : index
    %c2_107 = arith.constant 2 : index
    %c0_108 = arith.constant 0 : index
    %c0_109 = arith.constant 0 : index
    %94 = vector.load %arg6[%c0_105, %c2_106, %c2_107, %c0_108, %c0_109] : memref<1x3x3x128x128xbf16, #tpu.memory_space<vmem>>, vector<1x1x1x128x128xbf16>
    %95 = vector.shape_cast %94 : vector<1x1x1x128x128xbf16> to vector<128x128xbf16>
    %cst_110 = arith.constant dense<0.000000e+00> : vector<64x128xf32>
    %96 = tpu.matmul %93, %95, %cst_110 {dimension_numbers = #tpu.dot_dimension_numbers<[1], [0], [0], [1], [0, 0, 1, 1], [], []>} : vector<64x128xbf16>, vector<128x128xbf16>, vector<64x128xf32> -> vector<64x128xf32>
    %97 = arith.addf %92, %96 : vector<64x128xf32>
    %c0_111 = arith.constant 0 : index
    %c0_112 = arith.constant 0 : index
    %98 = vector.load %arg10[%c0_111, %c0_112] : memref<64x128xf32, #tpu.memory_space<vmem>>, vector<64x128xf32>
    tpu.vector_store %arg10[%c0_111, %c0_112], %97 {strides = array<i32>} : memref<64x128xf32, #tpu.memory_space<vmem>>, vector<64x128xf32>,
    %c0_113 = arith.constant 0 : index
    %c0_114 = arith.constant 0 : index
    %99 = vector.load %arg10[%c0_113, %c0_114] : memref<64x128xf32, #tpu.memory_space<vmem>>, vector<64x128xf32>
    %100 = arith.truncf %99 : vector<64x128xf32> to vector<64x128xbf16>
    %c0_115 = arith.constant 0 : index
    %c0_116 = arith.constant 0 : index
    %c0_117 = arith.constant 0 : index
    %101 = vector.load %arg7[%c0_115, %c0_116, %c0_117] : memref<1x64x128xbf16, #tpu.memory_space<vmem>>, vector<1x64x128xbf16>
    %102 = vector.shape_cast %101 : vector<1x64x128xbf16> to vector<64x128xbf16>
    %103 = vector.shape_cast %100 : vector<64x128xbf16> to vector<1x64x128xbf16>
    tpu.vector_store %arg7[%c0_115, %c0_116, %c0_117], %103 {strides = array<i32>} : memref<1x64x128xbf16, #tpu.memory_space<vmem>>, vector<1x64x128xbf16>,
    %cst_118 = arith.constant dense<0.000000e+00> : vector<128xf32>
    %104 = vector.multi_reduction <add>, %99, %cst_118 [0] : vector<64x128xf32> to vector<128xf32>
    %105 = vector.shape_cast %104 : vector<128xf32> to vector<1x128xf32>
    %c0_119 = arith.constant 0 : index
    %c0_120 = arith.constant 0 : index
    %c0_121 = arith.constant 0 : index
    %c0_122 = arith.constant 0 : index
    %106 = vector.load %arg8[%c0_119, %c0_120, %c0_121, %c0_122] : memref<1x1x1x128xf32, #tpu.memory_space<vmem>>, vector<1x1x1x128xf32>
    %107 = vector.shape_cast %106 : vector<1x1x1x128xf32> to vector<1x128xf32>
    %108 = vector.shape_cast %105 : vector<1x128xf32> to vector<1x1x1x128xf32>
    tpu.vector_store %arg8[%c0_119, %c0_120, %c0_121, %c0_122], %108 {strides = array<i32>} : memref<1x1x1x128xf32, #tpu.memory_space<vmem>>, vector<1x1x1x128xf32>,
    %109 = arith.mulf %99, %99 : vector<64x128xf32>
    %cst_123 = arith.constant dense<0.000000e+00> : vector<128xf32>
    %110 = vector.multi_reduction <add>, %109, %cst_123 [0] : vector<64x128xf32> to vector<128xf32>
    %111 = vector.shape_cast %110 : vector<128xf32> to vector<1x128xf32>
    %c0_124 = arith.constant 0 : index
    %c0_125 = arith.constant 0 : index
    %c0_126 = arith.constant 0 : index
    %c0_127 = arith.constant 0 : index
    %112 = vector.load %arg9[%c0_124, %c0_125, %c0_126, %c0_127] : memref<1x1x1x128xf32, #tpu.memory_space<vmem>>, vector<1x1x1x128xf32>
    %113 = vector.shape_cast %112 : vector<1x1x1x128xf32> to vector<1x128xf32>
    %114 = vector.shape_cast %111 : vector<1x128xf32> to vector<1x1x1x128xf32>
    tpu.vector_store %arg9[%c0_124, %c0_125, %c0_126, %c0_127], %114 {strides = array<i32>} : memref<1x1x1x128xf32, #tpu.memory_space<vmem>>, vector<1x1x1x128xf32>,
    return
  }
  func.func @transform_0(%arg0: i32, %arg1: i32) -> (i32, i32, i32, i32, i32, i32) {
    %c0_i32 = arith.constant 0 : i32
    %c0_i32_0 = arith.constant 0 : i32
    %c0_i32_1 = arith.constant 0 : i32
    %c0_i32_2 = arith.constant 0 : i32
    %c0_i32_3 = arith.constant 0 : i32
    return %arg0, %c0_i32, %arg1, %c0_i32_0, %c0_i32_1, %c0_i32_2 : i32, i32, i32, i32, i32, i32
  }
  func.func @transform_1(%arg0: i32, %arg1: i32) -> (i32, i32, i32, i32, i32) {
    %c0_i32 = arith.constant 0 : i32
    %c0_i32_0 = arith.constant 0 : i32
    %c0_i32_1 = arith.constant 0 : i32
    %c0_i32_2 = arith.constant 0 : i32
    %c0_i32_3 = arith.constant 0 : i32
    %c0_i32_4 = arith.constant 0 : i32
    return %c0_i32, %c0_i32_0, %c0_i32_1, %c0_i32_2, %c0_i32_3 : i32, i32, i32, i32, i32
  }
  func.func @transform_2(%arg0: i32, %arg1: i32) -> (i32, i32, i32, i32, i32, i32) {
    %c0_i32 = arith.constant 0 : i32
    %c0_i32_0 = arith.constant 0 : i32
    %c0_i32_1 = arith.constant 0 : i32
    %c0_i32_2 = arith.constant 0 : i32
    %c0_i32_3 = arith.constant 0 : i32
    %c0_i32_4 = arith.constant 0 : i32
    return %arg0, %c0_i32, %c0_i32_0, %c0_i32_1, %c0_i32_2, %c0_i32_3 : i32, i32, i32, i32, i32, i32
  }
  func.func @transform_3(%arg0: i32, %arg1: i32) -> (i32, i32, i32, i32, i32, i32) {
    %c0_i32 = arith.constant 0 : i32
    %c0_i32_0 = arith.constant 0 : i32
    %c0_i32_1 = arith.constant 0 : i32
    %c0_i32_2 = arith.constant 0 : i32
    %c0_i32_3 = arith.constant 0 : i32
    %c0_i32_4 = arith.constant 0 : i32
    return %arg0, %c0_i32, %c0_i32_0, %c0_i32_1, %c0_i32_2, %c0_i32_3 : i32, i32, i32, i32, i32, i32
  }
  func.func @transform_4(%arg0: i32, %arg1: i32) -> (i32, i32, i32, i32, i32) {
    %c0_i32 = arith.constant 0 : i32
    %c0_i32_0 = arith.constant 0 : i32
    %c0_i32_1 = arith.constant 0 : i32
    %c0_i32_2 = arith.constant 0 : i32
    %c0_i32_3 = arith.constant 0 : i32
    return %arg0, %c0_i32, %c0_i32_0, %c0_i32_1, %c0_i32_2 : i32, i32, i32, i32, i32
  }
  func.func @transform_5(%arg0: i32, %arg1: i32) -> (i32, i32, i32) {
    %c0_i32 = arith.constant 0 : i32
    %c0_i32_0 = arith.constant 0 : i32
    return %arg0, %arg1, %c0_i32 : i32, i32, i32
  }
  func.func @transform_6(%arg0: i32, %arg1: i32) -> (i32, i32, i32, i32) {
    %c0_i32 = arith.constant 0 : i32
    %c0_i32_0 = arith.constant 0 : i32
    %c0_i32_1 = arith.constant 0 : i32
    return %arg0, %arg1, %c0_i32, %c0_i32_0 : i32, i32, i32, i32
  }
  func.func @transform_7(%arg0: i32, %arg1: i32) -> (i32, i32, i32, i32) {
    %c0_i32 = arith.constant 0 : i32
    %c0_i32_0 = arith.constant 0 : i32
    %c0_i32_1 = arith.constant 0 : i32
    return %arg0, %arg1, %c0_i32, %c0_i32_0 : i32, i32, i32, i32
  }
}

module attributes {stable_mosaic.version = 11 : i64} {
  func.func @_mm_stats_kernel(%arg0: i32, %arg1: i32, %arg2: i32, %arg3: memref<1x128x128xbf16, #tpu.memory_space<vmem>>, %arg4: memref<1x1x128xf32, #tpu.memory_space<vmem>>, %arg5: memref<1x1x128xf32, #tpu.memory_space<vmem>>, %arg6: memref<1x128x128xbf16, #tpu.memory_space<vmem>>, %arg7: memref<128x128xf32, #tpu.memory_space<vmem>>, %arg8: memref<1x1x128xf32, #tpu.memory_space<vmem>>, %arg9: memref<1x1x128xf32, #tpu.memory_space<vmem>>, %arg10: memref<128x128xf32, #tpu.memory_space<vmem>>) attributes {dimension_semantics = [#tpu.dimension_semantics<parallel>, #tpu.dimension_semantics<parallel>, #tpu.dimension_semantics<arbitrary>], iteration_bounds = array<i64: 1, 1, 1>, scalar_prefetch = 0 : i64, scratch_operands = 1 : i64, tpu.core_type = #tpu.core_type<tc>, window_params = [{transform_indices = @transform_0, window_bounds = array<i64: 1, 128, 128>}, {transform_indices = @transform_1, window_bounds = array<i64: 1, 1, 128>}, {transform_indices = @transform_2, window_bounds = array<i64: 1, 1, 128>}, {transform_indices = @transform_3, window_bounds = array<i64: 1, 128, 128>}, {transform_indices = @transform_4, window_bounds = array<i64: 128, 128>}, {transform_indices = @transform_5, window_bounds = array<i64: 1, 1, 128>}, {transform_indices = @transform_6, window_bounds = array<i64: 1, 1, 128>}]} {
    %c0_i32 = arith.constant 0 : i32
    %0 = arith.cmpi eq, %arg2, %c0_i32 : i32
    %1 = arith.extui %0 : i1 to i32
    %c0_i32_0 = arith.constant 0 : i32
    %2 = arith.cmpi ne, %1, %c0_i32_0 : i32
    scf.if %2 {
      %cst_19 = arith.constant 0.000000e+00 : f32
      %26 = vector.broadcast %cst_19 : f32 to vector<128x128xf32>
      %c0_20 = arith.constant 0 : index
      %c0_21 = arith.constant 0 : index
      %27 = vector.load %arg10[%c0_20, %c0_21] : memref<128x128xf32, #tpu.memory_space<vmem>>, vector<128x128xf32>
      tpu.vector_store %arg10[%c0_20, %c0_21], %26 {strides = array<i32>} : memref<128x128xf32, #tpu.memory_space<vmem>>, vector<128x128xf32>,
    } else {
    }
    %c0 = arith.constant 0 : index
    %c0_1 = arith.constant 0 : index
    %c0_2 = arith.constant 0 : index
    %3 = vector.load %arg3[%c0, %c0_1, %c0_2] : memref<1x128x128xbf16, #tpu.memory_space<vmem>>, vector<1x128x128xbf16>
    %4 = vector.shape_cast %3 : vector<1x128x128xbf16> to vector<128x128xbf16>
    %5 = arith.extf %4 : vector<128x128xbf16> to vector<128x128xf32>
    %c0_3 = arith.constant 0 : index
    %c0_4 = arith.constant 0 : index
    %c0_5 = arith.constant 0 : index
    %6 = vector.load %arg4[%c0_3, %c0_4, %c0_5] : memref<1x1x128xf32, #tpu.memory_space<vmem>>, vector<1x1x128xf32>
    %7 = vector.shape_cast %6 : vector<1x1x128xf32> to vector<1x128xf32>
    %8 = vector.broadcast %7 : vector<1x128xf32> to vector<128x128xf32>
    %9 = arith.mulf %5, %8 : vector<128x128xf32>
    %c0_6 = arith.constant 0 : index
    %c0_7 = arith.constant 0 : index
    %c0_8 = arith.constant 0 : index
    %10 = vector.load %arg5[%c0_6, %c0_7, %c0_8] : memref<1x1x128xf32, #tpu.memory_space<vmem>>, vector<1x1x128xf32>
    %11 = vector.shape_cast %10 : vector<1x1x128xf32> to vector<1x128xf32>
    %12 = vector.broadcast %11 : vector<1x128xf32> to vector<128x128xf32>
    %13 = arith.addf %9, %12 : vector<128x128xf32>
    %cst = arith.constant 0.000000e+00 : f32
    %14 = vector.broadcast %cst : f32 to vector<128x128xf32>
    %15 = arith.maximumf %13, %14 : vector<128x128xf32>
    %c0_9 = arith.constant 0 : index
    %c0_10 = arith.constant 0 : index
    %16 = vector.load %arg10[%c0_9, %c0_10] : memref<128x128xf32, #tpu.memory_space<vmem>>, vector<128x128xf32>
    %17 = arith.truncf %15 : vector<128x128xf32> to vector<128x128xbf16>
    %c0_11 = arith.constant 0 : index
    %c0_12 = arith.constant 0 : index
    %c0_13 = arith.constant 0 : index
    %18 = vector.load %arg6[%c0_11, %c0_12, %c0_13] : memref<1x128x128xbf16, #tpu.memory_space<vmem>>, vector<1x128x128xbf16>
    %19 = vector.shape_cast %18 : vector<1x128x128xbf16> to vector<128x128xbf16>
    %cst_14 = arith.constant dense<0.000000e+00> : vector<128x128xf32>
    %20 = tpu.matmul %17, %19, %cst_14 {dimension_numbers = #tpu.dot_dimension_numbers<[1], [0], [0], [1], [0, 0, 1, 1], [], []>} : vector<128x128xbf16>, vector<128x128xbf16>, vector<128x128xf32> -> vector<128x128xf32>
    %21 = arith.addf %16, %20 : vector<128x128xf32>
    %c0_15 = arith.constant 0 : index
    %c0_16 = arith.constant 0 : index
    %22 = vector.load %arg10[%c0_15, %c0_16] : memref<128x128xf32, #tpu.memory_space<vmem>>, vector<128x128xf32>
    tpu.vector_store %arg10[%c0_15, %c0_16], %21 {strides = array<i32>} : memref<128x128xf32, #tpu.memory_space<vmem>>, vector<128x128xf32>,
    %c0_i32_17 = arith.constant 0 : i32
    %23 = arith.cmpi eq, %arg2, %c0_i32_17 : i32
    %24 = arith.extui %23 : i1 to i32
    %c0_i32_18 = arith.constant 0 : i32
    %25 = arith.cmpi ne, %24, %c0_i32_18 : i32
    scf.if %25 {
      %c0_19 = arith.constant 0 : index
      %c0_20 = arith.constant 0 : index
      %26 = vector.load %arg10[%c0_19, %c0_20] : memref<128x128xf32, #tpu.memory_space<vmem>>, vector<128x128xf32>
      %c0_21 = arith.constant 0 : index
      %c0_22 = arith.constant 0 : index
      %27 = vector.load %arg7[%c0_21, %c0_22] : memref<128x128xf32, #tpu.memory_space<vmem>>, vector<128x128xf32>
      tpu.vector_store %arg7[%c0_21, %c0_22], %26 {strides = array<i32>} : memref<128x128xf32, #tpu.memory_space<vmem>>, vector<128x128xf32>,
      %cst_23 = arith.constant dense<0.000000e+00> : vector<128xf32>
      %28 = vector.multi_reduction <add>, %26, %cst_23 [0] : vector<128x128xf32> to vector<128xf32>
      %29 = vector.shape_cast %28 : vector<128xf32> to vector<1x128xf32>
      %c0_24 = arith.constant 0 : index
      %c0_25 = arith.constant 0 : index
      %c0_26 = arith.constant 0 : index
      %30 = vector.load %arg8[%c0_24, %c0_25, %c0_26] : memref<1x1x128xf32, #tpu.memory_space<vmem>>, vector<1x1x128xf32>
      %31 = vector.shape_cast %30 : vector<1x1x128xf32> to vector<1x128xf32>
      %32 = vector.shape_cast %29 : vector<1x128xf32> to vector<1x1x128xf32>
      tpu.vector_store %arg8[%c0_24, %c0_25, %c0_26], %32 {strides = array<i32>} : memref<1x1x128xf32, #tpu.memory_space<vmem>>, vector<1x1x128xf32>,
      %33 = arith.mulf %26, %26 : vector<128x128xf32>
      %cst_27 = arith.constant dense<0.000000e+00> : vector<128xf32>
      %34 = vector.multi_reduction <add>, %33, %cst_27 [0] : vector<128x128xf32> to vector<128xf32>
      %35 = vector.shape_cast %34 : vector<128xf32> to vector<1x128xf32>
      %c0_28 = arith.constant 0 : index
      %c0_29 = arith.constant 0 : index
      %c0_30 = arith.constant 0 : index
      %36 = vector.load %arg9[%c0_28, %c0_29, %c0_30] : memref<1x1x128xf32, #tpu.memory_space<vmem>>, vector<1x1x128xf32>
      %37 = vector.shape_cast %36 : vector<1x1x128xf32> to vector<1x128xf32>
      %38 = vector.shape_cast %35 : vector<1x128xf32> to vector<1x1x128xf32>
      tpu.vector_store %arg9[%c0_28, %c0_29, %c0_30], %38 {strides = array<i32>} : memref<1x1x128xf32, #tpu.memory_space<vmem>>, vector<1x1x128xf32>,
    } else {
    }
    return
  }
  func.func @transform_0(%arg0: i32, %arg1: i32, %arg2: i32) -> (i32, i32, i32) {
    %c0_i32 = arith.constant 0 : i32
    %c0_i32_0 = arith.constant 0 : i32
    return %arg2, %arg0, %c0_i32 : i32, i32, i32
  }
  func.func @transform_1(%arg0: i32, %arg1: i32, %arg2: i32) -> (i32, i32, i32) {
    %c0_i32 = arith.constant 0 : i32
    %c0_i32_0 = arith.constant 0 : i32
    %c0_i32_1 = arith.constant 0 : i32
    return %arg2, %c0_i32, %c0_i32_0 : i32, i32, i32
  }
  func.func @transform_2(%arg0: i32, %arg1: i32, %arg2: i32) -> (i32, i32, i32) {
    %c0_i32 = arith.constant 0 : i32
    %c0_i32_0 = arith.constant 0 : i32
    %c0_i32_1 = arith.constant 0 : i32
    return %arg2, %c0_i32, %c0_i32_0 : i32, i32, i32
  }
  func.func @transform_3(%arg0: i32, %arg1: i32, %arg2: i32) -> (i32, i32, i32) {
    %c0_i32 = arith.constant 0 : i32
    %c0_i32_0 = arith.constant 0 : i32
    return %arg2, %c0_i32, %arg1 : i32, i32, i32
  }
  func.func @transform_4(%arg0: i32, %arg1: i32, %arg2: i32) -> (i32, i32) {
    %c0_i32 = arith.constant 0 : i32
    return %arg0, %arg1 : i32, i32
  }
  func.func @transform_5(%arg0: i32, %arg1: i32, %arg2: i32) -> (i32, i32, i32) {
    %c0_i32 = arith.constant 0 : i32
    %c0_i32_0 = arith.constant 0 : i32
    return %arg0, %c0_i32, %arg1 : i32, i32, i32
  }
  func.func @transform_6(%arg0: i32, %arg1: i32, %arg2: i32) -> (i32, i32, i32) {
    %c0_i32 = arith.constant 0 : i32
    %c0_i32_0 = arith.constant 0 : i32
    return %arg0, %c0_i32, %arg1 : i32, i32, i32
  }
}

module attributes {stable_mosaic.version = 11 : i64} {
  func.func @_mm_stats_kernel(%arg0: i32, %arg1: i32, %arg2: i32, %arg3: memref<1x128x128xbf16, #tpu.memory_space<vmem>>, %arg4: memref<1x128x128xbf16, #tpu.memory_space<vmem>>, %arg5: memref<128x128xf32, #tpu.memory_space<vmem>>, %arg6: memref<1x1x128xf32, #tpu.memory_space<vmem>>, %arg7: memref<1x1x128xf32, #tpu.memory_space<vmem>>, %arg8: memref<128x128xf32, #tpu.memory_space<vmem>>) attributes {dimension_semantics = [#tpu.dimension_semantics<parallel>, #tpu.dimension_semantics<parallel>, #tpu.dimension_semantics<arbitrary>], iteration_bounds = array<i64: 1, 1, 1>, scalar_prefetch = 0 : i64, scratch_operands = 1 : i64, tpu.core_type = #tpu.core_type<tc>, window_params = [{transform_indices = @transform_0, window_bounds = array<i64: 1, 128, 128>}, {transform_indices = @transform_1, window_bounds = array<i64: 1, 128, 128>}, {transform_indices = @transform_2, window_bounds = array<i64: 128, 128>}, {transform_indices = @transform_3, window_bounds = array<i64: 1, 1, 128>}, {transform_indices = @transform_4, window_bounds = array<i64: 1, 1, 128>}]} {
    %c0_i32 = arith.constant 0 : i32
    %0 = arith.cmpi eq, %arg2, %c0_i32 : i32
    %1 = arith.extui %0 : i1 to i32
    %c0_i32_0 = arith.constant 0 : i32
    %2 = arith.cmpi ne, %1, %c0_i32_0 : i32
    scf.if %2 {
      %cst_12 = arith.constant 0.000000e+00 : f32
      %14 = vector.broadcast %cst_12 : f32 to vector<128x128xf32>
      %c0_13 = arith.constant 0 : index
      %c0_14 = arith.constant 0 : index
      %15 = vector.load %arg8[%c0_13, %c0_14] : memref<128x128xf32, #tpu.memory_space<vmem>>, vector<128x128xf32>
      tpu.vector_store %arg8[%c0_13, %c0_14], %14 {strides = array<i32>} : memref<128x128xf32, #tpu.memory_space<vmem>>, vector<128x128xf32>,
    } else {
    }
    %c0 = arith.constant 0 : index
    %c0_1 = arith.constant 0 : index
    %c0_2 = arith.constant 0 : index
    %3 = vector.load %arg3[%c0, %c0_1, %c0_2] : memref<1x128x128xbf16, #tpu.memory_space<vmem>>, vector<1x128x128xbf16>
    %4 = vector.shape_cast %3 : vector<1x128x128xbf16> to vector<128x128xbf16>
    %c0_3 = arith.constant 0 : index
    %c0_4 = arith.constant 0 : index
    %5 = vector.load %arg8[%c0_3, %c0_4] : memref<128x128xf32, #tpu.memory_space<vmem>>, vector<128x128xf32>
    %c0_5 = arith.constant 0 : index
    %c0_6 = arith.constant 0 : index
    %c0_7 = arith.constant 0 : index
    %6 = vector.load %arg4[%c0_5, %c0_6, %c0_7] : memref<1x128x128xbf16, #tpu.memory_space<vmem>>, vector<1x128x128xbf16>
    %7 = vector.shape_cast %6 : vector<1x128x128xbf16> to vector<128x128xbf16>
    %cst = arith.constant dense<0.000000e+00> : vector<128x128xf32>
    %8 = tpu.matmul %4, %7, %cst {dimension_numbers = #tpu.dot_dimension_numbers<[1], [0], [0], [1], [0, 0, 1, 1], [], []>} : vector<128x128xbf16>, vector<128x128xbf16>, vector<128x128xf32> -> vector<128x128xf32>
    %9 = arith.addf %5, %8 : vector<128x128xf32>
    %c0_8 = arith.constant 0 : index
    %c0_9 = arith.constant 0 : index
    %10 = vector.load %arg8[%c0_8, %c0_9] : memref<128x128xf32, #tpu.memory_space<vmem>>, vector<128x128xf32>
    tpu.vector_store %arg8[%c0_8, %c0_9], %9 {strides = array<i32>} : memref<128x128xf32, #tpu.memory_space<vmem>>, vector<128x128xf32>,
    %c0_i32_10 = arith.constant 0 : i32
    %11 = arith.cmpi eq, %arg2, %c0_i32_10 : i32
    %12 = arith.extui %11 : i1 to i32
    %c0_i32_11 = arith.constant 0 : i32
    %13 = arith.cmpi ne, %12, %c0_i32_11 : i32
    scf.if %13 {
      %c0_12 = arith.constant 0 : index
      %c0_13 = arith.constant 0 : index
      %14 = vector.load %arg8[%c0_12, %c0_13] : memref<128x128xf32, #tpu.memory_space<vmem>>, vector<128x128xf32>
      %c0_14 = arith.constant 0 : index
      %c0_15 = arith.constant 0 : index
      %15 = vector.load %arg5[%c0_14, %c0_15] : memref<128x128xf32, #tpu.memory_space<vmem>>, vector<128x128xf32>
      tpu.vector_store %arg5[%c0_14, %c0_15], %14 {strides = array<i32>} : memref<128x128xf32, #tpu.memory_space<vmem>>, vector<128x128xf32>,
      %cst_16 = arith.constant dense<0.000000e+00> : vector<128xf32>
      %16 = vector.multi_reduction <add>, %14, %cst_16 [0] : vector<128x128xf32> to vector<128xf32>
      %17 = vector.shape_cast %16 : vector<128xf32> to vector<1x128xf32>
      %c0_17 = arith.constant 0 : index
      %c0_18 = arith.constant 0 : index
      %c0_19 = arith.constant 0 : index
      %18 = vector.load %arg6[%c0_17, %c0_18, %c0_19] : memref<1x1x128xf32, #tpu.memory_space<vmem>>, vector<1x1x128xf32>
      %19 = vector.shape_cast %18 : vector<1x1x128xf32> to vector<1x128xf32>
      %20 = vector.shape_cast %17 : vector<1x128xf32> to vector<1x1x128xf32>
      tpu.vector_store %arg6[%c0_17, %c0_18, %c0_19], %20 {strides = array<i32>} : memref<1x1x128xf32, #tpu.memory_space<vmem>>, vector<1x1x128xf32>,
      %21 = arith.mulf %14, %14 : vector<128x128xf32>
      %cst_20 = arith.constant dense<0.000000e+00> : vector<128xf32>
      %22 = vector.multi_reduction <add>, %21, %cst_20 [0] : vector<128x128xf32> to vector<128xf32>
      %23 = vector.shape_cast %22 : vector<128xf32> to vector<1x128xf32>
      %c0_21 = arith.constant 0 : index
      %c0_22 = arith.constant 0 : index
      %c0_23 = arith.constant 0 : index
      %24 = vector.load %arg7[%c0_21, %c0_22, %c0_23] : memref<1x1x128xf32, #tpu.memory_space<vmem>>, vector<1x1x128xf32>
      %25 = vector.shape_cast %24 : vector<1x1x128xf32> to vector<1x128xf32>
      %26 = vector.shape_cast %23 : vector<1x128xf32> to vector<1x1x128xf32>
      tpu.vector_store %arg7[%c0_21, %c0_22, %c0_23], %26 {strides = array<i32>} : memref<1x1x128xf32, #tpu.memory_space<vmem>>, vector<1x1x128xf32>,
    } else {
    }
    return
  }
  func.func @transform_0(%arg0: i32, %arg1: i32, %arg2: i32) -> (i32, i32, i32) {
    %c0_i32 = arith.constant 0 : i32
    %c0_i32_0 = arith.constant 0 : i32
    return %arg2, %arg0, %c0_i32 : i32, i32, i32
  }
  func.func @transform_1(%arg0: i32, %arg1: i32, %arg2: i32) -> (i32, i32, i32) {
    %c0_i32 = arith.constant 0 : i32
    %c0_i32_0 = arith.constant 0 : i32
    return %arg2, %c0_i32, %arg1 : i32, i32, i32
  }
  func.func @transform_2(%arg0: i32, %arg1: i32, %arg2: i32) -> (i32, i32) {
    %c0_i32 = arith.constant 0 : i32
    return %arg0, %arg1 : i32, i32
  }
  func.func @transform_3(%arg0: i32, %arg1: i32, %arg2: i32) -> (i32, i32, i32) {
    %c0_i32 = arith.constant 0 : i32
    %c0_i32_0 = arith.constant 0 : i32
    return %arg0, %c0_i32, %arg1 : i32, i32, i32
  }
  func.func @transform_4(%arg0: i32, %arg1: i32, %arg2: i32) -> (i32, i32, i32) {
    %c0_i32 = arith.constant 0 : i32
    %c0_i32_0 = arith.constant 0 : i32
    return %arg0, %c0_i32, %arg1 : i32, i32, i32
  }
}

module attributes {stable_mosaic.version = 11 : i64} {
  func.func @_affine_kernel(%arg0: i32, %arg1: i32, %arg2: memref<1x128x128xf32, #tpu.memory_space<vmem>>, %arg3: memref<1x1x128xf32, #tpu.memory_space<vmem>>, %arg4: memref<1x1x128xf32, #tpu.memory_space<vmem>>, %arg5: memref<1x128x128xf32, #tpu.memory_space<vmem>>, %arg6: memref<1x1x128xf32, #tpu.memory_space<vmem>>, %arg7: memref<1x1x128xf32, #tpu.memory_space<vmem>>, %arg8: memref<1x128x128xf32, #tpu.memory_space<vmem>>) attributes {dimension_semantics = [#tpu.dimension_semantics<parallel>, #tpu.dimension_semantics<parallel>], iteration_bounds = array<i64: 1, 1>, scalar_prefetch = 0 : i64, scratch_operands = 0 : i64, tpu.core_type = #tpu.core_type<tc>, window_params = [{transform_indices = @transform_0, window_bounds = array<i64: 1, 128, 128>}, {transform_indices = @transform_1, window_bounds = array<i64: 1, 1, 128>}, {transform_indices = @transform_2, window_bounds = array<i64: 1, 1, 128>}, {transform_indices = @transform_3, window_bounds = array<i64: 1, 128, 128>}, {transform_indices = @transform_4, window_bounds = array<i64: 1, 1, 128>}, {transform_indices = @transform_5, window_bounds = array<i64: 1, 1, 128>}, {transform_indices = @transform_6, window_bounds = array<i64: 1, 128, 128>}]} {
    %c0 = arith.constant 0 : index
    %c0_0 = arith.constant 0 : index
    %c0_1 = arith.constant 0 : index
    %0 = vector.load %arg2[%c0, %c0_0, %c0_1] : memref<1x128x128xf32, #tpu.memory_space<vmem>>, vector<1x128x128xf32>
    %c0_2 = arith.constant 0 : index
    %c0_3 = arith.constant 0 : index
    %c0_4 = arith.constant 0 : index
    %1 = vector.load %arg3[%c0_2, %c0_3, %c0_4] : memref<1x1x128xf32, #tpu.memory_space<vmem>>, vector<1x1x128xf32>
    %2 = vector.broadcast %1 : vector<1x1x128xf32> to vector<1x128x128xf32>
    %3 = arith.mulf %0, %2 : vector<1x128x128xf32>
    %c0_5 = arith.constant 0 : index
    %c0_6 = arith.constant 0 : index
    %c0_7 = arith.constant 0 : index
    %4 = vector.load %arg4[%c0_5, %c0_6, %c0_7] : memref<1x1x128xf32, #tpu.memory_space<vmem>>, vector<1x1x128xf32>
    %5 = vector.broadcast %4 : vector<1x1x128xf32> to vector<1x128x128xf32>
    %6 = arith.addf %3, %5 : vector<1x128x128xf32>
    %c0_8 = arith.constant 0 : index
    %c0_9 = arith.constant 0 : index
    %c0_10 = arith.constant 0 : index
    %7 = vector.load %arg5[%c0_8, %c0_9, %c0_10] : memref<1x128x128xf32, #tpu.memory_space<vmem>>, vector<1x128x128xf32>
    %c0_11 = arith.constant 0 : index
    %c0_12 = arith.constant 0 : index
    %c0_13 = arith.constant 0 : index
    %8 = vector.load %arg6[%c0_11, %c0_12, %c0_13] : memref<1x1x128xf32, #tpu.memory_space<vmem>>, vector<1x1x128xf32>
    %9 = vector.broadcast %8 : vector<1x1x128xf32> to vector<1x128x128xf32>
    %10 = arith.mulf %7, %9 : vector<1x128x128xf32>
    %c0_14 = arith.constant 0 : index
    %c0_15 = arith.constant 0 : index
    %c0_16 = arith.constant 0 : index
    %11 = vector.load %arg7[%c0_14, %c0_15, %c0_16] : memref<1x1x128xf32, #tpu.memory_space<vmem>>, vector<1x1x128xf32>
    %12 = vector.broadcast %11 : vector<1x1x128xf32> to vector<1x128x128xf32>
    %13 = arith.addf %10, %12 : vector<1x128x128xf32>
    %14 = arith.addf %6, %13 : vector<1x128x128xf32>
    %cst = arith.constant 0.000000e+00 : f32
    %15 = vector.broadcast %cst : f32 to vector<1x128x128xf32>
    %16 = arith.maximumf %14, %15 : vector<1x128x128xf32>
    %c0_17 = arith.constant 0 : index
    %c0_18 = arith.constant 0 : index
    %c0_19 = arith.constant 0 : index
    %17 = vector.load %arg8[%c0_17, %c0_18, %c0_19] : memref<1x128x128xf32, #tpu.memory_space<vmem>>, vector<1x128x128xf32>
    tpu.vector_store %arg8[%c0_17, %c0_18, %c0_19], %16 {strides = array<i32>} : memref<1x128x128xf32, #tpu.memory_space<vmem>>, vector<1x128x128xf32>,
    return
  }
  func.func @transform_0(%arg0: i32, %arg1: i32) -> (i32, i32, i32) {
    %c0_i32 = arith.constant 0 : i32
    %c0_i32_0 = arith.constant 0 : i32
    return %arg0, %arg1, %c0_i32 : i32, i32, i32
  }
  func.func @transform_1(%arg0: i32, %arg1: i32) -> (i32, i32, i32) {
    %c0_i32 = arith.constant 0 : i32
    %c0_i32_0 = arith.constant 0 : i32
    %c0_i32_1 = arith.constant 0 : i32
    return %arg0, %c0_i32, %c0_i32_0 : i32, i32, i32
  }
  func.func @transform_2(%arg0: i32, %arg1: i32) -> (i32, i32, i32) {
    %c0_i32 = arith.constant 0 : i32
    %c0_i32_0 = arith.constant 0 : i32
    %c0_i32_1 = arith.constant 0 : i32
    return %arg0, %c0_i32, %c0_i32_0 : i32, i32, i32
  }
  func.func @transform_3(%arg0: i32, %arg1: i32) -> (i32, i32, i32) {
    %c0_i32 = arith.constant 0 : i32
    %c0_i32_0 = arith.constant 0 : i32
    return %arg0, %arg1, %c0_i32 : i32, i32, i32
  }
  func.func @transform_4(%arg0: i32, %arg1: i32) -> (i32, i32, i32) {
    %c0_i32 = arith.constant 0 : i32
    %c0_i32_0 = arith.constant 0 : i32
    %c0_i32_1 = arith.constant 0 : i32
    return %arg0, %c0_i32, %c0_i32_0 : i32, i32, i32
  }
  func.func @transform_5(%arg0: i32, %arg1: i32) -> (i32, i32, i32) {
    %c0_i32 = arith.constant 0 : i32
    %c0_i32_0 = arith.constant 0 : i32
    %c0_i32_1 = arith.constant 0 : i32
    return %arg0, %c0_i32, %c0_i32_0 : i32, i32, i32
  }
  func.func @transform_6(%arg0: i32, %arg1: i32) -> (i32, i32, i32) {
    %c0_i32 = arith.constant 0 : i32
    %c0_i32_0 = arith.constant 0 : i32
    return %arg0, %arg1, %c0_i32 : i32, i32, i32
  }
}

</mosaic_0001>

<llo_original>
// kernel: _lambda_.5
$region0: #{_lambda_.5}
  #allocation0 [shape = 'u32[]', space=smem, size = 0x4, offset = 0x4, fixed_abs, tag = 'smem constant byte address 0x4 - core index']
  #allocation1 [shape = 'u32[72,128]{1,0:T(1,128)}', space=vmem, size = 0x9000, scoped, tag = 'internal scratch']
  #allocation2 [shape = 'f32[512,128]{1,0:T(8,128)}', space=vmem, size = 0x40000, scoped, tag = 'scratch operand']
  %s0 = inlined_call_operand.vmem [shape: bf16[1,512,128], index: 0, kind: input, shape index: {}]
  %s1 = inlined_call_operand.vmem [shape: bf16[1,128,128], index: 1, kind: input, shape index: {}]
  %s2 = inlined_call_operand.vmem [shape: bf16[512,128], index: 2, kind: output, shape index: {0}]
  %s3 = inlined_call_operand.vmem [shape: f32[1,1,128], index: 3, kind: output, shape index: {1}]
  %s4 = inlined_call_operand.vmem [shape: f32[1,1,128], index: 4, kind: output, shape index: {2}]
  %5 = xla_tuple %s2, %s3, %s4
  %s6 = sld [smem:[#allocation0]]
  $region42: #{_lambda_.5} parent=0
    _
  %s8 = ssub.s32 1, %s6
  %s9 = scalar_select 0, %s8, %s6
  // Predicated region
  $region2: #{_lambda_.5} parent=0 // pred_check
    _
  $region3: #{_lambda_.5} parent=0 // pred_check_branch
    %11 = sbr.rel (0) target = $region5
  $region4: #{_lambda_.5} parent=0 // pred_region
    _
  $region5: #{_lambda_.5} parent=0 // pred_fallthru
    _
  // Predicated region
  $region6: #{_lambda_.5} parent=0 // pred_check
    _
  $region7: #{_lambda_.5} parent=0 // pred_check_branch
    %13 = sbr.rel (0) target = $region9
  $region8: #{_lambda_.5} parent=0 // pred_region
    _
  $region9: #{_lambda_.5} parent=0 // pred_fallthru
    _
  %p14 = scmp.eq.s32.totalorder 0, 0
  // Predicated region
  $region10: #{_lambda_.5} parent=0 // pred_check
    %p15 = pneg %p14
  $region11: #{_lambda_.5} parent=0 // pred_check_branch
    %17 = sbr.rel (%p15) target = $region13
  $region12: #{_lambda_.5} parent=0 // pred_region
    %18 = vst [vmem:[#allocation2] sm:$0xff] 0.0
    %19 = vst [vmem:[#allocation2 + $0x8] sm:$0xff] 0.0
    %20 = vst [vmem:[#allocation2 + $0x10] sm:$0xff] 0.0
    %21 = vst [vmem:[#allocation2 + $0x18] sm:$0xff] 0.0
    %22 = vst [vmem:[#allocation2 + $0x20] sm:$0xff] 0.0
    %23 = vst [vmem:[#allocation2 + $0x28] sm:$0xff] 0.0
    %24 = vst [vmem:[#allocation2 + $0x30] sm:$0xff] 0.0
    %25 = vst [vmem:[#allocation2 + $0x38] sm:$0xff] 0.0
    %26 = vst [vmem:[#allocation2 + $0x40] sm:$0xff] 0.0
    %27 = vst [vmem:[#allocation2 + $0x48] sm:$0xff] 0.0
    %28 = vst [vmem:[#allocation2 + $0x50] sm:$0xff] 0.0
    %29 = vst [vmem:[#allocation2 + $0x58] sm:$0xff] 0.0
    %30 = vst [vmem:[#allocation2 + $0x60] sm:$0xff] 0.0
    %31 = vst [vmem:[#allocation2 + $0x68] sm:$0xff] 0.0
    %32 = vst [vmem:[#allocation2 + $0x70] sm:$0xff] 0.0
    %33 = vst [vmem:[#allocation2 + $0x78] sm:$0xff] 0.0
    %34 = vst [vmem:[#allocation2 + $0x80] sm:$0xff] 0.0
    %35 = vst [vmem:[#allocation2 + $0x88] sm:$0xff] 0.0
    %36 = vst [vmem:[#allocation2 + $0x90] sm:$0xff] 0.0
    %37 = vst [vmem:[#allocation2 + $0x98] sm:$0xff] 0.0
    %38 = vst [vmem:[#allocation2 + $0xa0] sm:$0xff] 0.0
    %39 = vst [vmem:[#allocation2 + $0xa8] sm:$0xff] 0.0
    %40 = vst [vmem:[#allocation2 + $0xb0] sm:$0xff] 0.0
    %41 = vst [vmem:[#allocation2 + $0xb8] sm:$0xff] 0.0
    %42 = vst [vmem:[#allocation2 + $0xc0] sm:$0xff] 0.0
    %43 = vst [vmem:[#allocation2 + $0xc8] sm:$0xff] 0.0
    %44 = vst [vmem:[#allocation2 + $0xd0] sm:$0xff] 0.0
    %45 = vst [vmem:[#allocation2 + $0xd8] sm:$0xff] 0.0
    %46 = vst [vmem:[#allocation2 + $0xe0] sm:$0xff] 0.0
    %47 = vst [vmem:[#allocation2 + $0xe8] sm:$0xff] 0.0
    %48 = vst [vmem:[#allocation2 + $0xf0] sm:$0xff] 0.0
    %49 = vst [vmem:[#allocation2 + $0xf8] sm:$0xff] 0.0
    %50 = vst [vmem:[#allocation2 + $0x100] sm:$0xff] 0.0
    %51 = vst [vmem:[#allocation2 + $0x108] sm:$0xff] 0.0
    %52 = vst [vmem:[#allocation2 + $0x110] sm:$0xff] 0.0
    %53 = vst [vmem:[#allocation2 + $0x118] sm:$0xff] 0.0
    %54 = vst [vmem:[#allocation2 + $0x120] sm:$0xff] 0.0
    %55 = vst [vmem:[#allocation2 + $0x128] sm:$0xff] 0.0
    %56 = vst [vmem:[#allocation2 + $0x130] sm:$0xff] 0.0
    %57 = vst [vmem:[#allocation2 + $0x138] sm:$0xff] 0.0
    %58 = vst [vmem:[#allocation2 + $0x140] sm:$0xff] 0.0
    %59 = vst [vmem:[#allocation2 + $0x148] sm:$0xff] 0.0
    %60 = vst [vmem:[#allocation2 + $0x150] sm:$0xff] 0.0
    %61 = vst [vmem:[#allocation2 + $0x158] sm:$0xff] 0.0
    %62 = vst [vmem:[#allocation2 + $0x160] sm:$0xff] 0.0
    %63 = vst [vmem:[#allocation2 + $0x168] sm:$0xff] 0.0
    %64 = vst [vmem:[#allocation2 + $0x170] sm:$0xff] 0.0
    %65 = vst [vmem:[#allocation2 + $0x178] sm:$0xff] 0.0
    %66 = vst [vmem:[#allocation2 + $0x180] sm:$0xff] 0.0
    %67 = vst [vmem:[#allocation2 + $0x188] sm:$0xff] 0.0
    %68 = vst [vmem:[#allocation2 + $0x190] sm:$0xff] 0.0
    %69 = vst [vmem:[#allocation2 + $0x198] sm:$0xff] 0.0
    %70 = vst [vmem:[#allocation2 + $0x1a0] sm:$0xff] 0.0
    %71 = vst [vmem:[#allocation2 + $0x1a8] sm:$0xff] 0.0
    %72 = vst [vmem:[#allocation2 + $0x1b0] sm:$0xff] 0.0
    %73 = vst [vmem:[#allocation2 + $0x1b8] sm:$0xff] 0.0
    %74 = vst [vmem:[#allocation2 + $0x1c0] sm:$0xff] 0.0
    %75 = vst [vmem:[#allocation2 + $0x1c8] sm:$0xff] 0.0
    %76 = vst [vmem:[#allocation2 + $0x1d0] sm:$0xff] 0.0
    %77 = vst [vmem:[#allocation2 + $0x1d8] sm:$0xff] 0.0
    %78 = vst [vmem:[#allocation2 + $0x1e0] sm:$0xff] 0.0
    %79 = vst [vmem:[#allocation2 + $0x1e8] sm:$0xff] 0.0
    %80 = vst [vmem:[#allocation2 + $0x1f0] sm:$0xff] 0.0
    %81 = vst [vmem:[#allocation2 + $0x1f8] sm:$0xff] 0.0
  $region13: #{_lambda_.5} parent=0 // pred_fallthru
    _
  %v82 = vld [vmem:[%s0] sm:$0xf]
  %v83 = vld [vmem:[%s0 + $0x4] sm:$0xf]
  %v84 = vld [vmem:[%s0 + $0x8] sm:$0xf]
  %v85 = vld [vmem:[%s0 + $0xc] sm:$0xf]
  %v86 = vld [vmem:[%s0 + $0x10] sm:$0xf]
  %v87 = vld [vmem:[%s0 + $0x14] sm:$0xf]
  %v88 = vld [vmem:[%s0 + $0x18] sm:$0xf]
  %v89 = vld [vmem:[%s0 + $0x1c] sm:$0xf]
  %v90 = vld [vmem:[%s0 + $0x20] sm:$0xf]
  %v91 = vld [vmem:[%s0 + $0x24] sm:$0xf]
  %v92 = vld [vmem:[%s0 + $0x28] sm:$0xf]
  %v93 = vld [vmem:[%s0 + $0x2c] sm:$0xf]
  %v94 = vld [vmem:[%s0 + $0x30] sm:$0xf]
  %v95 = vld [vmem:[%s0 + $0x34] sm:$0xf]
  %v96 = vld [vmem:[%s0 + $0x38] sm:$0xf]
  %v97 = vld [vmem:[%s0 + $0x3c] sm:$0xf]
  %v98 = vld [vmem:[%s0 + $0x40] sm:$0xf]
  %v99 = vld [vmem:[%s0 + $0x44] sm:$0xf]
  %v100 = vld [vmem:[%s0 + $0x48] sm:$0xf]
  %v101 = vld [vmem:[%s0 + $0x4c] sm:$0xf]
  %v102 = vld [vmem:[%s0 + $0x50] sm:$0xf]
  %v103 = vld [vmem:[%s0 + $0x54] sm:$0xf]
  %v104 = vld [vmem:[%s0 + $0x58] sm:$0xf]
  %v105 = vld [vmem:[%s0 + $0x5c] sm:$0xf]
  %v106 = vld [vmem:[%s0 + $0x60] sm:$0xf]
  %v107 = vld [vmem:[%s0 + $0x64] sm:$0xf]
  %v108 = vld [vmem:[%s0 + $0x68] sm:$0xf]
  %v109 = vld [vmem:[%s0 + $0x6c] sm:$0xf]
  %v110 = vld [vmem:[%s0 + $0x70] sm:$0xf]
  %v111 = vld [vmem:[%s0 + $0x74] sm:$0xf]
  %v112 = vld [vmem:[%s0 + $0x78] sm:$0xf]
  %v113 = vld [vmem:[%s0 + $0x7c] sm:$0xf]
  %v114 = vld [vmem:[%s0 + $0x80] sm:$0xf]
  %v115 = vld [vmem:[%s0 + $0x84] sm:$0xf]
  %v116 = vld [vmem:[%s0 + $0x88] sm:$0xf]
  %v117 = vld [vmem:[%s0 + $0x8c] sm:$0xf]
  %v118 = vld [vmem:[%s0 + $0x90] sm:$0xf]
  %v119 = vld [vmem:[%s0 + $0x94] sm:$0xf]
  %v120 = vld [vmem:[%s0 + $0x98] sm:$0xf]
  %v121 = vld [vmem:[%s0 + $0x9c] sm:$0xf]
  %v122 = vld [vmem:[%s0 + $0xa0] sm:$0xf]
  %v123 = vld [vmem:[%s0 + $0xa4] sm:$0xf]
  %v124 = vld [vmem:[%s0 + $0xa8] sm:$0xf]
  %v125 = vld [vmem:[%s0 + $0xac] sm:$0xf]
  %v126 = vld [vmem:[%s0 + $0xb0] sm:$0xf]
  %v127 = vld [vmem:[%s0 + $0xb4] sm:$0xf]
  %v128 = vld [vmem:[%s0 + $0xb8] sm:$0xf]
  %v129 = vld [vmem:[%s0 + $0xbc] sm:$0xf]
  %v130 = vld [vmem:[%s0 + $0xc0] sm:$0xf]
  %v131 = vld [vmem:[%s0 + $0xc4] sm:$0xf]
  %v132 = vld [vmem:[%s0 + $0xc8] sm:$0xf]
  %v133 = vld [vmem:[%s0 + $0xcc] sm:$0xf]
  %v134 = vld [vmem:[%s0 + $0xd0] sm:$0xf]
  %v135 = vld [vmem:[%s0 + $0xd4] sm:$0xf]
  %v136 = vld [vmem:[%s0 + $0xd8] sm:$0xf]
  %v137 = vld [vmem:[%s0 + $0xdc] sm:$0xf]
  %v138 = vld [vmem:[%s0 + $0xe0] sm:$0xf]
  %v139 = vld [vmem:[%s0 + $0xe4] sm:$0xf]
  %v140 = vld [vmem:[%s0 + $0xe8] sm:$0xf]
  %v141 = vld [vmem:[%s0 + $0xec] sm:$0xf]
  %v142 = vld [vmem:[%s0 + $0xf0] sm:$0xf]
  %v143 = vld [vmem:[%s0 + $0xf4] sm:$0xf]
  %v144 = vld [vmem:[%s0 + $0xf8] sm:$0xf]
  %v145 = vld [vmem:[%s0 + $0xfc] sm:$0xf]
  %v146 = vld [vmem:[#allocation2] sm:$0xff]
  %v147 = vld [vmem:[#allocation2 + $0x8] sm:$0xff]
  %v148 = vld [vmem:[#allocation2 + $0x10] sm:$0xff]
  %v149 = vld [vmem:[#allocation2 + $0x18] sm:$0xff]
  %v150 = vld [vmem:[#allocation2 + $0x20] sm:$0xff]
  %v151 = vld [vmem:[#allocation2 + $0x28] sm:$0xff]
  %v152 = vld [vmem:[#allocation2 + $0x30] sm:$0xff]
  %v153 = vld [vmem:[#allocation2 + $0x38] sm:$0xff]
  %v154 = vld [vmem:[#allocation2 + $0x40] sm:$0xff]
  %v155 = vld [vmem:[#allocation2 + $0x48] sm:$0xff]
  %v156 = vld [vmem:[#allocation2 + $0x50] sm:$0xff]
  %v157 = vld [vmem:[#allocation2 + $0x58] sm:$0xff]
  %v158 = vld [vmem:[#allocation2 + $0x60] sm:$0xff]
  %v159 = vld [vmem:[#allocation2 + $0x68] sm:$0xff]
  %v160 = vld [vmem:[#allocation2 + $0x70] sm:$0xff]
  %v161 = vld [vmem:[#allocation2 + $0x78] sm:$0xff]
  %v162 = vld [vmem:[#allocation2 + $0x80] sm:$0xff]
  %v163 = vld [vmem:[#allocation2 + $0x88] sm:$0xff]
  %v164 = vld [vmem:[#allocation2 + $0x90] sm:$0xff]
  %v165 = vld [vmem:[#allocation2 + $0x98] sm:$0xff]
  %v166 = vld [vmem:[#allocation2 + $0xa0] sm:$0xff]
  %v167 = vld [vmem:[#allocation2 + $0xa8] sm:$0xff]
  %v168 = vld [vmem:[#allocation2 + $0xb0] sm:$0xff]
  %v169 = vld [vmem:[#allocation2 + $0xb8] sm:$0xff]
  %v170 = vld [vmem:[#allocation2 + $0xc0] sm:$0xff]
  %v171 = vld [vmem:[#allocation2 + $0xc8] sm:$0xff]
  %v172 = vld [vmem:[#allocation2 + $0xd0] sm:$0xff]
  %v173 = vld [vmem:[#allocation2 + $0xd8] sm:$0xff]
  %v174 = vld [vmem:[#allocation2 + $0xe0] sm:$0xff]
  %v175 = vld [vmem:[#allocation2 + $0xe8] sm:$0xff]
  %v176 = vld [vmem:[#allocation2 + $0xf0] sm:$0xff]
  %v177 = vld [vmem:[#allocation2 + $0xf8] sm:$0xff]
  %v178 = vld [vmem:[#allocation2 + $0x100] sm:$0xff]
  %v179 = vld [vmem:[#allocation2 + $0x108] sm:$0xff]
  %v180 = vld [vmem:[#allocation2 + $0x110] sm:$0xff]
  %v181 = vld [vmem:[#allocation2 + $0x118] sm:$0xff]
  %v182 = vld [vmem:[#allocation2 + $0x120] sm:$0xff]
  %v183 = vld [vmem:[#allocation2 + $0x128] sm:$0xff]
  %v184 = vld [vmem:[#allocation2 + $0x130] sm:$0xff]
  %v185 = vld [vmem:[#allocation2 + $0x138] sm:$0xff]
  %v186 = vld [vmem:[#allocation2 + $0x140] sm:$0xff]
  %v187 = vld [vmem:[#allocation2 + $0x148] sm:$0xff]
  %v188 = vld [vmem:[#allocation2 + $0x150] sm:$0xff]
  %v189 = vld [vmem:[#allocation2 + $0x158] sm:$0xff]
  %v190 = vld [vmem:[#allocation2 + $0x160] sm:$0xff]
  %v191 = vld [vmem:[#allocation2 + $0x168] sm:$0xff]
  %v192 = vld [vmem:[#allocation2 + $0x170] sm:$0xff]
  %v193 = vld [vmem:[#allocation2 + $0x178] sm:$0xff]
  %v194 = vld [vmem:[#allocation2 + $0x180] sm:$0xff]
  %v195 = vld [vmem:[#allocation2 + $0x188] sm:$0xff]
  %v196 = vld [vmem:[#allocation2 + $0x190] sm:$0xff]
  %v197 = vld [vmem:[#allocation2 + $0x198] sm:$0xff]
  %v198 = vld [vmem:[#allocation2 + $0x1a0] sm:$0xff]
  %v199 = vld [vmem:[#allocation2 + $0x1a8] sm:$0xff]
  %v200 = vld [vmem:[#allocation2 + $0x1b0] sm:$0xff]
  %v201 = vld [vmem:[#allocation2 + $0x1b8] sm:$0xff]
  %v202 = vld [vmem:[#allocation2 + $0x1c0] sm:$0xff]
  %v203 = vld [vmem:[#allocation2 + $0x1c8] sm:$0xff]
  %v204 = vld [vmem:[#allocation2 + $0x1d0] sm:$0xff]
  %v205 = vld [vmem:[#allocation2 + $0x1d8] sm:$0xff]
  %v206 = vld [vmem:[#allocation2 + $0x1e0] sm:$0xff]
  %v207 = vld [vmem:[#allocation2 + $0x1e8] sm:$0xff]
  %v208 = vld [vmem:[#allocation2 + $0x1f0] sm:$0xff]
  %v209 = vld [vmem:[#allocation2 + $0x1f8] sm:$0xff]
  %v210 = vld [vmem:[%s1] sm:$0xf]
  %v211 = vld [vmem:[%s1 + $0x4] sm:$0xf]
  %v212 = vld [vmem:[%s1 + $0x8] sm:$0xf]
  %v213 = vld [vmem:[%s1 + $0xc] sm:$0xf]
  %v214 = vld [vmem:[%s1 + $0x10] sm:$0xf]
  %v215 = vld [vmem:[%s1 + $0x14] sm:$0xf]
  %v216 = vld [vmem:[%s1 + $0x18] sm:$0xf]
  %v217 = vld [vmem:[%s1 + $0x1c] sm:$0xf]
  %v218 = vld [vmem:[%s1 + $0x20] sm:$0xf]
  %v219 = vld [vmem:[%s1 + $0x24] sm:$0xf]
  %v220 = vld [vmem:[%s1 + $0x28] sm:$0xf]
  %v221 = vld [vmem:[%s1 + $0x2c] sm:$0xf]
  %v222 = vld [vmem:[%s1 + $0x30] sm:$0xf]
  %v223 = vld [vmem:[%s1 + $0x34] sm:$0xf]
  %v224 = vld [vmem:[%s1 + $0x38] sm:$0xf]
  %v225 = vld [vmem:[%s1 + $0x3c] sm:$0xf]
  %v290 = vunpack.c.l.b16 %v82
  %v291 = vunpack.c.l.b16 %v83
  %v292 = vunpack.c.l.b16 %v84
  %v293 = vunpack.c.l.b16 %v85
  %v294 = vunpack.c.l.b16 %v86
  %v295 = vunpack.c.l.b16 %v87
  %v296 = vunpack.c.l.b16 %v88
  %v297 = vunpack.c.l.b16 %v89
  %v298 = vunpack.c.l.b16 %v90
  %v299 = vunpack.c.l.b16 %v91
  %v300 = vunpack.c.l.b16 %v92
  %v301 = vunpack.c.l.b16 %v93
  %v302 = vunpack.c.l.b16 %v94
  %v303 = vunpack.c.l.b16 %v95
  %v304 = vunpack.c.l.b16 %v96
  %v305 = vunpack.c.l.b16 %v97
  %v306 = vunpack.c.l.b16 %v98
  %v307 = vunpack.c.l.b16 %v99
  %v308 = vunpack.c.l.b16 %v100
  %v309 = vunpack.c.l.b16 %v101
  %v310 = vunpack.c.l.b16 %v102
  %v311 = vunpack.c.l.b16 %v103
  %v312 = vunpack.c.l.b16 %v104
  %v313 = vunpack.c.l.b16 %v105
  %v314 = vunpack.c.l.b16 %v106
  %v315 = vunpack.c.l.b16 %v107
  %v316 = vunpack.c.l.b16 %v108
  %v317 = vunpack.c.l.b16 %v109
  %v318 = vunpack.c.l.b16 %v110
  %v319 = vunpack.c.l.b16 %v111
  %v320 = vunpack.c.l.b16 %v112
  %v321 = vunpack.c.l.b16 %v113
  %v322 = vunpack.c.l.b16 %v114
  %v323 = vunpack.c.l.b16 %v115
  %v324 = vunpack.c.l.b16 %v116
  %v325 = vunpack.c.l.b16 %v117
  %v326 = vunpack.c.l.b16 %v118
  %v327 = vunpack.c.l.b16 %v119
  %v328 = vunpack.c.l.b16 %v120
  %v329 = vunpack.c.l.b16 %v121
  %v330 = vunpack.c.l.b16 %v122
  %v331 = vunpack.c.l.b16 %v123
  %v332 = vunpack.c.l.b16 %v124
  %v333 = vunpack.c.l.b16 %v125
  %v334 = vunpack.c.l.b16 %v126
  %v335 = vunpack.c.l.b16 %v127
  %v336 = vunpack.c.l.b16 %v128
  %v337 = vunpack.c.l.b16 %v129
  %v338 = vunpack.c.l.b16 %v130
  %v339 = vunpack.c.l.b16 %v131
  %v340 = vunpack.c.l.b16 %v132
  %v341 = vunpack.c.l.b16 %v133
  %v342 = vunpack.c.l.b16 %v134
  %v343 = vunpack.c.l.b16 %v135
  %v344 = vunpack.c.l.b16 %v136
  %v345 = vunpack.c.l.b16 %v137
  %v346 = vunpack.c.l.b16 %v138
  %v347 = vunpack.c.l.b16 %v139
  %v348 = vunpack.c.l.b16 %v140
  %v349 = vunpack.c.l.b16 %v141
  %v350 = vunpack.c.l.b16 %v142
  %v351 = vunpack.c.l.b16 %v143
  %v352 = vunpack.c.l.b16 %v144
  %v353 = vunpack.c.l.b16 %v145
  %v354 = vpack.c.b16 %v291, %v290
  %v355 = vpack.c.b16 %v293, %v292
  %v356 = vpack.c.b16 %v295, %v294
  %v357 = vpack.c.b16 %v297, %v296
  %v358 = vpack.c.b16 %v299, %v298
  %v359 = vpack.c.b16 %v301, %v300
  %v360 = vpack.c.b16 %v303, %v302
  %v361 = vpack.c.b16 %v305, %v304
  %v362 = vpack.c.b16 %v307, %v306
  %v363 = vpack.c.b16 %v309, %v308
  %v364 = vpack.c.b16 %v311, %v310
  %v365 = vpack.c.b16 %v313, %v312
  %v366 = vpack.c.b16 %v315, %v314
  %v367 = vpack.c.b16 %v317, %v316
  %v368 = vpack.c.b16 %v319, %v318
  %v369 = vpack.c.b16 %v321, %v320
  %v370 = vpack.c.b16 %v323, %v322
  %v371 = vpack.c.b16 %v325, %v324
  %v372 = vpack.c.b16 %v327, %v326
  %v373 = vpack.c.b16 %v329, %v328
  %v374 = vpack.c.b16 %v331, %v330
  %v375 = vpack.c.b16 %v333, %v332
  %v376 = vpack.c.b16 %v335, %v334
  %v377 = vpack.c.b16 %v337, %v336
  %v378 = vpack.c.b16 %v339, %v338
  %v379 = vpack.c.b16 %v341, %v340
  %v380 = vpack.c.b16 %v343, %v342
  %v381 = vpack.c.b16 %v345, %v344
  %v382 = vpack.c.b16 %v347, %v346
  %v383 = vpack.c.b16 %v349, %v348
  %v384 = vpack.c.b16 %v351, %v350
  %v385 = vpack.c.b16 %v353, %v352
  %v434 = vunpack.c.l.b16 %v210
  %v435 = vunpack.c.l.b16 %v211
  %v436 = vunpack.c.l.b16 %v212
  %v437 = vunpack.c.l.b16 %v213
  %v438 = vunpack.c.l.b16 %v214
  %v439 = vunpack.c.l.b16 %v215
  %v440 = vunpack.c.l.b16 %v216
  %v441 = vunpack.c.l.b16 %v217
  %v442 = vunpack.c.l.b16 %v218
  %v443 = vunpack.c.l.b16 %v219
  %v444 = vunpack.c.l.b16 %v220
  %v445 = vunpack.c.l.b16 %v221
  %v446 = vunpack.c.l.b16 %v222
  %v447 = vunpack.c.l.b16 %v223
  %v448 = vunpack.c.l.b16 %v224
  %v449 = vunpack.c.l.b16 %v225
  %v450 = vpack.c.b16 %v435, %v434
  %v451 = vpack.c.b16 %v437, %v436
  %v452 = vpack.c.b16 %v439, %v438
  %v453 = vpack.c.b16 %v441, %v440
  %v454 = vpack.c.b16 %v443, %v442
  %v455 = vpack.c.b16 %v445, %v444
  %v456 = vpack.c.b16 %v447, %v446
  %v457 = vpack.c.b16 %v449, %v448
  %466 = vmatpush.bf16.msra.mxu0 %v457
  %467 = vmatpush.bf16.msra.mxu0 %v456
  %468 = vmatpush.bf16.msra.mxu0 %v455
  %469 = vmatpush.bf16.msra.mxu0 %v454
  %470 = vmatpush.bf16.msra.mxu0 %v453
  %471 = vmatpush.bf16.msra.mxu0 %v452
  %472 = vmatpush.bf16.msra.mxu0 %v451
  %473 = vmatpush.bf16.msra.mxu0 %v450
  %474 = vmatmul.bf16.gmra.mxu0 %v354
  %v475 = vpop.f32.mrf.mxu0
  %v476 = vadd.f32 0.0, %v475
  %v477 = vpop.f32.mrf.mxu0
  %v478 = vadd.f32 0.0, %v477
  %479 = vmatmul.bf16.gmra.mxu0 %v355
  %v480 = vpop.f32.mrf.mxu0
  %v481 = vadd.f32 0.0, %v480
  %v482 = vpop.f32.mrf.mxu0
  %v483 = vadd.f32 0.0, %v482
  %484 = vmatmul.bf16.gmra.mxu0 %v356
  %v485 = vpop.f32.mrf.mxu0
  %v486 = vadd.f32 0.0, %v485
  %v487 = vpop.f32.mrf.mxu0
  %v488 = vadd.f32 0.0, %v487
  %489 = vmatmul.bf16.gmra.mxu0 %v357
  %v490 = vpop.f32.mrf.mxu0
  %v491 = vadd.f32 0.0, %v490
  %v492 = vpop.f32.mrf.mxu0
  %v493 = vadd.f32 0.0, %v492
  %494 = vmatmul.bf16.gmra.mxu0 %v358
  %v495 = vpop.f32.mrf.mxu0
  %v496 = vadd.f32 0.0, %v495
  %v497 = vpop.f32.mrf.mxu0
  %v498 = vadd.f32 0.0, %v497
  %499 = vmatmul.bf16.gmra.mxu0 %v359
  %v500 = vpop.f32.mrf.mxu0
  %v501 = vadd.f32 0.0, %v500
  %v502 = vpop.f32.mrf.mxu0
  %v503 = vadd.f32 0.0, %v502
  %504 = vmatmul.bf16.gmra.mxu0 %v360
  %v505 = vpop.f32.mrf.mxu0
  %v506 = vadd.f32 0.0, %v505
  %v507 = vpop.f32.mrf.mxu0
  %v508 = vadd.f32 0.0, %v507
  %509 = vmatmul.bf16.gmra.mxu0 %v361
  %v510 = vpop.f32.mrf.mxu0
  %v511 = vadd.f32 0.0, %v510
  %v512 = vpop.f32.mrf.mxu0
  %v513 = vadd.f32 0.0, %v512
  %514 = vmatmul.bf16.gmra.mxu0 %v362
  %v515 = vpop.f32.mrf.mxu0
  %v516 = vadd.f32 0.0, %v515
  %v517 = vpop.f32.mrf.mxu0
  %v518 = vadd.f32 0.0, %v517
  %519 = vmatmul.bf16.gmra.mxu0 %v363
  %v520 = vpop.f32.mrf.mxu0
  %v521 = vadd.f32 0.0, %v520
  %v522 = vpop.f32.mrf.mxu0
  %v523 = vadd.f32 0.0, %v522
  %524 = vmatmul.bf16.gmra.mxu0 %v364
  %v525 = vpop.f32.mrf.mxu0
  %v526 = vadd.f32 0.0, %v525
  %v527 = vpop.f32.mrf.mxu0
  %v528 = vadd.f32 0.0, %v527
  %529 = vmatmul.bf16.gmra.mxu0 %v365
  %v530 = vpop.f32.mrf.mxu0
  %v531 = vadd.f32 0.0, %v530
  %v532 = vpop.f32.mrf.mxu0
  %v533 = vadd.f32 0.0, %v532
  %534 = vmatmul.bf16.gmra.mxu0 %v366
  %v535 = vpop.f32.mrf.mxu0
  %v536 = vadd.f32 0.0, %v535
  %v537 = vpop.f32.mrf.mxu0
  %v538 = vadd.f32 0.0, %v537
  %539 = vmatmul.bf16.gmra.mxu0 %v367
  %v540 = vpop.f32.mrf.mxu0
  %v541 = vadd.f32 0.0, %v540
  %v542 = vpop.f32.mrf.mxu0
  %v543 = vadd.f32 0.0, %v542
  %544 = vmatmul.bf16.gmra.mxu0 %v368
  %v545 = vpop.f32.mrf.mxu0
  %v546 = vadd.f32 0.0, %v545
  %v547 = vpop.f32.mrf.mxu0
  %v548 = vadd.f32 0.0, %v547
  %549 = vmatmul.bf16.gmra.mxu0 %v369
  %v550 = vpop.f32.mrf.mxu0
  %v551 = vadd.f32 0.0, %v550
  %v552 = vpop.f32.mrf.mxu0
  %v553 = vadd.f32 0.0, %v552
  %554 = vmatmul.bf16.gmra.mxu0 %v370
  %v555 = vpop.f32.mrf.mxu0
  %v556 = vadd.f32 0.0, %v555
  %v557 = vpop.f32.mrf.mxu0
  %v558 = vadd.f32 0.0, %v557
  %559 = vmatmul.bf16.gmra.mxu0 %v371
  %v560 = vpop.f32.mrf.mxu0
  %v561 = vadd.f32 0.0, %v560
  %v562 = vpop.f32.mrf.mxu0
  %v563 = vadd.f32 0.0, %v562
  %564 = vmatmul.bf16.gmra.mxu0 %v372
  %v565 = vpop.f32.mrf.mxu0
  %v566 = vadd.f32 0.0, %v565
  %v567 = vpop.f32.mrf.mxu0
  %v568 = vadd.f32 0.0, %v567
  %569 = vmatmul.bf16.gmra.mxu0 %v373
  %v570 = vpop.f32.mrf.mxu0
  %v571 = vadd.f32 0.0, %v570
  %v572 = vpop.f32.mrf.mxu0
  %v573 = vadd.f32 0.0, %v572
  %574 = vmatmul.bf16.gmra.mxu0 %v374
  %v575 = vpop.f32.mrf.mxu0
  %v576 = vadd.f32 0.0, %v575
  %v577 = vpop.f32.mrf.mxu0
  %v578 = vadd.f32 0.0, %v577
  %579 = vmatmul.bf16.gmra.mxu0 %v375
  %v580 = vpop.f32.mrf.mxu0
  %v581 = vadd.f32 0.0, %v580
  %v582 = vpop.f32.mrf.mxu0
  %v583 = vadd.f32 0.0, %v582
  %584 = vmatmul.bf16.gmra.mxu0 %v376
  %v585 = vpop.f32.mrf.mxu0
  %v586 = vadd.f32 0.0, %v585
  %v587 = vpop.f32.mrf.mxu0
  %v588 = vadd.f32 0.0, %v587
  %589 = vmatmul.bf16.gmra.mxu0 %v377
  %v590 = vpop.f32.mrf.mxu0
  %v591 = vadd.f32 0.0, %v590
  %v592 = vpop.f32.mrf.mxu0
  %v593 = vadd.f32 0.0, %v592
  %594 = vmatmul.bf16.gmra.mxu0 %v378
  %v595 = vpop.f32.mrf.mxu0
  %v596 = vadd.f32 0.0, %v595
  %v597 = vpop.f32.mrf.mxu0
  %v598 = vadd.f32 0.0, %v597
  %599 = vmatmul.bf16.gmra.mxu0 %v379
  %v600 = vpop.f32.mrf.mxu0
  %v601 = vadd.f32 0.0, %v600
  %v602 = vpop.f32.mrf.mxu0
  %v603 = vadd.f32 0.0, %v602
  %604 = vmatmul.bf16.gmra.mxu0 %v380
  %v605 = vpop.f32.mrf.mxu0
  %v606 = vadd.f32 0.0, %v605
  %v607 = vpop.f32.mrf.mxu0
  %v608 = vadd.f32 0.0, %v607
  %609 = vmatmul.bf16.gmra.mxu0 %v381
  %v610 = vpop.f32.mrf.mxu0
  %v611 = vadd.f32 0.0, %v610
  %v612 = vpop.f32.mrf.mxu0
  %v613 = vadd.f32 0.0, %v612
  %614 = vmatmul.bf16.gmra.mxu0 %v382
  %v615 = vpop.f32.mrf.mxu0
  %v616 = vadd.f32 0.0, %v615
  %v617 = vpop.f32.mrf.mxu0
  %v618 = vadd.f32 0.0, %v617
  %619 = vmatmul.bf16.gmra.mxu0 %v383
  %v620 = vpop.f32.mrf.mxu0
  %v621 = vadd.f32 0.0, %v620
  %v622 = vpop.f32.mrf.mxu0
  %v623 = vadd.f32 0.0, %v622
  %624 = vmatmul.bf16.gmra.mxu0 %v384
  %v625 = vpop.f32.mrf.mxu0
  %v626 = vadd.f32 0.0, %v625
  %v627 = vpop.f32.mrf.mxu0
  %v628 = vadd.f32 0.0, %v627
  %629 = vmatmul.bf16.gmra.mxu0 %v385
  %v630 = vpop.f32.mrf.mxu0
  %v631 = vadd.f32 0.0, %v630
  %v632 = vpop.f32.mrf.mxu0
  %v633 = vadd.f32 0.0, %v632
  %634 = vdwg.mxu0
  %v635 = vadd.f32 %v146, %v476
  %v636 = vadd.f32 %v147, %v478
  %v637 = vadd.f32 %v148, %v481
  %v638 = vadd.f32 %v149, %v483
  %v639 = vadd.f32 %v150, %v486
  %v640 = vadd.f32 %v151, %v488
  %v641 = vadd.f32 %v152, %v491
  %v642 = vadd.f32 %v153, %v493
  %v643 = vadd.f32 %v154, %v496
  %v644 = vadd.f32 %v155, %v498
  %v645 = vadd.f32 %v156, %v501
  %v646 = vadd.f32 %v157, %v503
  %v647 = vadd.f32 %v158, %v506
  %v648 = vadd.f32 %v159, %v508
  %v649 = vadd.f32 %v160, %v511
  %v650 = vadd.f32 %v161, %v513
  %v651 = vadd.f32 %v162, %v516
  %v652 = vadd.f32 %v163, %v518
  %v653 = vadd.f32 %v164, %v521
  %v654 = vadd.f32 %v165, %v523
  %v655 = vadd.f32 %v166, %v526
  %v656 = vadd.f32 %v167, %v528
  %v657 = vadd.f32 %v168, %v531
  %v658 = vadd.f32 %v169, %v533
  %v659 = vadd.f32 %v170, %v536
  %v660 = vadd.f32 %v171, %v538
  %v661 = vadd.f32 %v172, %v541
  %v662 = vadd.f32 %v173, %v543
  %v663 = vadd.f32 %v174, %v546
  %v664 = vadd.f32 %v175, %v548
  %v665 = vadd.f32 %v176, %v551
  %v666 = vadd.f32 %v177, %v553
  %v667 = vadd.f32 %v178, %v556
  %v668 = vadd.f32 %v179, %v558
  %v669 = vadd.f32 %v180, %v561
  %v670 = vadd.f32 %v181, %v563
  %v671 = vadd.f32 %v182, %v566
  %v672 = vadd.f32 %v183, %v568
  %v673 = vadd.f32 %v184, %v571
  %v674 = vadd.f32 %v185, %v573
  %v675 = vadd.f32 %v186, %v576
  %v676 = vadd.f32 %v187, %v578
  %v677 = vadd.f32 %v188, %v581
  %v678 = vadd.f32 %v189, %v583
  %v679 = vadd.f32 %v190, %v586
  %v680 = vadd.f32 %v191, %v588
  %v681 = vadd.f32 %v192, %v591
  %v682 = vadd.f32 %v193, %v593
  %v683 = vadd.f32 %v194, %v596
  %v684 = vadd.f32 %v195, %v598
  %v685 = vadd.f32 %v196, %v601
  %v686 = vadd.f32 %v197, %v603
  %v687 = vadd.f32 %v198, %v606
  %v688 = vadd.f32 %v199, %v608
  %v689 = vadd.f32 %v200, %v611
  %v690 = vadd.f32 %v201, %v613
  %v691 = vadd.f32 %v202, %v616
  %v692 = vadd.f32 %v203, %v618
  %v693 = vadd.f32 %v204, %v621
  %v694 = vadd.f32 %v205, %v623
  %v695 = vadd.f32 %v206, %v626
  %v696 = vadd.f32 %v207, %v628
  %v697 = vadd.f32 %v208, %v631
  %v698 = vadd.f32 %v209, %v633
  %699 = vst [vmem:[#allocation2] sm:$0xff] %v635
  %700 = vst [vmem:[#allocation2 + $0x8] sm:$0xff] %v636
  %701 = vst [vmem:[#allocation2 + $0x10] sm:$0xff] %v637
  %702 = vst [vmem:[#allocation2 + $0x18] sm:$0xff] %v638
  %703 = vst [vmem:[#allocation2 + $0x20] sm:$0xff] %v639
  %704 = vst [vmem:[#allocation2 + $0x28] sm:$0xff] %v640
  %705 = vst [vmem:[#allocation2 + $0x30] sm:$0xff] %v641
  %706 = vst [vmem:[#allocation2 + $0x38] sm:$0xff] %v642
  %707 = vst [vmem:[#allocation2 + $0x40] sm:$0xff] %v643
  %708 = vst [vmem:[#allocation2 + $0x48] sm:$0xff] %v644
  %709 = vst [vmem:[#allocation2 + $0x50] sm:$0xff] %v645
  %710 = vst [vmem:[#allocation2 + $0x58] sm:$0xff] %v646
  %711 = vst [vmem:[#allocation2 + $0x60] sm:$0xff] %v647
  %712 = vst [vmem:[#allocation2 + $0x68] sm:$0xff] %v648
  %713 = vst [vmem:[#allocation2 + $0x70] sm:$0xff] %v649
  %714 = vst [vmem:[#allocation2 + $0x78] sm:$0xff] %v650
  %715 = vst [vmem:[#allocation2 + $0x80] sm:$0xff] %v651
  %716 = vst [vmem:[#allocation2 + $0x88] sm:$0xff] %v652
  %717 = vst [vmem:[#allocation2 + $0x90] sm:$0xff] %v653
  %718 = vst [vmem:[#allocation2 + $0x98] sm:$0xff] %v654
  %719 = vst [vmem:[#allocation2 + $0xa0] sm:$0xff] %v655
  %720 = vst [vmem:[#allocation2 + $0xa8] sm:$0xff] %v656
  %721 = vst [vmem:[#allocation2 + $0xb0] sm:$0xff] %v657
  %722 = vst [vmem:[#allocation2 + $0xb8] sm:$0xff] %v658
  %723 = vst [vmem:[#allocation2 + $0xc0] sm:$0xff] %v659
  %724 = vst [vmem:[#allocation2 + $0xc8] sm:$0xff] %v660
  %725 = vst [vmem:[#allocation2 + $0xd0] sm:$0xff] %v661
  %726 = vst [vmem:[#allocation2 + $0xd8] sm:$0xff] %v662
  %727 = vst [vmem:[#allocation2 + $0xe0] sm:$0xff] %v663
  %728 = vst [vmem:[#allocation2 + $0xe8] sm:$0xff] %v664
  %729 = vst [vmem:[#allocation2 + $0xf0] sm:$0xff] %v665
  %730 = vst [vmem:[#allocation2 + $0xf8] sm:$0xff] %v666
  %731 = vst [vmem:[#allocation2 + $0x100] sm:$0xff] %v667
  %732 = vst [vmem:[#allocation2 + $0x108] sm:$0xff] %v668
  %733 = vst [vmem:[#allocation2 + $0x110] sm:$0xff] %v669
  %734 = vst [vmem:[#allocation2 + $0x118] sm:$0xff] %v670
  %735 = vst [vmem:[#allocation2 + $0x120] sm:$0xff] %v671
  %736 = vst [vmem:[#allocation2 + $0x128] sm:$0xff] %v672
  %737 = vst [vmem:[#allocation2 + $0x130] sm:$0xff] %v673
  %738 = vst [vmem:[#allocation2 + $0x138] sm:$0xff] %v674
  %739 = vst [vmem:[#allocation2 + $0x140] sm:$0xff] %v675
  %740 = vst [vmem:[#allocation2 + $0x148] sm:$0xff] %v676
  %741 = vst [vmem:[#allocation2 + $0x150] sm:$0xff] %v677
  %742 = vst [vmem:[#allocation2 + $0x158] sm:$0xff] %v678
  %743 = vst [vmem:[#allocation2 + $0x160] sm:$0xff] %v679
  %744 = vst [vmem:[#allocation2 + $0x168] sm:$0xff] %v680
  %745 = vst [vmem:[#allocation2 + $0x170] sm:$0xff] %v681
  %746 = vst [vmem:[#allocation2 + $0x178] sm:$0xff] %v682
  %747 = vst [vmem:[#allocation2 + $0x180] sm:$0xff] %v683
  %748 = vst [vmem:[#allocation2 + $0x188] sm:$0xff] %v684
  %749 = vst [vmem:[#allocation2 + $0x190] sm:$0xff] %v685
  %750 = vst [vmem:[#allocation2 + $0x198] sm:$0xff] %v686
  %751 = vst [vmem:[#allocation2 + $0x1a0] sm:$0xff] %v687
  %752 = vst [vmem:[#allocation2 + $0x1a8] sm:$0xff] %v688
  %753 = vst [vmem:[#allocation2 + $0x1b0] sm:$0xff] %v689
  %754 = vst [vmem:[#allocation2 + $0x1b8] sm:$0xff] %v690
  %755 = vst [vmem:[#allocation2 + $0x1c0] sm:$0xff] %v691
  %756 = vst [vmem:[#allocation2 + $0x1c8] sm:$0xff] %v692
  %757 = vst [vmem:[#allocation2 + $0x1d0] sm:$0xff] %v693
  %758 = vst [vmem:[#allocation2 + $0x1d8] sm:$0xff] %v694
  %759 = vst [vmem:[#allocation2 + $0x1e0] sm:$0xff] %v695
  %760 = vst [vmem:[#allocation2 + $0x1e8] sm:$0xff] %v696
  %761 = vst [vmem:[#allocation2 + $0x1f0] sm:$0xff] %v697
  %762 = vst [vmem:[#allocation2 + $0x1f8] sm:$0xff] %v698
  // Predicated region
  $region14: #{_lambda_.5} parent=0 // pred_check
    %p763 = pneg %p14
  $region15: #{_lambda_.5} parent=0 // pred_check_branch
    %765 = sbr.rel (%p763) target = $region17
  $region16: #{_lambda_.5} parent=0 // pred_region
    %v766 = vld [vmem:[#allocation2] sm:$0xff]
    %v767 = vld [vmem:[#allocation2 + $0x8] sm:$0xff]
    %v768 = vld [vmem:[#allocation2 + $0x10] sm:$0xff]
    %v769 = vld [vmem:[#allocation2 + $0x18] sm:$0xff]
    %v770 = vld [vmem:[#allocation2 + $0x20] sm:$0xff]
    %v771 = vld [vmem:[#allocation2 + $0x28] sm:$0xff]
    %v772 = vld [vmem:[#allocation2 + $0x30] sm:$0xff]
    %v773 = vld [vmem:[#allocation2 + $0x38] sm:$0xff]
    %v774 = vld [vmem:[#allocation2 + $0x40] sm:$0xff]
    %v775 = vld [vmem:[#allocation2 + $0x48] sm:$0xff]
    %v776 = vld [vmem:[#allocation2 + $0x50] sm:$0xff]
    %v777 = vld [vmem:[#allocation2 + $0x58] sm:$0xff]
    %v778 = vld [vmem:[#allocation2 + $0x60] sm:$0xff]
    %v779 = vld [vmem:[#allocation2 + $0x68] sm:$0xff]
    %v780 = vld [vmem:[#allocation2 + $0x70] sm:$0xff]
    %v781 = vld [vmem:[#allocation2 + $0x78] sm:$0xff]
    %v782 = vld [vmem:[#allocation2 + $0x80] sm:$0xff]
    %v783 = vld [vmem:[#allocation2 + $0x88] sm:$0xff]
    %v784 = vld [vmem:[#allocation2 + $0x90] sm:$0xff]
    %v785 = vld [vmem:[#allocation2 + $0x98] sm:$0xff]
    %v786 = vld [vmem:[#allocation2 + $0xa0] sm:$0xff]
    %v787 = vld [vmem:[#allocation2 + $0xa8] sm:$0xff]
    %v788 = vld [vmem:[#allocation2 + $0xb0] sm:$0xff]
    %v789 = vld [vmem:[#allocation2 + $0xb8] sm:$0xff]
    %v790 = vld [vmem:[#allocation2 + $0xc0] sm:$0xff]
    %v791 = vld [vmem:[#allocation2 + $0xc8] sm:$0xff]
    %v792 = vld [vmem:[#allocation2 + $0xd0] sm:$0xff]
    %v793 = vld [vmem:[#allocation2 + $0xd8] sm:$0xff]
    %v794 = vld [vmem:[#allocation2 + $0xe0] sm:$0xff]
    %v795 = vld [vmem:[#allocation2 + $0xe8] sm:$0xff]
    %v796 = vld [vmem:[#allocation2 + $0xf0] sm:$0xff]
    %v797 = vld [vmem:[#allocation2 + $0xf8] sm:$0xff]
    %v798 = vld [vmem:[#allocation2 + $0x100] sm:$0xff]
    %v799 = vld [vmem:[#allocation2 + $0x108] sm:$0xff]
    %v800 = vld [vmem:[#allocation2 + $0x110] sm:$0xff]
    %v801 = vld [vmem:[#allocation2 + $0x118] sm:$0xff]
    %v802 = vld [vmem:[#allocation2 + $0x120] sm:$0xff]
    %v803 = vld [vmem:[#allocation2 + $0x128] sm:$0xff]
    %v804 = vld [vmem:[#allocation2 + $0x130] sm:$0xff]
    %v805 = vld [vmem:[#allocation2 + $0x138] sm:$0xff]
    %v806 = vld [vmem:[#allocation2 + $0x140] sm:$0xff]
    %v807 = vld [vmem:[#allocation2 + $0x148] sm:$0xff]
    %v808 = vld [vmem:[#allocation2 + $0x150] sm:$0xff]
    %v809 = vld [vmem:[#allocation2 + $0x158] sm:$0xff]
    %v810 = vld [vmem:[#allocation2 + $0x160] sm:$0xff]
    %v811 = vld [vmem:[#allocation2 + $0x168] sm:$0xff]
    %v812 = vld [vmem:[#allocation2 + $0x170] sm:$0xff]
    %v813 = vld [vmem:[#allocation2 + $0x178] sm:$0xff]
    %v814 = vld [vmem:[#allocation2 + $0x180] sm:$0xff]
    %v815 = vld [vmem:[#allocation2 + $0x188] sm:$0xff]
    %v816 = vld [vmem:[#allocation2 + $0x190] sm:$0xff]
    %v817 = vld [vmem:[#allocation2 + $0x198] sm:$0xff]
    %v818 = vld [vmem:[#allocation2 + $0x1a0] sm:$0xff]
    %v819 = vld [vmem:[#allocation2 + $0x1a8] sm:$0xff]
    %v820 = vld [vmem:[#allocation2 + $0x1b0] sm:$0xff]
    %v821 = vld [vmem:[#allocation2 + $0x1b8] sm:$0xff]
    %v822 = vld [vmem:[#allocation2 + $0x1c0] sm:$0xff]
    %v823 = vld [vmem:[#allocation2 + $0x1c8] sm:$0xff]
    %v824 = vld [vmem:[#allocation2 + $0x1d0] sm:$0xff]
    %v825 = vld [vmem:[#allocation2 + $0x1d8] sm:$0xff]
    %v826 = vld [vmem:[#allocation2 + $0x1e0] sm:$0xff]
    %v827 = vld [vmem:[#allocation2 + $0x1e8] sm:$0xff]
    %v828 = vld [vmem:[#allocation2 + $0x1f0] sm:$0xff]
    %v829 = vld [vmem:[#allocation2 + $0x1f8] sm:$0xff]
    %v830 = vpack.c.bf16 %v766, %v766
    %v831 = vpack.c.bf16 %v767, %v767
    %v832 = vpack.c.bf16 %v768, %v768
    %v833 = vpack.c.bf16 %v769, %v769
    %v834 = vpack.c.bf16 %v770, %v770
    %v835 = vpack.c.bf16 %v771, %v771
    %v836 = vpack.c.bf16 %v772, %v772
    %v837 = vpack.c.bf16 %v773, %v773
    %v838 = vpack.c.bf16 %v774, %v774
    %v839 = vpack.c.bf16 %v775, %v775
    %v840 = vpack.c.bf16 %v776, %v776
    %v841 = vpack.c.bf16 %v777, %v777
    %v842 = vpack.c.bf16 %v778, %v778
    %v843 = vpack.c.bf16 %v779, %v779
    %v844 = vpack.c.bf16 %v780, %v780
    %v845 = vpack.c.bf16 %v781, %v781
    %v846 = vpack.c.bf16 %v782, %v782
    %v847 = vpack.c.bf16 %v783, %v783
    %v848 = vpack.c.bf16 %v784, %v784
    %v849 = vpack.c.bf16 %v785, %v785
    %v850 = vpack.c.bf16 %v786, %v786
    %v851 = vpack.c.bf16 %v787, %v787
    %v852 = vpack.c.bf16 %v788, %v788
    %v853 = vpack.c.bf16 %v789, %v789
    %v854 = vpack.c.bf16 %v790, %v790
    %v855 = vpack.c.bf16 %v791, %v791
    %v856 = vpack.c.bf16 %v792, %v792
    %v857 = vpack.c.bf16 %v793, %v793
    %v858 = vpack.c.bf16 %v794, %v794
    %v859 = vpack.c.bf16 %v795, %v795
    %v860 = vpack.c.bf16 %v796, %v796
    %v861 = vpack.c.bf16 %v797, %v797
    %v862 = vpack.c.bf16 %v798, %v798
    %v863 = vpack.c.bf16 %v799, %v799
    %v864 = vpack.c.bf16 %v800, %v800
    %v865 = vpack.c.bf16 %v801, %v801
    %v866 = vpack.c.bf16 %v802, %v802
    %v867 = vpack.c.bf16 %v803, %v803
    %v868 = vpack.c.bf16 %v804, %v804
    %v869 = vpack.c.bf16 %v805, %v805
    %v870 = vpack.c.bf16 %v806, %v806
    %v871 = vpack.c.bf16 %v807, %v807
    %v872 = vpack.c.bf16 %v808, %v808
    %v873 = vpack.c.bf16 %v809, %v809
    %v874 = vpack.c.bf16 %v810, %v810
    %v875 = vpack.c.bf16 %v811, %v811
    %v876 = vpack.c.bf16 %v812, %v812
    %v877 = vpack.c.bf16 %v813, %v813
    %v878 = vpack.c.bf16 %v814, %v814
    %v879 = vpack.c.bf16 %v815, %v815
    %v880 = vpack.c.bf16 %v816, %v816
    %v881 = vpack.c.bf16 %v817, %v817
    %v882 = vpack.c.bf16 %v818, %v818
    %v883 = vpack.c.bf16 %v819, %v819
    %v884 = vpack.c.bf16 %v820, %v820
    %v885 = vpack.c.bf16 %v821, %v821
    %v886 = vpack.c.bf16 %v822, %v822
    %v887 = vpack.c.bf16 %v823, %v823
    %v888 = vpack.c.bf16 %v824, %v824
    %v889 = vpack.c.bf16 %v825, %v825
    %v890 = vpack.c.bf16 %v826, %v826
    %v891 = vpack.c.bf16 %v827, %v827
    %v892 = vpack.c.bf16 %v828, %v828
    %v893 = vpack.c.bf16 %v829, %v829
    %894 = vst [vmem:[%s2] sm:$0xf] %v830
    %895 = vst [vmem:[%s2 + $0x4] sm:$0xf] %v831
    %896 = vst [vmem:[%s2 + $0x8] sm:$0xf] %v832
    %897 = vst [vmem:[%s2 + $0xc] sm:$0xf] %v833
    %898 = vst [vmem:[%s2 + $0x10] sm:$0xf] %v834
    %899 = vst [vmem:[%s2 + $0x14] sm:$0xf] %v835
    %900 = vst [vmem:[%s2 + $0x18] sm:$0xf] %v836
    %901 = vst [vmem:[%s2 + $0x1c] sm:$0xf] %v837
    %902 = vst [vmem:[%s2 + $0x20] sm:$0xf] %v838
    %903 = vst [vmem:[%s2 + $0x24] sm:$0xf] %v839
    %904 = vst [vmem:[%s2 + $0x28] sm:$0xf] %v840
    %905 = vst [vmem:[%s2 + $0x2c] sm:$0xf] %v841
    %906 = vst [vmem:[%s2 + $0x30] sm:$0xf] %v842
    %907 = vst [vmem:[%s2 + $0x34] sm:$0xf] %v843
    %908 = vst [vmem:[%s2 + $0x38] sm:$0xf] %v844
    %909 = vst [vmem:[%s2 + $0x3c] sm:$0xf] %v845
    %910 = vst [vmem:[%s2 + $0x40] sm:$0xf] %v846
    %911 = vst [vmem:[%s2 + $0x44] sm:$0xf] %v847
    %912 = vst [vmem:[%s2 + $0x48] sm:$0xf] %v848
    %913 = vst [vmem:[%s2 + $0x4c] sm:$0xf] %v849
    %914 = vst [vmem:[%s2 + $0x50] sm:$0xf] %v850
    %915 = vst [vmem:[%s2 + $0x54] sm:$0xf] %v851
    %916 = vst [vmem:[%s2 + $0x58] sm:$0xf] %v852
    %917 = vst [vmem:[%s2 + $0x5c] sm:$0xf] %v853
    %918 = vst [vmem:[%s2 + $0x60] sm:$0xf] %v854
    %919 = vst [vmem:[%s2 + $0x64] sm:$0xf] %v855
    %920 = vst [vmem:[%s2 + $0x68] sm:$0xf] %v856
    %921 = vst [vmem:[%s2 + $0x6c] sm:$0xf] %v857
    %922 = vst [vmem:[%s2 + $0x70] sm:$0xf] %v858
    %923 = vst [vmem:[%s2 + $0x74] sm:$0xf] %v859
    %924 = vst [vmem:[%s2 + $0x78] sm:$0xf] %v860
    %925 = vst [vmem:[%s2 + $0x7c] sm:$0xf] %v861
    %926 = vst [vmem:[%s2 + $0x80] sm:$0xf] %v862
    %927 = vst [vmem:[%s2 + $0x84] sm:$0xf] %v863
    %928 = vst [vmem:[%s2 + $0x88] sm:$0xf] %v864
    %929 = vst [vmem:[%s2 + $0x8c] sm:$0xf] %v865
    %930 = vst [vmem:[%s2 + $0x90] sm:$0xf] %v866
    %931 = vst [vmem:[%s2 + $0x94] sm:$0xf] %v867
    %932 = vst [vmem:[%s2 + $0x98] sm:$0xf] %v868
    %933 = vst [vmem:[%s2 + $0x9c] sm:$0xf] %v869
    %934 = vst [vmem:[%s2 + $0xa0] sm:$0xf] %v870
    %935 = vst [vmem:[%s2 + $0xa4] sm:$0xf] %v871
    %936 = vst [vmem:[%s2 + $0xa8] sm:$0xf] %v872
    %937 = vst [vmem:[%s2 + $0xac] sm:$0xf] %v873
    %938 = vst [vmem:[%s2 + $0xb0] sm:$0xf] %v874
    %939 = vst [vmem:[%s2 + $0xb4] sm:$0xf] %v875
    %940 = vst [vmem:[%s2 + $0xb8] sm:$0xf] %v876
    %941 = vst [vmem:[%s2 + $0xbc] sm:$0xf] %v877
    %942 = vst [vmem:[%s2 + $0xc0] sm:$0xf] %v878
    %943 = vst [vmem:[%s2 + $0xc4] sm:$0xf] %v879
    %944 = vst [vmem:[%s2 + $0xc8] sm:$0xf] %v880
    %945 = vst [vmem:[%s2 + $0xcc] sm:$0xf] %v881
    %946 = vst [vmem:[%s2 + $0xd0] sm:$0xf] %v882
    %947 = vst [vmem:[%s2 + $0xd4] sm:$0xf] %v883
    %948 = vst [vmem:[%s2 + $0xd8] sm:$0xf] %v884
    %949 = vst [vmem:[%s2 + $0xdc] sm:$0xf] %v885
    %950 = vst [vmem:[%s2 + $0xe0] sm:$0xf] %v886
    %951 = vst [vmem:[%s2 + $0xe4] sm:$0xf] %v887
    %952 = vst [vmem:[%s2 + $0xe8] sm:$0xf] %v888
    %953 = vst [vmem:[%s2 + $0xec] sm:$0xf] %v889
    %954 = vst [vmem:[%s2 + $0xf0] sm:$0xf] %v890
    %955 = vst [vmem:[%s2 + $0xf4] sm:$0xf] %v891
    %956 = vst [vmem:[%s2 + $0xf8] sm:$0xf] %v892
    %957 = vst [vmem:[%s2 + $0xfc] sm:$0xf] %v893
    %v958 = vadd.f32 %v766, %v767
    %v959 = vadd.f32 %v958, %v768
    %v960 = vadd.f32 %v959, %v769
    %v961 = vadd.f32 %v960, %v770
    %v962 = vadd.f32 %v961, %v771
    %v963 = vadd.f32 %v962, %v772
    %v964 = vadd.f32 %v963, %v773
    %v965 = vadd.f32 %v964, %v774
    %v966 = vadd.f32 %v965, %v775
    %v967 = vadd.f32 %v966, %v776
    %v968 = vadd.f32 %v967, %v777
    %v969 = vadd.f32 %v968, %v778
    %v970 = vadd.f32 %v969, %v779
    %v971 = vadd.f32 %v970, %v780
    %v972 = vadd.f32 %v971, %v781
    %v973 = vadd.f32 %v972, %v782
    %v974 = vadd.f32 %v973, %v783
    %v975 = vadd.f32 %v974, %v784
    %v976 = vadd.f32 %v975, %v785
    %v977 = vadd.f32 %v976, %v786
    %v978 = vadd.f32 %v977, %v787
    %v979 = vadd.f32 %v978, %v788
    %v980 = vadd.f32 %v979, %v789
    %v981 = vadd.f32 %v980, %v790
    %v982 = vadd.f32 %v981, %v791
    %v983 = vadd.f32 %v982, %v792
    %v984 = vadd.f32 %v983, %v793
    %v985 = vadd.f32 %v984, %v794
    %v986 = vadd.f32 %v985, %v795
    %v987 = vadd.f32 %v986, %v796
    %v988 = vadd.f32 %v987, %v797
    %v989 = vadd.f32 %v988, %v798
    %v990 = vadd.f32 %v989, %v799
    %v991 = vadd.f32 %v990, %v800
    %v992 = vadd.f32 %v991, %v801
    %v993 = vadd.f32 %v992, %v802
    %v994 = vadd.f32 %v993, %v803
    %v995 = vadd.f32 %v994, %v804
    %v996 = vadd.f32 %v995, %v805
    %v997 = vadd.f32 %v996, %v806
    %v998 = vadd.f32 %v997, %v807
    %v999 = vadd.f32 %v998, %v808
    %v1000 = vadd.f32 %v999, %v809
    %v1001 = vadd.f32 %v1000, %v810
    %v1002 = vadd.f32 %v1001, %v811
    %v1003 = vadd.f32 %v1002, %v812
    %v1004 = vadd.f32 %v1003, %v813
    %v1005 = vadd.f32 %v1004, %v814
    %v1006 = vadd.f32 %v1005, %v815
    %v1007 = vadd.f32 %v1006, %v816
    %v1008 = vadd.f32 %v1007, %v817
    %v1009 = vadd.f32 %v1008, %v818
    %v1010 = vadd.f32 %v1009, %v819
    %v1011 = vadd.f32 %v1010, %v820
    %v1012 = vadd.f32 %v1011, %v821
    %v1013 = vadd.f32 %v1012, %v822
    %v1014 = vadd.f32 %v1013, %v823
    %v1015 = vadd.f32 %v1014, %v824
    %v1016 = vadd.f32 %v1015, %v825
    %v1017 = vadd.f32 %v1016, %v826
    %v1018 = vadd.f32 %v1017, %v827
    %v1019 = vadd.f32 %v1018, %v828
    %v1020 = vadd.f32 %v1019, %v829
    %v1021 = vrot.slane %v1020, 4
    %v1022 = vadd.f32 %v1020, %v1021
    %v1023 = vrot.slane %v1022, 2
    %v1024 = vadd.f32 %v1022, %v1023
    %v1025 = vrot.slane %v1024, 1
    %v1026 = vadd.f32 %v1024, %v1025
    %1027 = vst [vmem:[%s3] sm:$0x1] %v1026
    %v1028 = vmul.f32 %v766, %v766
    %v1029 = vmul.f32 %v767, %v767
    %v1030 = vmul.f32 %v768, %v768
    %v1031 = vmul.f32 %v769, %v769
    %v1032 = vmul.f32 %v770, %v770
    %v1033 = vmul.f32 %v771, %v771
    %v1034 = vmul.f32 %v772, %v772
    %v1035 = vmul.f32 %v773, %v773
    %v1036 = vmul.f32 %v774, %v774
    %v1037 = vmul.f32 %v775, %v775
    %v1038 = vmul.f32 %v776, %v776
    %v1039 = vmul.f32 %v777, %v777
    %v1040 = vmul.f32 %v778, %v778
    %v1041 = vmul.f32 %v779, %v779
    %v1042 = vmul.f32 %v780, %v780
    %v1043 = vmul.f32 %v781, %v781
    %v1044 = vmul.f32 %v782, %v782
    %v1045 = vmul.f32 %v783, %v783
    %v1046 = vmul.f32 %v784, %v784
    %v1047 = vmul.f32 %v785, %v785
    %v1048 = vmul.f32 %v786, %v786
    %v1049 = vmul.f32 %v787, %v787
    %v1050 = vmul.f32 %v788, %v788
    %v1051 = vmul.f32 %v789, %v789
    %v1052 = vmul.f32 %v790, %v790
    %v1053 = vmul.f32 %v791, %v791
    %v1054 = vmul.f32 %v792, %v792
    %v1055 = vmul.f32 %v793, %v793
    %v1056 = vmul.f32 %v794, %v794
    %v1057 = vmul.f32 %v795, %v795
    %v1058 = vmul.f32 %v796, %v796
    %v1059 = vmul.f32 %v797, %v797
    %v1060 = vmul.f32 %v798, %v798
    %v1061 = vmul.f32 %v799, %v799
    %v1062 = vmul.f32 %v800, %v800
    %v1063 = vmul.f32 %v801, %v801
    %v1064 = vmul.f32 %v802, %v802
    %v1065 = vmul.f32 %v803, %v803
    %v1066 = vmul.f32 %v804, %v804
    %v1067 = vmul.f32 %v805, %v805
    %v1068 = vmul.f32 %v806, %v806
    %v1069 = vmul.f32 %v807, %v807
    %v1070 = vmul.f32 %v808, %v808
    %v1071 = vmul.f32 %v809, %v809
    %v1072 = vmul.f32 %v810, %v810
    %v1073 = vmul.f32 %v811, %v811
    %v1074 = vmul.f32 %v812, %v812
    %v1075 = vmul.f32 %v813, %v813
    %v1076 = vmul.f32 %v814, %v814
    %v1077 = vmul.f32 %v815, %v815
    %v1078 = vmul.f32 %v816, %v816
    %v1079 = vmul.f32 %v817, %v817
    %v1080 = vmul.f32 %v818, %v818
    %v1081 = vmul.f32 %v819, %v819
    %v1082 = vmul.f32 %v820, %v820
    %v1083 = vmul.f32 %v821, %v821
    %v1084 = vmul.f32 %v822, %v822
    %v1085 = vmul.f32 %v823, %v823
    %v1086 = vmul.f32 %v824, %v824
    %v1087 = vmul.f32 %v825, %v825
    %v1088 = vmul.f32 %v826, %v826
    %v1089 = vmul.f32 %v827, %v827
    %v1090 = vmul.f32 %v828, %v828
    %v1091 = vmul.f32 %v829, %v829
    %v1092 = vadd.f32 %v1028, %v1029
    %v1093 = vadd.f32 %v1092, %v1030
    %v1094 = vadd.f32 %v1093, %v1031
    %v1095 = vadd.f32 %v1094, %v1032
    %v1096 = vadd.f32 %v1095, %v1033
    %v1097 = vadd.f32 %v1096, %v1034
    %v1098 = vadd.f32 %v1097, %v1035
    %v1099 = vadd.f32 %v1098, %v1036
    %v1100 = vadd.f32 %v1099, %v1037
    %v1101 = vadd.f32 %v1100, %v1038
    %v1102 = vadd.f32 %v1101, %v1039
    %v1103 = vadd.f32 %v1102, %v1040
    %v1104 = vadd.f32 %v1103, %v1041
    %v1105 = vadd.f32 %v1104, %v1042
    %v1106 = vadd.f32 %v1105, %v1043
    %v1107 = vadd.f32 %v1106, %v1044
    %v1108 = vadd.f32 %v1107, %v1045
    %v1109 = vadd.f32 %v1108, %v1046
    %v1110 = vadd.f32 %v1109, %v1047
    %v1111 = vadd.f32 %v1110, %v1048
    %v1112 = vadd.f32 %v1111, %v1049
    %v1113 = vadd.f32 %v1112, %v1050
    %v1114 = vadd.f32 %v1113, %v1051
    %v1115 = vadd.f32 %v1114, %v1052
    %v1116 = vadd.f32 %v1115, %v1053
    %v1117 = vadd.f32 %v1116, %v1054
    %v1118 = vadd.f32 %v1117, %v1055
    %v1119 = vadd.f32 %v1118, %v1056
    %v1120 = vadd.f32 %v1119, %v1057
    %v1121 = vadd.f32 %v1120, %v1058
    %v1122 = vadd.f32 %v1121, %v1059
    %v1123 = vadd.f32 %v1122, %v1060
    %v1124 = vadd.f32 %v1123, %v1061
    %v1125 = vadd.f32 %v1124, %v1062
    %v1126 = vadd.f32 %v1125, %v1063
    %v1127 = vadd.f32 %v1126, %v1064
    %v1128 = vadd.f32 %v1127, %v1065
    %v1129 = vadd.f32 %v1128, %v1066
    %v1130 = vadd.f32 %v1129, %v1067
    %v1131 = vadd.f32 %v1130, %v1068
    %v1132 = vadd.f32 %v1131, %v1069
    %v1133 = vadd.f32 %v1132, %v1070
    %v1134 = vadd.f32 %v1133, %v1071
    %v1135 = vadd.f32 %v1134, %v1072
    %v1136 = vadd.f32 %v1135, %v1073
    %v1137 = vadd.f32 %v1136, %v1074
    %v1138 = vadd.f32 %v1137, %v1075
    %v1139 = vadd.f32 %v1138, %v1076
    %v1140 = vadd.f32 %v1139, %v1077
    %v1141 = vadd.f32 %v1140, %v1078
    %v1142 = vadd.f32 %v1141, %v1079
    %v1143 = vadd.f32 %v1142, %v1080
    %v1144 = vadd.f32 %v1143, %v1081
    %v1145 = vadd.f32 %v1144, %v1082
    %v1146 = vadd.f32 %v1145, %v1083
    %v1147 = vadd.f32 %v1146, %v1084
    %v1148 = vadd.f32 %v1147, %v1085
    %v1149 = vadd.f32 %v1148, %v1086
    %v1150 = vadd.f32 %v1149, %v1087
    %v1151 = vadd.f32 %v1150, %v1088
    %v1152 = vadd.f32 %v1151, %v1089
    %v1153 = vadd.f32 %v1152, %v1090
    %v1154 = vadd.f32 %v1153, %v1091
    %v1155 = vrot.slane %v1154, 4
    %v1156 = vadd.f32 %v1154, %v1155
    %v1157 = vrot.slane %v1156, 2
    %v1158 = vadd.f32 %v1156, %v1157
    %v1159 = vrot.slane %v1158, 1
    %v1160 = vadd.f32 %v1158, %v1159
    %1161 = vst [vmem:[%s4] sm:$0x1] %v1160
  $region17: #{_lambda_.5} parent=0 // pred_fallthru
    _
  // Predicated region
  $region18: #{_lambda_.5} parent=0 // pred_check
    _
  $region19: #{_lambda_.5} parent=0 // pred_check_branch
    %1163 = sbr.rel (0) target = $region21
  $region20: #{_lambda_.5} parent=0 // pred_region
    _
  $region21: #{_lambda_.5} parent=0 // pred_fallthru
    _
  // Predicated region
  $region22: #{_lambda_.5} parent=0 // pred_check
    _
  $region23: #{_lambda_.5} parent=0 // pred_check_branch
    %1165 = sbr.rel (0) target = $region25
  $region24: #{_lambda_.5} parent=0 // pred_region
    _
  $region25: #{_lambda_.5} parent=0 // pred_fallthru
    _
  // Predicated region
  $region26: #{_lambda_.5} parent=0 // pred_check
    _
  $region27: #{_lambda_.5} parent=0 // pred_check_branch
    %1167 = sbr.rel (0) target = $region29
  $region28: #{_lambda_.5} parent=0 // pred_region
    _
  $region29: #{_lambda_.5} parent=0 // pred_fallthru
    _
  // Predicated region
  $region30: #{_lambda_.5} parent=0 // pred_check
    _
  $region31: #{_lambda_.5} parent=0 // pred_check_branch
    %1169 = sbr.rel (0) target = $region33
  $region32: #{_lambda_.5} parent=0 // pred_region
    _
  $region33: #{_lambda_.5} parent=0 // pred_fallthru
    _
  // Predicated region
  $region34: #{_lambda_.5} parent=0 // pred_check
    _
  $region35: #{_lambda_.5} parent=0 // pred_check_branch
    %1171 = sbr.rel (0) target = $region37
  $region36: #{_lambda_.5} parent=0 // pred_region
    _
  $region37: #{_lambda_.5} parent=0 // pred_fallthru
    _
  // Predicated region
  $region38: #{_lambda_.5} parent=0 // pred_check
    _
  $region39: #{_lambda_.5} parent=0 // pred_check_branch
    %1173 = sbr.rel (0) target = $region41
  $region40: #{_lambda_.5} parent=0 // pred_region
    _
  $region41: #{_lambda_.5} parent=0 // pred_fallthru
    _

// kernel: _lambda_.7
$region0: #{_lambda_.7}
  #allocation0 [shape = 'u32[]', space=smem, size = 0x4, offset = 0x4, fixed_abs, tag = 'smem constant byte address 0x4 - core index']
  #allocation1 [shape = 'u32[72,128]{1,0:T(1,128)}', space=vmem, size = 0x9000, scoped, tag = 'internal scratch']
  #allocation2 [shape = 'f32[128,128]{1,0:T(8,128)}', space=vmem, size = 0x10000, scoped, tag = 'scratch operand']
  %s0 = inlined_call_operand.vmem [shape: bf16[1,128,128], index: 0, kind: input, shape index: {}]
  %s1 = inlined_call_operand.vmem [shape: f32[1,1,128], index: 1, kind: input, shape index: {}]
  %s2 = inlined_call_operand.vmem [shape: f32[1,1,128], index: 2, kind: input, shape index: {}]
  %s3 = inlined_call_operand.vmem [shape: bf16[1,128,128], index: 3, kind: input, shape index: {}]
  %s4 = inlined_call_operand.vmem [shape: f32[128,128], index: 4, kind: output, shape index: {0}]
  %s5 = inlined_call_operand.vmem [shape: f32[1,1,128], index: 5, kind: output, shape index: {1}]
  %s6 = inlined_call_operand.vmem [shape: f32[1,1,128], index: 6, kind: output, shape index: {2}]
  %7 = xla_tuple %s4, %s5, %s6
  %s8 = sld [smem:[#allocation0]]
  $region50: #{_lambda_.7} parent=0
    _
  %s10 = ssub.s32 1, %s8
  %s11 = scalar_select 0, %s10, %s8
  // Predicated region
  $region2: #{_lambda_.7} parent=0 // pred_check
    _
  $region3: #{_lambda_.7} parent=0 // pred_check_branch
    %13 = sbr.rel (0) target = $region5
  $region4: #{_lambda_.7} parent=0 // pred_region
    _
  $region5: #{_lambda_.7} parent=0 // pred_fallthru
    _
  // Predicated region
  $region6: #{_lambda_.7} parent=0 // pred_check
    _
  $region7: #{_lambda_.7} parent=0 // pred_check_branch
    %15 = sbr.rel (0) target = $region9
  $region8: #{_lambda_.7} parent=0 // pred_region
    _
  $region9: #{_lambda_.7} parent=0 // pred_fallthru
    _
  // Predicated region
  $region10: #{_lambda_.7} parent=0 // pred_check
    _
  $region11: #{_lambda_.7} parent=0 // pred_check_branch
    %17 = sbr.rel (0) target = $region13
  $region12: #{_lambda_.7} parent=0 // pred_region
    _
  $region13: #{_lambda_.7} parent=0 // pred_fallthru
    _
  // Predicated region
  $region14: #{_lambda_.7} parent=0 // pred_check
    _
  $region15: #{_lambda_.7} parent=0 // pred_check_branch
    %19 = sbr.rel (0) target = $region17
  $region16: #{_lambda_.7} parent=0 // pred_region
    _
  $region17: #{_lambda_.7} parent=0 // pred_fallthru
    _
  %p20 = scmp.eq.s32.totalorder 0, 0
  // Predicated region
  $region18: #{_lambda_.7} parent=0 // pred_check
    %p21 = pneg %p20
  $region19: #{_lambda_.7} parent=0 // pred_check_branch
    %23 = sbr.rel (%p21) target = $region21
  $region20: #{_lambda_.7} parent=0 // pred_region
    %24 = vst [vmem:[#allocation2] sm:$0xff] 0.0
    %25 = vst [vmem:[#allocation2 + $0x8] sm:$0xff] 0.0
    %26 = vst [vmem:[#allocation2 + $0x10] sm:$0xff] 0.0
    %27 = vst [vmem:[#allocation2 + $0x18] sm:$0xff] 0.0
    %28 = vst [vmem:[#allocation2 + $0x20] sm:$0xff] 0.0
    %29 = vst [vmem:[#allocation2 + $0x28] sm:$0xff] 0.0
    %30 = vst [vmem:[#allocation2 + $0x30] sm:$0xff] 0.0
    %31 = vst [vmem:[#allocation2 + $0x38] sm:$0xff] 0.0
    %32 = vst [vmem:[#allocation2 + $0x40] sm:$0xff] 0.0
    %33 = vst [vmem:[#allocation2 + $0x48] sm:$0xff] 0.0
    %34 = vst [vmem:[#allocation2 + $0x50] sm:$0xff] 0.0
    %35 = vst [vmem:[#allocation2 + $0x58] sm:$0xff] 0.0
    %36 = vst [vmem:[#allocation2 + $0x60] sm:$0xff] 0.0
    %37 = vst [vmem:[#allocation2 + $0x68] sm:$0xff] 0.0
    %38 = vst [vmem:[#allocation2 + $0x70] sm:$0xff] 0.0
    %39 = vst [vmem:[#allocation2 + $0x78] sm:$0xff] 0.0
  $region21: #{_lambda_.7} parent=0 // pred_fallthru
    _
  %v40 = vld [vmem:[%s0] sm:$0xf]
  %v41 = vld [vmem:[%s0 + $0x4] sm:$0xf]
  %v42 = vld [vmem:[%s0 + $0x8] sm:$0xf]
  %v43 = vld [vmem:[%s0 + $0xc] sm:$0xf]
  %v44 = vld [vmem:[%s0 + $0x10] sm:$0xf]
  %v45 = vld [vmem:[%s0 + $0x14] sm:$0xf]
  %v46 = vld [vmem:[%s0 + $0x18] sm:$0xf]
  %v47 = vld [vmem:[%s0 + $0x1c] sm:$0xf]
  %v48 = vld [vmem:[%s0 + $0x20] sm:$0xf]
  %v49 = vld [vmem:[%s0 + $0x24] sm:$0xf]
  %v50 = vld [vmem:[%s0 + $0x28] sm:$0xf]
  %v51 = vld [vmem:[%s0 + $0x2c] sm:$0xf]
  %v52 = vld [vmem:[%s0 + $0x30] sm:$0xf]
  %v53 = vld [vmem:[%s0 + $0x34] sm:$0xf]
  %v54 = vld [vmem:[%s0 + $0x38] sm:$0xf]
  %v55 = vld [vmem:[%s0 + $0x3c] sm:$0xf]
  %v56 = vunpack.c.l.bf16 %v40
  %v57 = vunpack.c.l.bf16 %v41
  %v58 = vunpack.c.l.bf16 %v42
  %v59 = vunpack.c.l.bf16 %v43
  %v60 = vunpack.c.l.bf16 %v44
  %v61 = vunpack.c.l.bf16 %v45
  %v62 = vunpack.c.l.bf16 %v46
  %v63 = vunpack.c.l.bf16 %v47
  %v64 = vunpack.c.l.bf16 %v48
  %v65 = vunpack.c.l.bf16 %v49
  %v66 = vunpack.c.l.bf16 %v50
  %v67 = vunpack.c.l.bf16 %v51
  %v68 = vunpack.c.l.bf16 %v52
  %v69 = vunpack.c.l.bf16 %v53
  %v70 = vunpack.c.l.bf16 %v54
  %v71 = vunpack.c.l.bf16 %v55
  %v72 = vld [vmem:[%s1] sm:$0x1]
  %v74 = vperm.slane %v72, 0
  %v76 = vmul.f32 %v56, %v74
  %v77 = vmul.f32 %v57, %v74
  %v78 = vmul.f32 %v58, %v74
  %v79 = vmul.f32 %v59, %v74
  %v80 = vmul.f32 %v60, %v74
  %v81 = vmul.f32 %v61, %v74
  %v82 = vmul.f32 %v62, %v74
  %v83 = vmul.f32 %v63, %v74
  %v84 = vmul.f32 %v64, %v74
  %v85 = vmul.f32 %v65, %v74
  %v86 = vmul.f32 %v66, %v74
  %v87 = vmul.f32 %v67, %v74
  %v88 = vmul.f32 %v68, %v74
  %v89 = vmul.f32 %v69, %v74
  %v90 = vmul.f32 %v70, %v74
  %v91 = vmul.f32 %v71, %v74
  %v92 = vld [vmem:[%s2] sm:$0x1]
  %v94 = vperm.slane %v92, 0
  %v96 = vadd.f32 %v76, %v94
  %v97 = vadd.f32 %v77, %v94
  %v98 = vadd.f32 %v78, %v94
  %v99 = vadd.f32 %v79, %v94
  %v100 = vadd.f32 %v80, %v94
  %v101 = vadd.f32 %v81, %v94
  %v102 = vadd.f32 %v82, %v94
  %v103 = vadd.f32 %v83, %v94
  %v104 = vadd.f32 %v84, %v94
  %v105 = vadd.f32 %v85, %v94
  %v106 = vadd.f32 %v86, %v94
  %v107 = vadd.f32 %v87, %v94
  %v108 = vadd.f32 %v88, %v94
  %v109 = vadd.f32 %v89, %v94
  %v110 = vadd.f32 %v90, %v94
  %v111 = vadd.f32 %v91, %v94
  %v112 = vmax.f32 %v96, 0.0
  %v113 = vmax.f32 %v97, 0.0
  %v114 = vmax.f32 %v98, 0.0
  %v115 = vmax.f32 %v99, 0.0
  %v116 = vmax.f32 %v100, 0.0
  %v117 = vmax.f32 %v101, 0.0
  %v118 = vmax.f32 %v102, 0.0
  %v119 = vmax.f32 %v103, 0.0
  %v120 = vmax.f32 %v104, 0.0
  %v121 = vmax.f32 %v105, 0.0
  %v122 = vmax.f32 %v106, 0.0
  %v123 = vmax.f32 %v107, 0.0
  %v124 = vmax.f32 %v108, 0.0
  %v125 = vmax.f32 %v109, 0.0
  %v126 = vmax.f32 %v110, 0.0
  %v127 = vmax.f32 %v111, 0.0
  %v128 = vld [vmem:[#allocation2] sm:$0xff]
  %v129 = vld [vmem:[#allocation2 + $0x8] sm:$0xff]
  %v130 = vld [vmem:[#allocation2 + $0x10] sm:$0xff]
  %v131 = vld [vmem:[#allocation2 + $0x18] sm:$0xff]
  %v132 = vld [vmem:[#allocation2 + $0x20] sm:$0xff]
  %v133 = vld [vmem:[#allocation2 + $0x28] sm:$0xff]
  %v134 = vld [vmem:[#allocation2 + $0x30] sm:$0xff]
  %v135 = vld [vmem:[#allocation2 + $0x38] sm:$0xff]
  %v136 = vld [vmem:[#allocation2 + $0x40] sm:$0xff]
  %v137 = vld [vmem:[#allocation2 + $0x48] sm:$0xff]
  %v138 = vld [vmem:[#allocation2 + $0x50] sm:$0xff]
  %v139 = vld [vmem:[#allocation2 + $0x58] sm:$0xff]
  %v140 = vld [vmem:[#allocation2 + $0x60] sm:$0xff]
  %v141 = vld [vmem:[#allocation2 + $0x68] sm:$0xff]
  %v142 = vld [vmem:[#allocation2 + $0x70] sm:$0xff]
  %v143 = vld [vmem:[#allocation2 + $0x78] sm:$0xff]
  %v144 = vpack.c.bf16 %v113, %v112
  %v145 = vpack.c.bf16 %v115, %v114
  %v146 = vpack.c.bf16 %v117, %v116
  %v147 = vpack.c.bf16 %v119, %v118
  %v148 = vpack.c.bf16 %v121, %v120
  %v149 = vpack.c.bf16 %v123, %v122
  %v150 = vpack.c.bf16 %v125, %v124
  %v151 = vpack.c.bf16 %v127, %v126
  %v152 = vld [vmem:[%s3] sm:$0xf]
  %v153 = vld [vmem:[%s3 + $0x4] sm:$0xf]
  %v154 = vld [vmem:[%s3 + $0x8] sm:$0xf]
  %v155 = vld [vmem:[%s3 + $0xc] sm:$0xf]
  %v156 = vld [vmem:[%s3 + $0x10] sm:$0xf]
  %v157 = vld [vmem:[%s3 + $0x14] sm:$0xf]
  %v158 = vld [vmem:[%s3 + $0x18] sm:$0xf]
  %v159 = vld [vmem:[%s3 + $0x1c] sm:$0xf]
  %v160 = vld [vmem:[%s3 + $0x20] sm:$0xf]
  %v161 = vld [vmem:[%s3 + $0x24] sm:$0xf]
  %v162 = vld [vmem:[%s3 + $0x28] sm:$0xf]
  %v163 = vld [vmem:[%s3 + $0x2c] sm:$0xf]
  %v164 = vld [vmem:[%s3 + $0x30] sm:$0xf]
  %v165 = vld [vmem:[%s3 + $0x34] sm:$0xf]
  %v166 = vld [vmem:[%s3 + $0x38] sm:$0xf]
  %v167 = vld [vmem:[%s3 + $0x3c] sm:$0xf]
  %v184 = vunpack.c.l.b16 %v152
  %v185 = vunpack.c.l.b16 %v153
  %v186 = vunpack.c.l.b16 %v154
  %v187 = vunpack.c.l.b16 %v155
  %v188 = vunpack.c.l.b16 %v156
  %v189 = vunpack.c.l.b16 %v157
  %v190 = vunpack.c.l.b16 %v158
  %v191 = vunpack.c.l.b16 %v159
  %v192 = vunpack.c.l.b16 %v160
  %v193 = vunpack.c.l.b16 %v161
  %v194 = vunpack.c.l.b16 %v162
  %v195 = vunpack.c.l.b16 %v163
  %v196 = vunpack.c.l.b16 %v164
  %v197 = vunpack.c.l.b16 %v165
  %v198 = vunpack.c.l.b16 %v166
  %v199 = vunpack.c.l.b16 %v167
  %v200 = vpack.c.b16 %v185, %v184
  %v201 = vpack.c.b16 %v187, %v186
  %v202 = vpack.c.b16 %v189, %v188
  %v203 = vpack.c.b16 %v191, %v190
  %v204 = vpack.c.b16 %v193, %v192
  %v205 = vpack.c.b16 %v195, %v194
  %v206 = vpack.c.b16 %v197, %v196
  %v207 = vpack.c.b16 %v199, %v198
  %216 = vmatpush.bf16.msra.mxu0 %v207
  %217 = vmatpush.bf16.msra.mxu0 %v206
  %218 = vmatpush.bf16.msra.mxu0 %v205
  %219 = vmatpush.bf16.msra.mxu0 %v204
  %220 = vmatpush.bf16.msra.mxu0 %v203
  %221 = vmatpush.bf16.msra.mxu0 %v202
  %222 = vmatpush.bf16.msra.mxu0 %v201
  %223 = vmatpush.bf16.msra.mxu0 %v200
  %224 = vmatmul.bf16.gmra.mxu0 %v144
  %v225 = vpop.f32.mrf.mxu0
  %v226 = vadd.f32 0.0, %v225
  %v227 = vpop.f32.mrf.mxu0
  %v228 = vadd.f32 0.0, %v227
  %229 = vmatmul.bf16.gmra.mxu0 %v145
  %v230 = vpop.f32.mrf.mxu0
  %v231 = vadd.f32 0.0, %v230
  %v232 = vpop.f32.mrf.mxu0
  %v233 = vadd.f32 0.0, %v232
  %234 = vmatmul.bf16.gmra.mxu0 %v146
  %v235 = vpop.f32.mrf.mxu0
  %v236 = vadd.f32 0.0, %v235
  %v237 = vpop.f32.mrf.mxu0
  %v238 = vadd.f32 0.0, %v237
  %239 = vmatmul.bf16.gmra.mxu0 %v147
  %v240 = vpop.f32.mrf.mxu0
  %v241 = vadd.f32 0.0, %v240
  %v242 = vpop.f32.mrf.mxu0
  %v243 = vadd.f32 0.0, %v242
  %244 = vmatmul.bf16.gmra.mxu0 %v148
  %v245 = vpop.f32.mrf.mxu0
  %v246 = vadd.f32 0.0, %v245
  %v247 = vpop.f32.mrf.mxu0
  %v248 = vadd.f32 0.0, %v247
  %249 = vmatmul.bf16.gmra.mxu0 %v149
  %v250 = vpop.f32.mrf.mxu0
  %v251 = vadd.f32 0.0, %v250
  %v252 = vpop.f32.mrf.mxu0
  %v253 = vadd.f32 0.0, %v252
  %254 = vmatmul.bf16.gmra.mxu0 %v150
  %v255 = vpop.f32.mrf.mxu0
  %v256 = vadd.f32 0.0, %v255
  %v257 = vpop.f32.mrf.mxu0
  %v258 = vadd.f32 0.0, %v257
  %259 = vmatmul.bf16.gmra.mxu0 %v151
  %v260 = vpop.f32.mrf.mxu0
  %v261 = vadd.f32 0.0, %v260
  %v262 = vpop.f32.mrf.mxu0
  %v263 = vadd.f32 0.0, %v262
  %264 = vdwg.mxu0
  %v265 = vadd.f32 %v128, %v226
  %v266 = vadd.f32 %v129, %v228
  %v267 = vadd.f32 %v130, %v231
  %v268 = vadd.f32 %v131, %v233
  %v269 = vadd.f32 %v132, %v236
  %v270 = vadd.f32 %v133, %v238
  %v271 = vadd.f32 %v134, %v241
  %v272 = vadd.f32 %v135, %v243
  %v273 = vadd.f32 %v136, %v246
  %v274 = vadd.f32 %v137, %v248
  %v275 = vadd.f32 %v138, %v251
  %v276 = vadd.f32 %v139, %v253
  %v277 = vadd.f32 %v140, %v256
  %v278 = vadd.f32 %v141, %v258
  %v279 = vadd.f32 %v142, %v261
  %v280 = vadd.f32 %v143, %v263
  %281 = vst [vmem:[#allocation2] sm:$0xff] %v265
  %282 = vst [vmem:[#allocation2 + $0x8] sm:$0xff] %v266
  %283 = vst [vmem:[#allocation2 + $0x10] sm:$0xff] %v267
  %284 = vst [vmem:[#allocation2 + $0x18] sm:$0xff] %v268
  %285 = vst [vmem:[#allocation2 + $0x20] sm:$0xff] %v269
  %286 = vst [vmem:[#allocation2 + $0x28] sm:$0xff] %v270
  %287 = vst [vmem:[#allocation2 + $0x30] sm:$0xff] %v271
  %288 = vst [vmem:[#allocation2 + $0x38] sm:$0xff] %v272
  %289 = vst [vmem:[#allocation2 + $0x40] sm:$0xff] %v273
  %290 = vst [vmem:[#allocation2 + $0x48] sm:$0xff] %v274
  %291 = vst [vmem:[#allocation2 + $0x50] sm:$0xff] %v275
  %292 = vst [vmem:[#allocation2 + $0x58] sm:$0xff] %v276
  %293 = vst [vmem:[#allocation2 + $0x60] sm:$0xff] %v277
  %294 = vst [vmem:[#allocation2 + $0x68] sm:$0xff] %v278
  %295 = vst [vmem:[#allocation2 + $0x70] sm:$0xff] %v279
  %296 = vst [vmem:[#allocation2 + $0x78] sm:$0xff] %v280
  // Predicated region
  $region22: #{_lambda_.7} parent=0 // pred_check
    %p297 = pneg %p20
  $region23: #{_lambda_.7} parent=0 // pred_check_branch
    %299 = sbr.rel (%p297) target = $region25
  $region24: #{_lambda_.7} parent=0 // pred_region
    %v300 = vld [vmem:[#allocation2] sm:$0xff]
    %v301 = vld [vmem:[#allocation2 + $0x8] sm:$0xff]
    %v302 = vld [vmem:[#allocation2 + $0x10] sm:$0xff]
    %v303 = vld [vmem:[#allocation2 + $0x18] sm:$0xff]
    %v304 = vld [vmem:[#allocation2 + $0x20] sm:$0xff]
    %v305 = vld [vmem:[#allocation2 + $0x28] sm:$0xff]
    %v306 = vld [vmem:[#allocation2 + $0x30] sm:$0xff]
    %v307 = vld [vmem:[#allocation2 + $0x38] sm:$0xff]
    %v308 = vld [vmem:[#allocation2 + $0x40] sm:$0xff]
    %v309 = vld [vmem:[#allocation2 + $0x48] sm:$0xff]
    %v310 = vld [vmem:[#allocation2 + $0x50] sm:$0xff]
    %v311 = vld [vmem:[#allocation2 + $0x58] sm:$0xff]
    %v312 = vld [vmem:[#allocation2 + $0x60] sm:$0xff]
    %v313 = vld [vmem:[#allocation2 + $0x68] sm:$0xff]
    %v314 = vld [vmem:[#allocation2 + $0x70] sm:$0xff]
    %v315 = vld [vmem:[#allocation2 + $0x78] sm:$0xff]
    %316 = vst [vmem:[%s4] sm:$0xff] %v300
    %317 = vst [vmem:[%s4 + $0x8] sm:$0xff] %v301
    %318 = vst [vmem:[%s4 + $0x10] sm:$0xff] %v302
    %319 = vst [vmem:[%s4 + $0x18] sm:$0xff] %v303
    %320 = vst [vmem:[%s4 + $0x20] sm:$0xff] %v304
    %321 = vst [vmem:[%s4 + $0x28] sm:$0xff] %v305
    %322 = vst [vmem:[%s4 + $0x30] sm:$0xff] %v306
    %323 = vst [vmem:[%s4 + $0x38] sm:$0xff] %v307
    %324 = vst [vmem:[%s4 + $0x40] sm:$0xff] %v308
    %325 = vst [vmem:[%s4 + $0x48] sm:$0xff] %v309
    %326 = vst [vmem:[%s4 + $0x50] sm:$0xff] %v310
    %327 = vst [vmem:[%s4 + $0x58] sm:$0xff] %v311
    %328 = vst [vmem:[%s4 + $0x60] sm:$0xff] %v312
    %329 = vst [vmem:[%s4 + $0x68] sm:$0xff] %v313
    %330 = vst [vmem:[%s4 + $0x70] sm:$0xff] %v314
    %331 = vst [vmem:[%s4 + $0x78] sm:$0xff] %v315
    %v332 = vadd.f32 %v300, %v301
    %v333 = vadd.f32 %v332, %v302
    %v334 = vadd.f32 %v333, %v303
    %v335 = vadd.f32 %v334, %v304
    %v336 = vadd.f32 %v335, %v305
    %v337 = vadd.f32 %v336, %v306
    %v338 = vadd.f32 %v337, %v307
    %v339 = vadd.f32 %v338, %v308
    %v340 = vadd.f32 %v339, %v309
    %v341 = vadd.f32 %v340, %v310
    %v342 = vadd.f32 %v341, %v311
    %v343 = vadd.f32 %v342, %v312
    %v344 = vadd.f32 %v343, %v313
    %v345 = vadd.f32 %v344, %v314
    %v346 = vadd.f32 %v345, %v315
    %v347 = vrot.slane %v346, 4
    %v348 = vadd.f32 %v346, %v347
    %v349 = vrot.slane %v348, 2
    %v350 = vadd.f32 %v348, %v349
    %v351 = vrot.slane %v350, 1
    %v352 = vadd.f32 %v350, %v351
    %353 = vst [vmem:[%s5] sm:$0x1] %v352
    %v354 = vmul.f32 %v300, %v300
    %v355 = vmul.f32 %v301, %v301
    %v356 = vmul.f32 %v302, %v302
    %v357 = vmul.f32 %v303, %v303
    %v358 = vmul.f32 %v304, %v304
    %v359 = vmul.f32 %v305, %v305
    %v360 = vmul.f32 %v306, %v306
    %v361 = vmul.f32 %v307, %v307
    %v362 = vmul.f32 %v308, %v308
    %v363 = vmul.f32 %v309, %v309
    %v364 = vmul.f32 %v310, %v310
    %v365 = vmul.f32 %v311, %v311
    %v366 = vmul.f32 %v312, %v312
    %v367 = vmul.f32 %v313, %v313
    %v368 = vmul.f32 %v314, %v314
    %v369 = vmul.f32 %v315, %v315
    %v370 = vadd.f32 %v354, %v355
    %v371 = vadd.f32 %v370, %v356
    %v372 = vadd.f32 %v371, %v357
    %v373 = vadd.f32 %v372, %v358
    %v374 = vadd.f32 %v373, %v359
    %v375 = vadd.f32 %v374, %v360
    %v376 = vadd.f32 %v375, %v361
    %v377 = vadd.f32 %v376, %v362
    %v378 = vadd.f32 %v377, %v363
    %v379 = vadd.f32 %v378, %v364
    %v380 = vadd.f32 %v379, %v365
    %v381 = vadd.f32 %v380, %v366
    %v382 = vadd.f32 %v381, %v367
    %v383 = vadd.f32 %v382, %v368
    %v384 = vadd.f32 %v383, %v369
    %v385 = vrot.slane %v384, 4
    %v386 = vadd.f32 %v384, %v385
    %v387 = vrot.slane %v386, 2
    %v388 = vadd.f32 %v386, %v387
    %v389 = vrot.slane %v388, 1
    %v390 = vadd.f32 %v388, %v389
    %391 = vst [vmem:[%s6] sm:$0x1] %v390
  $region25: #{_lambda_.7} parent=0 // pred_fallthru
    _
  // Predicated region
  $region26: #{_lambda_.7} parent=0 // pred_check
    _
  $region27: #{_lambda_.7} parent=0 // pred_check_branch
    %393 = sbr.rel (0) target = $region29
  $region28: #{_lambda_.7} parent=0 // pred_region
    _
  $region29: #{_lambda_.7} parent=0 // pred_fallthru
    _
  // Predicated region
  $region30: #{_lambda_.7} parent=0 // pred_check
    _
  $region31: #{_lambda_.7} parent=0 // pred_check_branch
    %395 = sbr.rel (0) target = $region33
  $region32: #{_lambda_.7} parent=0 // pred_region
    _
  $region33: #{_lambda_.7} parent=0 // pred_fallthru
    _
  // Predicated region
  $region34: #{_lambda_.7} parent=0 // pred_check
    _
  $region35: #{_lambda_.7} parent=0 // pred_check_branch
    %397 = sbr.rel (0) target = $region37
  $region36: #{_lambda_.7} parent=0 // pred_region
    _
  $region37: #{_lambda_.7} parent=0 // pred_fallthru
    _
  // Predicated region
  $region38: #{_lambda_.7} parent=0 // pred_check
    _
  $region39: #{_lambda_.7} parent=0 // pred_check_branch
    %399 = sbr.rel (0) target = $region41
  $region40: #{_lambda_.7} parent=0 // pred_region
    _
  $region41: #{_lambda_.7} parent=0 // pred_fallthru
    _
  // Predicated region
  $region42: #{_lambda_.7} parent=0 // pred_check
    _
  $region43: #{_lambda_.7} parent=0 // pred_check_branch
    %401 = sbr.rel (0) target = $region45
  $region44: #{_lambda_.7} parent=0 // pred_region
    _
  $region45: #{_lambda_.7} parent=0 // pred_fallthru
    _
  // Predicated region
  $region46: #{_lambda_.7} parent=0 // pred_check
    _
  $region47: #{_lambda_.7} parent=0 // pred_check_branch
    %403 = sbr.rel (0) target = $region49
  $region48: #{_lambda_.7} parent=0 // pred_region
    _
  $region49: #{_lambda_.7} parent=0 // pred_fallthru
    _

// kernel: _lambda_.8
$region0: #{_lambda_.8}
  #allocation0 [shape = 'u32[]', space=smem, size = 0x4, offset = 0x4, fixed_abs, tag = 'smem constant byte address 0x4 - core index']
  #allocation1 [shape = 'u32[72,128]{1,0:T(1,128)}', space=vmem, size = 0x9000, scoped, tag = 'internal scratch']
  #allocation2 [shape = 'f32[128,128]{1,0:T(8,128)}', space=vmem, size = 0x10000, scoped, tag = 'scratch operand']
  %s0 = inlined_call_operand.vmem [shape: bf16[1,128,128], index: 0, kind: input, shape index: {}]
  %s1 = inlined_call_operand.vmem [shape: bf16[1,128,128], index: 1, kind: input, shape index: {}]
  %s2 = inlined_call_operand.vmem [shape: f32[128,128], index: 2, kind: output, shape index: {0}]
  %s3 = inlined_call_operand.vmem [shape: f32[1,1,128], index: 3, kind: output, shape index: {1}]
  %s4 = inlined_call_operand.vmem [shape: f32[1,1,128], index: 4, kind: output, shape index: {2}]
  %5 = xla_tuple %s2, %s3, %s4
  %s6 = sld [smem:[#allocation0]]
  $region42: #{_lambda_.8} parent=0
    _
  %s8 = ssub.s32 1, %s6
  %s9 = scalar_select 0, %s8, %s6
  // Predicated region
  $region2: #{_lambda_.8} parent=0 // pred_check
    _
  $region3: #{_lambda_.8} parent=0 // pred_check_branch
    %11 = sbr.rel (0) target = $region5
  $region4: #{_lambda_.8} parent=0 // pred_region
    _
  $region5: #{_lambda_.8} parent=0 // pred_fallthru
    _
  // Predicated region
  $region6: #{_lambda_.8} parent=0 // pred_check
    _
  $region7: #{_lambda_.8} parent=0 // pred_check_branch
    %13 = sbr.rel (0) target = $region9
  $region8: #{_lambda_.8} parent=0 // pred_region
    _
  $region9: #{_lambda_.8} parent=0 // pred_fallthru
    _
  %p14 = scmp.eq.s32.totalorder 0, 0
  // Predicated region
  $region10: #{_lambda_.8} parent=0 // pred_check
    %p15 = pneg %p14
  $region11: #{_lambda_.8} parent=0 // pred_check_branch
    %17 = sbr.rel (%p15) target = $region13
  $region12: #{_lambda_.8} parent=0 // pred_region
    %18 = vst [vmem:[#allocation2] sm:$0xff] 0.0
    %19 = vst [vmem:[#allocation2 + $0x8] sm:$0xff] 0.0
    %20 = vst [vmem:[#allocation2 + $0x10] sm:$0xff] 0.0
    %21 = vst [vmem:[#allocation2 + $0x18] sm:$0xff] 0.0
    %22 = vst [vmem:[#allocation2 + $0x20] sm:$0xff] 0.0
    %23 = vst [vmem:[#allocation2 + $0x28] sm:$0xff] 0.0
    %24 = vst [vmem:[#allocation2 + $0x30] sm:$0xff] 0.0
    %25 = vst [vmem:[#allocation2 + $0x38] sm:$0xff] 0.0
    %26 = vst [vmem:[#allocation2 + $0x40] sm:$0xff] 0.0
    %27 = vst [vmem:[#allocation2 + $0x48] sm:$0xff] 0.0
    %28 = vst [vmem:[#allocation2 + $0x50] sm:$0xff] 0.0
    %29 = vst [vmem:[#allocation2 + $0x58] sm:$0xff] 0.0
    %30 = vst [vmem:[#allocation2 + $0x60] sm:$0xff] 0.0
    %31 = vst [vmem:[#allocation2 + $0x68] sm:$0xff] 0.0
    %32 = vst [vmem:[#allocation2 + $0x70] sm:$0xff] 0.0
    %33 = vst [vmem:[#allocation2 + $0x78] sm:$0xff] 0.0
  $region13: #{_lambda_.8} parent=0 // pred_fallthru
    _
  %v34 = vld [vmem:[%s0] sm:$0xf]
  %v35 = vld [vmem:[%s0 + $0x4] sm:$0xf]
  %v36 = vld [vmem:[%s0 + $0x8] sm:$0xf]
  %v37 = vld [vmem:[%s0 + $0xc] sm:$0xf]
  %v38 = vld [vmem:[%s0 + $0x10] sm:$0xf]
  %v39 = vld [vmem:[%s0 + $0x14] sm:$0xf]
  %v40 = vld [vmem:[%s0 + $0x18] sm:$0xf]
  %v41 = vld [vmem:[%s0 + $0x1c] sm:$0xf]
  %v42 = vld [vmem:[%s0 + $0x20] sm:$0xf]
  %v43 = vld [vmem:[%s0 + $0x24] sm:$0xf]
  %v44 = vld [vmem:[%s0 + $0x28] sm:$0xf]
  %v45 = vld [vmem:[%s0 + $0x2c] sm:$0xf]
  %v46 = vld [vmem:[%s0 + $0x30] sm:$0xf]
  %v47 = vld [vmem:[%s0 + $0x34] sm:$0xf]
  %v48 = vld [vmem:[%s0 + $0x38] sm:$0xf]
  %v49 = vld [vmem:[%s0 + $0x3c] sm:$0xf]
  %v50 = vld [vmem:[#allocation2] sm:$0xff]
  %v51 = vld [vmem:[#allocation2 + $0x8] sm:$0xff]
  %v52 = vld [vmem:[#allocation2 + $0x10] sm:$0xff]
  %v53 = vld [vmem:[#allocation2 + $0x18] sm:$0xff]
  %v54 = vld [vmem:[#allocation2 + $0x20] sm:$0xff]
  %v55 = vld [vmem:[#allocation2 + $0x28] sm:$0xff]
  %v56 = vld [vmem:[#allocation2 + $0x30] sm:$0xff]
  %v57 = vld [vmem:[#allocation2 + $0x38] sm:$0xff]
  %v58 = vld [vmem:[#allocation2 + $0x40] sm:$0xff]
  %v59 = vld [vmem:[#allocation2 + $0x48] sm:$0xff]
  %v60 = vld [vmem:[#allocation2 + $0x50] sm:$0xff]
  %v61 = vld [vmem:[#allocation2 + $0x58] sm:$0xff]
  %v62 = vld [vmem:[#allocation2 + $0x60] sm:$0xff]
  %v63 = vld [vmem:[#allocation2 + $0x68] sm:$0xff]
  %v64 = vld [vmem:[#allocation2 + $0x70] sm:$0xff]
  %v65 = vld [vmem:[#allocation2 + $0x78] sm:$0xff]
  %v66 = vld [vmem:[%s1] sm:$0xf]
  %v67 = vld [vmem:[%s1 + $0x4] sm:$0xf]
  %v68 = vld [vmem:[%s1 + $0x8] sm:$0xf]
  %v69 = vld [vmem:[%s1 + $0xc] sm:$0xf]
  %v70 = vld [vmem:[%s1 + $0x10] sm:$0xf]
  %v71 = vld [vmem:[%s1 + $0x14] sm:$0xf]
  %v72 = vld [vmem:[%s1 + $0x18] sm:$0xf]
  %v73 = vld [vmem:[%s1 + $0x1c] sm:$0xf]
  %v74 = vld [vmem:[%s1 + $0x20] sm:$0xf]
  %v75 = vld [vmem:[%s1 + $0x24] sm:$0xf]
  %v76 = vld [vmem:[%s1 + $0x28] sm:$0xf]
  %v77 = vld [vmem:[%s1 + $0x2c] sm:$0xf]
  %v78 = vld [vmem:[%s1 + $0x30] sm:$0xf]
  %v79 = vld [vmem:[%s1 + $0x34] sm:$0xf]
  %v80 = vld [vmem:[%s1 + $0x38] sm:$0xf]
  %v81 = vld [vmem:[%s1 + $0x3c] sm:$0xf]
  %v98 = vunpack.c.l.b16 %v34
  %v99 = vunpack.c.l.b16 %v35
  %v100 = vunpack.c.l.b16 %v36
  %v101 = vunpack.c.l.b16 %v37
  %v102 = vunpack.c.l.b16 %v38
  %v103 = vunpack.c.l.b16 %v39
  %v104 = vunpack.c.l.b16 %v40
  %v105 = vunpack.c.l.b16 %v41
  %v106 = vunpack.c.l.b16 %v42
  %v107 = vunpack.c.l.b16 %v43
  %v108 = vunpack.c.l.b16 %v44
  %v109 = vunpack.c.l.b16 %v45
  %v110 = vunpack.c.l.b16 %v46
  %v111 = vunpack.c.l.b16 %v47
  %v112 = vunpack.c.l.b16 %v48
  %v113 = vunpack.c.l.b16 %v49
  %v114 = vpack.c.b16 %v99, %v98
  %v115 = vpack.c.b16 %v101, %v100
  %v116 = vpack.c.b16 %v103, %v102
  %v117 = vpack.c.b16 %v105, %v104
  %v118 = vpack.c.b16 %v107, %v106
  %v119 = vpack.c.b16 %v109, %v108
  %v120 = vpack.c.b16 %v111, %v110
  %v121 = vpack.c.b16 %v113, %v112
  %v146 = vunpack.c.l.b16 %v66
  %v147 = vunpack.c.l.b16 %v67
  %v148 = vunpack.c.l.b16 %v68
  %v149 = vunpack.c.l.b16 %v69
  %v150 = vunpack.c.l.b16 %v70
  %v151 = vunpack.c.l.b16 %v71
  %v152 = vunpack.c.l.b16 %v72
  %v153 = vunpack.c.l.b16 %v73
  %v154 = vunpack.c.l.b16 %v74
  %v155 = vunpack.c.l.b16 %v75
  %v156 = vunpack.c.l.b16 %v76
  %v157 = vunpack.c.l.b16 %v77
  %v158 = vunpack.c.l.b16 %v78
  %v159 = vunpack.c.l.b16 %v79
  %v160 = vunpack.c.l.b16 %v80
  %v161 = vunpack.c.l.b16 %v81
  %v162 = vpack.c.b16 %v147, %v146
  %v163 = vpack.c.b16 %v149, %v148
  %v164 = vpack.c.b16 %v151, %v150
  %v165 = vpack.c.b16 %v153, %v152
  %v166 = vpack.c.b16 %v155, %v154
  %v167 = vpack.c.b16 %v157, %v156
  %v168 = vpack.c.b16 %v159, %v158
  %v169 = vpack.c.b16 %v161, %v160
  %178 = vmatpush.bf16.msra.mxu0 %v169
  %179 = vmatpush.bf16.msra.mxu0 %v168
  %180 = vmatpush.bf16.msra.mxu0 %v167
  %181 = vmatpush.bf16.msra.mxu0 %v166
  %182 = vmatpush.bf16.msra.mxu0 %v165
  %183 = vmatpush.bf16.msra.mxu0 %v164
  %184 = vmatpush.bf16.msra.mxu0 %v163
  %185 = vmatpush.bf16.msra.mxu0 %v162
  %186 = vmatmul.bf16.gmra.mxu0 %v114
  %v187 = vpop.f32.mrf.mxu0
  %v188 = vadd.f32 0.0, %v187
  %v189 = vpop.f32.mrf.mxu0
  %v190 = vadd.f32 0.0, %v189
  %191 = vmatmul.bf16.gmra.mxu0 %v115
  %v192 = vpop.f32.mrf.mxu0
  %v193 = vadd.f32 0.0, %v192
  %v194 = vpop.f32.mrf.mxu0
  %v195 = vadd.f32 0.0, %v194
  %196 = vmatmul.bf16.gmra.mxu0 %v116
  %v197 = vpop.f32.mrf.mxu0
  %v198 = vadd.f32 0.0, %v197
  %v199 = vpop.f32.mrf.mxu0
  %v200 = vadd.f32 0.0, %v199
  %201 = vmatmul.bf16.gmra.mxu0 %v117
  %v202 = vpop.f32.mrf.mxu0
  %v203 = vadd.f32 0.0, %v202
  %v204 = vpop.f32.mrf.mxu0
  %v205 = vadd.f32 0.0, %v204
  %206 = vmatmul.bf16.gmra.mxu0 %v118
  %v207 = vpop.f32.mrf.mxu0
  %v208 = vadd.f32 0.0, %v207
  %v209 = vpop.f32.mrf.mxu0
  %v210 = vadd.f32 0.0, %v209
  %211 = vmatmul.bf16.gmra.mxu0 %v119
  %v212 = vpop.f32.mrf.mxu0
  %v213 = vadd.f32 0.0, %v212
  %v214 = vpop.f32.mrf.mxu0
  %v215 = vadd.f32 0.0, %v214
  %216 = vmatmul.bf16.gmra.mxu0 %v120
  %v217 = vpop.f32.mrf.mxu0
  %v218 = vadd.f32 0.0, %v217
  %v219 = vpop.f32.mrf.mxu0
  %v220 = vadd.f32 0.0, %v219
  %221 = vmatmul.bf16.gmra.mxu0 %v121
  %v222 = vpop.f32.mrf.mxu0
  %v223 = vadd.f32 0.0, %v222
  %v224 = vpop.f32.mrf.mxu0
  %v225 = vadd.f32 0.0, %v224
  %226 = vdwg.mxu0
  %v227 = vadd.f32 %v50, %v188
  %v228 = vadd.f32 %v51, %v190
  %v229 = vadd.f32 %v52, %v193
  %v230 = vadd.f32 %v53, %v195
  %v231 = vadd.f32 %v54, %v198
  %v232 = vadd.f32 %v55, %v200
  %v233 = vadd.f32 %v56, %v203
  %v234 = vadd.f32 %v57, %v205
  %v235 = vadd.f32 %v58, %v208
  %v236 = vadd.f32 %v59, %v210
  %v237 = vadd.f32 %v60, %v213
  %v238 = vadd.f32 %v61, %v215
  %v239 = vadd.f32 %v62, %v218
  %v240 = vadd.f32 %v63, %v220
  %v241 = vadd.f32 %v64, %v223
  %v242 = vadd.f32 %v65, %v225
  %243 = vst [vmem:[#allocation2] sm:$0xff] %v227
  %244 = vst [vmem:[#allocation2 + $0x8] sm:$0xff] %v228
  %245 = vst [vmem:[#allocation2 + $0x10] sm:$0xff] %v229
  %246 = vst [vmem:[#allocation2 + $0x18] sm:$0xff] %v230
  %247 = vst [vmem:[#allocation2 + $0x20] sm:$0xff] %v231
  %248 = vst [vmem:[#allocation2 + $0x28] sm:$0xff] %v232
  %249 = vst [vmem:[#allocation2 + $0x30] sm:$0xff] %v233
  %250 = vst [vmem:[#allocation2 + $0x38] sm:$0xff] %v234
  %251 = vst [vmem:[#allocation2 + $0x40] sm:$0xff] %v235
  %252 = vst [vmem:[#allocation2 + $0x48] sm:$0xff] %v236
  %253 = vst [vmem:[#allocation2 + $0x50] sm:$0xff] %v237
  %254 = vst [vmem:[#allocation2 + $0x58] sm:$0xff] %v238
  %255 = vst [vmem:[#allocation2 + $0x60] sm:$0xff] %v239
  %256 = vst [vmem:[#allocation2 + $0x68] sm:$0xff] %v240
  %257 = vst [vmem:[#allocation2 + $0x70] sm:$0xff] %v241
  %258 = vst [vmem:[#allocation2 + $0x78] sm:$0xff] %v242
  // Predicated region
  $region14: #{_lambda_.8} parent=0 // pred_check
    %p259 = pneg %p14
  $region15: #{_lambda_.8} parent=0 // pred_check_branch
    %261 = sbr.rel (%p259) target = $region17
  $region16: #{_lambda_.8} parent=0 // pred_region
    %v262 = vld [vmem:[#allocation2] sm:$0xff]
    %v263 = vld [vmem:[#allocation2 + $0x8] sm:$0xff]
    %v264 = vld [vmem:[#allocation2 + $0x10] sm:$0xff]
    %v265 = vld [vmem:[#allocation2 + $0x18] sm:$0xff]
    %v266 = vld [vmem:[#allocation2 + $0x20] sm:$0xff]
    %v267 = vld [vmem:[#allocation2 + $0x28] sm:$0xff]
    %v268 = vld [vmem:[#allocation2 + $0x30] sm:$0xff]
    %v269 = vld [vmem:[#allocation2 + $0x38] sm:$0xff]
    %v270 = vld [vmem:[#allocation2 + $0x40] sm:$0xff]
    %v271 = vld [vmem:[#allocation2 + $0x48] sm:$0xff]
    %v272 = vld [vmem:[#allocation2 + $0x50] sm:$0xff]
    %v273 = vld [vmem:[#allocation2 + $0x58] sm:$0xff]
    %v274 = vld [vmem:[#allocation2 + $0x60] sm:$0xff]
    %v275 = vld [vmem:[#allocation2 + $0x68] sm:$0xff]
    %v276 = vld [vmem:[#allocation2 + $0x70] sm:$0xff]
    %v277 = vld [vmem:[#allocation2 + $0x78] sm:$0xff]
    %278 = vst [vmem:[%s2] sm:$0xff] %v262
    %279 = vst [vmem:[%s2 + $0x8] sm:$0xff] %v263
    %280 = vst [vmem:[%s2 + $0x10] sm:$0xff] %v264
    %281 = vst [vmem:[%s2 + $0x18] sm:$0xff] %v265
    %282 = vst [vmem:[%s2 + $0x20] sm:$0xff] %v266
    %283 = vst [vmem:[%s2 + $0x28] sm:$0xff] %v267
    %284 = vst [vmem:[%s2 + $0x30] sm:$0xff] %v268
    %285 = vst [vmem:[%s2 + $0x38] sm:$0xff] %v269
    %286 = vst [vmem:[%s2 + $0x40] sm:$0xff] %v270
    %287 = vst [vmem:[%s2 + $0x48] sm:$0xff] %v271
    %288 = vst [vmem:[%s2 + $0x50] sm:$0xff] %v272
    %289 = vst [vmem:[%s2 + $0x58] sm:$0xff] %v273
    %290 = vst [vmem:[%s2 + $0x60] sm:$0xff] %v274
    %291 = vst [vmem:[%s2 + $0x68] sm:$0xff] %v275
    %292 = vst [vmem:[%s2 + $0x70] sm:$0xff] %v276
    %293 = vst [vmem:[%s2 + $0x78] sm:$0xff] %v277
    %v294 = vadd.f32 %v262, %v263
    %v295 = vadd.f32 %v294, %v264
    %v296 = vadd.f32 %v295, %v265
    %v297 = vadd.f32 %v296, %v266
    %v298 = vadd.f32 %v297, %v267
    %v299 = vadd.f32 %v298, %v268
    %v300 = vadd.f32 %v299, %v269
    %v301 = vadd.f32 %v300, %v270
    %v302 = vadd.f32 %v301, %v271
    %v303 = vadd.f32 %v302, %v272
    %v304 = vadd.f32 %v303, %v273
    %v305 = vadd.f32 %v304, %v274
    %v306 = vadd.f32 %v305, %v275
    %v307 = vadd.f32 %v306, %v276
    %v308 = vadd.f32 %v307, %v277
    %v309 = vrot.slane %v308, 4
    %v310 = vadd.f32 %v308, %v309
    %v311 = vrot.slane %v310, 2
    %v312 = vadd.f32 %v310, %v311
    %v313 = vrot.slane %v312, 1
    %v314 = vadd.f32 %v312, %v313
    %315 = vst [vmem:[%s3] sm:$0x1] %v314
    %v316 = vmul.f32 %v262, %v262
    %v317 = vmul.f32 %v263, %v263
    %v318 = vmul.f32 %v264, %v264
    %v319 = vmul.f32 %v265, %v265
    %v320 = vmul.f32 %v266, %v266
    %v321 = vmul.f32 %v267, %v267
    %v322 = vmul.f32 %v268, %v268
    %v323 = vmul.f32 %v269, %v269
    %v324 = vmul.f32 %v270, %v270
    %v325 = vmul.f32 %v271, %v271
    %v326 = vmul.f32 %v272, %v272
    %v327 = vmul.f32 %v273, %v273
    %v328 = vmul.f32 %v274, %v274
    %v329 = vmul.f32 %v275, %v275
    %v330 = vmul.f32 %v276, %v276
    %v331 = vmul.f32 %v277, %v277
    %v332 = vadd.f32 %v316, %v317
    %v333 = vadd.f32 %v332, %v318
    %v334 = vadd.f32 %v333, %v319
    %v335 = vadd.f32 %v334, %v320
    %v336 = vadd.f32 %v335, %v321
    %v337 = vadd.f32 %v336, %v322
    %v338 = vadd.f32 %v337, %v323
    %v339 = vadd.f32 %v338, %v324
    %v340 = vadd.f32 %v339, %v325
    %v341 = vadd.f32 %v340, %v326
    %v342 = vadd.f32 %v341, %v327
    %v343 = vadd.f32 %v342, %v328
    %v344 = vadd.f32 %v343, %v329
    %v345 = vadd.f32 %v344, %v330
    %v346 = vadd.f32 %v345, %v331
    %v347 = vrot.slane %v346, 4
    %v348 = vadd.f32 %v346, %v347
    %v349 = vrot.slane %v348, 2
    %v350 = vadd.f32 %v348, %v349
    %v351 = vrot.slane %v350, 1
    %v352 = vadd.f32 %v350, %v351
    %353 = vst [vmem:[%s4] sm:$0x1] %v352
  $region17: #{_lambda_.8} parent=0 // pred_fallthru
    _
  // Predicated region
  $region18: #{_lambda_.8} parent=0 // pred_check
    _
  $region19: #{_lambda_.8} parent=0 // pred_check_branch
    %355 = sbr.rel (0) target = $region21
  $region20: #{_lambda_.8} parent=0 // pred_region
    _
  $region21: #{_lambda_.8} parent=0 // pred_fallthru
    _
  // Predicated region
  $region22: #{_lambda_.8} parent=0 // pred_check
    _
  $region23: #{_lambda_.8} parent=0 // pred_check_branch
    %357 = sbr.rel (0) target = $region25
  $region24: #{_lambda_.8} parent=0 // pred_region
    _
  $region25: #{_lambda_.8} parent=0 // pred_fallthru
    _
  // Predicated region
  $region26: #{_lambda_.8} parent=0 // pred_check
    _
  $region27: #{_lambda_.8} parent=0 // pred_check_branch
    %359 = sbr.rel (0) target = $region29
  $region28: #{_lambda_.8} parent=0 // pred_region
    _
  $region29: #{_lambda_.8} parent=0 // pred_fallthru
    _
  // Predicated region
  $region30: #{_lambda_.8} parent=0 // pred_check
    _
  $region31: #{_lambda_.8} parent=0 // pred_check_branch
    %361 = sbr.rel (0) target = $region33
  $region32: #{_lambda_.8} parent=0 // pred_region
    _
  $region33: #{_lambda_.8} parent=0 // pred_fallthru
    _
  // Predicated region
  $region34: #{_lambda_.8} parent=0 // pred_check
    _
  $region35: #{_lambda_.8} parent=0 // pred_check_branch
    %363 = sbr.rel (0) target = $region37
  $region36: #{_lambda_.8} parent=0 // pred_region
    _
  $region37: #{_lambda_.8} parent=0 // pred_fallthru
    _
  // Predicated region
  $region38: #{_lambda_.8} parent=0 // pred_check
    _
  $region39: #{_lambda_.8} parent=0 // pred_check_branch
    %365 = sbr.rel (0) target = $region41
  $region40: #{_lambda_.8} parent=0 // pred_region
    _
  $region41: #{_lambda_.8} parent=0 // pred_fallthru
    _

// kernel: _lambda_.9
$region0: #{_lambda_.9}
  #allocation0 [shape = 'u32[]', space=smem, size = 0x4, offset = 0x4, fixed_abs, tag = 'smem constant byte address 0x4 - core index']
  #allocation1 [shape = 'u32[72,128]{1,0:T(1,128)}', space=vmem, size = 0x9000, scoped, tag = 'internal scratch']
  %s0 = inlined_call_operand.vmem [shape: f32[1,128,128], index: 0, kind: input, shape index: {}]
  %s1 = inlined_call_operand.vmem [shape: f32[1,1,128], index: 1, kind: input, shape index: {}]
  %s2 = inlined_call_operand.vmem [shape: f32[1,1,128], index: 2, kind: input, shape index: {}]
  %s3 = inlined_call_operand.vmem [shape: f32[1,128,128], index: 3, kind: input, shape index: {}]
  %s4 = inlined_call_operand.vmem [shape: f32[1,1,128], index: 4, kind: input, shape index: {}]
  %s5 = inlined_call_operand.vmem [shape: f32[1,1,128], index: 5, kind: input, shape index: {}]
  %s6 = inlined_call_operand.hbm [shape: f32[1,128,128], index: 6, kind: output, shape index: {}]
  %s7 = sld [smem:[#allocation0]]
  $region34: #{_lambda_.9} parent=0
    _
  %s9 = ssub.s32 1, %s7
  %s10 = scalar_select 0, %s9, %s7
  $region1: #{_lambda_.9} parent=0
    #allocation2 [shape = 'u8[65536]{0}', space=vmem, size = 0x10000, scoped, tag = 'output window, operand 0, single buffered']
    #allocation3 [shape = 's32[1]{0}', space=sflag, size = 0x4, scoped, tag = 'scoped memory for _lambda_.9']
    %11 = vsyncpa [#allocation3], 0
    // Predicated region
    $region2: #{_lambda_.9} parent=1 // pred_check
      _
    $region3: #{_lambda_.9} parent=1 // pred_check_branch
      %13 = sbr.rel (0) target = $region5
    $region4: #{_lambda_.9} parent=1 // pred_region
      _
    $region5: #{_lambda_.9} parent=1 // pred_fallthru
      _
    // Predicated region
    $region6: #{_lambda_.9} parent=1 // pred_check
      _
    $region7: #{_lambda_.9} parent=1 // pred_check_branch
      %15 = sbr.rel (0) target = $region9
    $region8: #{_lambda_.9} parent=1 // pred_region
      _
    $region9: #{_lambda_.9} parent=1 // pred_fallthru
      _
    // Predicated region
    $region10: #{_lambda_.9} parent=1 // pred_check
      _
    $region11: #{_lambda_.9} parent=1 // pred_check_branch
      %17 = sbr.rel (0) target = $region13
    $region12: #{_lambda_.9} parent=1 // pred_region
      _
    $region13: #{_lambda_.9} parent=1 // pred_fallthru
      _
    // Predicated region
    $region14: #{_lambda_.9} parent=1 // pred_check
      _
    $region15: #{_lambda_.9} parent=1 // pred_check_branch
      %19 = sbr.rel (0) target = $region17
    $region16: #{_lambda_.9} parent=1 // pred_region
      _
    $region17: #{_lambda_.9} parent=1 // pred_fallthru
      _
    // Predicated region
    $region18: #{_lambda_.9} parent=1 // pred_check
      _
    $region19: #{_lambda_.9} parent=1 // pred_check_branch
      %21 = sbr.rel (0) target = $region21
    $region20: #{_lambda_.9} parent=1 // pred_region
      _
    $region21: #{_lambda_.9} parent=1 // pred_fallthru
      _
    // Predicated region
    $region22: #{_lambda_.9} parent=1 // pred_check
      _
    $region23: #{_lambda_.9} parent=1 // pred_check_branch
      %23 = sbr.rel (0) target = $region25
    $region24: #{_lambda_.9} parent=1 // pred_region
      _
    $region25: #{_lambda_.9} parent=1 // pred_fallthru
      _
    %v24 = vld [vmem:[%s0] sm:$0xff]
    %v25 = vld [vmem:[%s0 + $0x8] sm:$0xff]
    %v26 = vld [vmem:[%s0 + $0x10] sm:$0xff]
    %v27 = vld [vmem:[%s0 + $0x18] sm:$0xff]
    %v28 = vld [vmem:[%s0 + $0x20] sm:$0xff]
    %v29 = vld [vmem:[%s0 + $0x28] sm:$0xff]
    %v30 = vld [vmem:[%s0 + $0x30] sm:$0xff]
    %v31 = vld [vmem:[%s0 + $0x38] sm:$0xff]
    %v32 = vld [vmem:[%s0 + $0x40] sm:$0xff]
    %v33 = vld [vmem:[%s0 + $0x48] sm:$0xff]
    %v34 = vld [vmem:[%s0 + $0x50] sm:$0xff]
    %v35 = vld [vmem:[%s0 + $0x58] sm:$0xff]
    %v36 = vld [vmem:[%s0 + $0x60] sm:$0xff]
    %v37 = vld [vmem:[%s0 + $0x68] sm:$0xff]
    %v38 = vld [vmem:[%s0 + $0x70] sm:$0xff]
    %v39 = vld [vmem:[%s0 + $0x78] sm:$0xff]
    %v40 = vld [vmem:[%s1] sm:$0x1]
    %v42 = vperm.slane %v40, 0
    %v44 = vmul.f32 %v24, %v42
    %v45 = vmul.f32 %v25, %v42
    %v46 = vmul.f32 %v26, %v42
    %v47 = vmul.f32 %v27, %v42
    %v48 = vmul.f32 %v28, %v42
    %v49 = vmul.f32 %v29, %v42
    %v50 = vmul.f32 %v30, %v42
    %v51 = vmul.f32 %v31, %v42
    %v52 = vmul.f32 %v32, %v42
    %v53 = vmul.f32 %v33, %v42
    %v54 = vmul.f32 %v34, %v42
    %v55 = vmul.f32 %v35, %v42
    %v56 = vmul.f32 %v36, %v42
    %v57 = vmul.f32 %v37, %v42
    %v58 = vmul.f32 %v38, %v42
    %v59 = vmul.f32 %v39, %v42
    %v60 = vld [vmem:[%s2] sm:$0x1]
    %v62 = vperm.slane %v60, 0
    %v64 = vadd.f32 %v44, %v62
    %v65 = vadd.f32 %v45, %v62
    %v66 = vadd.f32 %v46, %v62
    %v67 = vadd.f32 %v47, %v62
    %v68 = vadd.f32 %v48, %v62
    %v69 = vadd.f32 %v49, %v62
    %v70 = vadd.f32 %v50, %v62
    %v71 = vadd.f32 %v51, %v62
    %v72 = vadd.f32 %v52, %v62
    %v73 = vadd.f32 %v53, %v62
    %v74 = vadd.f32 %v54, %v62
    %v75 = vadd.f32 %v55, %v62
    %v76 = vadd.f32 %v56, %v62
    %v77 = vadd.f32 %v57, %v62
    %v78 = vadd.f32 %v58, %v62
    %v79 = vadd.f32 %v59, %v62
    %v80 = vld [vmem:[%s3] sm:$0xff]
    %v81 = vld [vmem:[%s3 + $0x8] sm:$0xff]
    %v82 = vld [vmem:[%s3 + $0x10] sm:$0xff]
    %v83 = vld [vmem:[%s3 + $0x18] sm:$0xff]
    %v84 = vld [vmem:[%s3 + $0x20] sm:$0xff]
    %v85 = vld [vmem:[%s3 + $0x28] sm:$0xff]
    %v86 = vld [vmem:[%s3 + $0x30] sm:$0xff]
    %v87 = vld [vmem:[%s3 + $0x38] sm:$0xff]
    %v88 = vld [vmem:[%s3 + $0x40] sm:$0xff]
    %v89 = vld [vmem:[%s3 + $0x48] sm:$0xff]
    %v90 = vld [vmem:[%s3 + $0x50] sm:$0xff]
    %v91 = vld [vmem:[%s3 + $0x58] sm:$0xff]
    %v92 = vld [vmem:[%s3 + $0x60] sm:$0xff]
    %v93 = vld [vmem:[%s3 + $0x68] sm:$0xff]
    %v94 = vld [vmem:[%s3 + $0x70] sm:$0xff]
    %v95 = vld [vmem:[%s3 + $0x78] sm:$0xff]
    %v96 = vld [vmem:[%s4] sm:$0x1]
    %v98 = vperm.slane %v96, 0
    %v100 = vmul.f32 %v80, %v98
    %v101 = vmul.f32 %v81, %v98
    %v102 = vmul.f32 %v82, %v98
    %v103 = vmul.f32 %v83, %v98
    %v104 = vmul.f32 %v84, %v98
    %v105 = vmul.f32 %v85, %v98
    %v106 = vmul.f32 %v86, %v98
    %v107 = vmul.f32 %v87, %v98
    %v108 = vmul.f32 %v88, %v98
    %v109 = vmul.f32 %v89, %v98
    %v110 = vmul.f32 %v90, %v98
    %v111 = vmul.f32 %v91, %v98
    %v112 = vmul.f32 %v92, %v98
    %v113 = vmul.f32 %v93, %v98
    %v114 = vmul.f32 %v94, %v98
    %v115 = vmul.f32 %v95, %v98
    %v116 = vld [vmem:[%s5] sm:$0x1]
    %v118 = vperm.slane %v116, 0
    %v120 = vadd.f32 %v100, %v118
    %v121 = vadd.f32 %v101, %v118
    %v122 = vadd.f32 %v102, %v118
    %v123 = vadd.f32 %v103, %v118
    %v124 = vadd.f32 %v104, %v118
    %v125 = vadd.f32 %v105, %v118
    %v126 = vadd.f32 %v106, %v118
    %v127 = vadd.f32 %v107, %v118
    %v128 = vadd.f32 %v108, %v118
    %v129 = vadd.f32 %v109, %v118
    %v130 = vadd.f32 %v110, %v118
    %v131 = vadd.f32 %v111, %v118
    %v132 = vadd.f32 %v112, %v118
    %v133 = vadd.f32 %v113, %v118
    %v134 = vadd.f32 %v114, %v118
    %v135 = vadd.f32 %v115, %v118
    %v136 = vadd.f32 %v64, %v120
    %v137 = vadd.f32 %v65, %v121
    %v138 = vadd.f32 %v66, %v122
    %v139 = vadd.f32 %v67, %v123
    %v140 = vadd.f32 %v68, %v124
    %v141 = vadd.f32 %v69, %v125
    %v142 = vadd.f32 %v70, %v126
    %v143 = vadd.f32 %v71, %v127
    %v144 = vadd.f32 %v72, %v128
    %v145 = vadd.f32 %v73, %v129
    %v146 = vadd.f32 %v74, %v130
    %v147 = vadd.f32 %v75, %v131
    %v148 = vadd.f32 %v76, %v132
    %v149 = vadd.f32 %v77, %v133
    %v150 = vadd.f32 %v78, %v134
    %v151 = vadd.f32 %v79, %v135
    %v152 = vmax.f32 %v136, 0.0
    %v153 = vmax.f32 %v137, 0.0
    %v154 = vmax.f32 %v138, 0.0
    %v155 = vmax.f32 %v139, 0.0
    %v156 = vmax.f32 %v140, 0.0
    %v157 = vmax.f32 %v141, 0.0
    %v158 = vmax.f32 %v142, 0.0
    %v159 = vmax.f32 %v143, 0.0
    %v160 = vmax.f32 %v144, 0.0
    %v161 = vmax.f32 %v145, 0.0
    %v162 = vmax.f32 %v146, 0.0
    %v163 = vmax.f32 %v147, 0.0
    %v164 = vmax.f32 %v148, 0.0
    %v165 = vmax.f32 %v149, 0.0
    %v166 = vmax.f32 %v150, 0.0
    %v167 = vmax.f32 %v151, 0.0
    %168 = vst [vmem:[#allocation2] sm:$0xff] %v152
    %169 = vst [vmem:[#allocation2 + $0x8] sm:$0xff] %v153
    %170 = vst [vmem:[#allocation2 + $0x10] sm:$0xff] %v154
    %171 = vst [vmem:[#allocation2 + $0x18] sm:$0xff] %v155
    %172 = vst [vmem:[#allocation2 + $0x20] sm:$0xff] %v156
    %173 = vst [vmem:[#allocation2 + $0x28] sm:$0xff] %v157
    %174 = vst [vmem:[#allocation2 + $0x30] sm:$0xff] %v158
    %175 = vst [vmem:[#allocation2 + $0x38] sm:$0xff] %v159
    %176 = vst [vmem:[#allocation2 + $0x40] sm:$0xff] %v160
    %177 = vst [vmem:[#allocation2 + $0x48] sm:$0xff] %v161
    %178 = vst [vmem:[#allocation2 + $0x50] sm:$0xff] %v162
    %179 = vst [vmem:[#allocation2 + $0x58] sm:$0xff] %v163
    %180 = vst [vmem:[#allocation2 + $0x60] sm:$0xff] %v164
    %181 = vst [vmem:[#allocation2 + $0x68] sm:$0xff] %v165
    %182 = vst [vmem:[#allocation2 + $0x70] sm:$0xff] %v166
    %183 = vst [vmem:[#allocation2 + $0x78] sm:$0xff] %v167
    // Predicated region
    $region26: #{_lambda_.9} parent=1 // pred_check
      _
    $region27: #{_lambda_.9} parent=1 // pred_check_branch
      %185 = sbr.rel (0) target = $region29
    $region28: #{_lambda_.9} parent=1 // pred_region
      %187 = vsyncadd [#allocation3], 0
      %s188 = sshll.u32 [#allocation2], 4
      %s189 = int_to_ptr.vmem [resolvable:$true] %s188
      %s190 = sshll.u32 %s6, 4
      %s191 = int_to_ptr.hbm [resolvable:$true] %s190
      %196 = dma.vmem_to_hbm [thread:$0]  %s189, 2048, %s191, [#allocation3], 128, 128, 8
    $region29: #{_lambda_.9} parent=1 // pred_fallthru
      _
    // Predicated region
    $region30: #{_lambda_.9} parent=1 // pred_check
      _
    $region31: #{_lambda_.9} parent=1 // pred_check_branch
      %198 = sbr.rel (0) target = $region33
    $region32: #{_lambda_.9} parent=1 // pred_region
      %200 = dma.done [#allocation3], 2048
    $region33: #{_lambda_.9} parent=1 // pred_fallthru
      _
    %201 = vsyncpa [#allocation3], 1

// kernel: _lambda_.6
$region0: #{_lambda_.6}
  #allocation0 [shape = 'u32[]', space=smem, size = 0x4, offset = 0x4, fixed_abs, tag = 'smem constant byte address 0x4 - core index']
  #allocation1 [shape = 'u32[72,128]{1,0:T(1,128)}', space=vmem, size = 0x9000, scoped, tag = 'internal scratch']
  #allocation2 [shape = 'f32[64,128]{1,0:T(8,128)}', space=vmem, size = 0x8000, scoped, tag = 'scratch operand']
  %s0 = inlined_call_operand.vmem [shape: bf16[1,4,2,9,9,128], index: 0, kind: input, shape index: {}]
  %s1 = inlined_call_operand.vmem [shape: f32[4,1,9,9,128], index: 1, kind: input, shape index: {}]
  %s2 = inlined_call_operand.vmem [shape: f32[1,1,1,1,1,128], index: 2, kind: input, shape index: {}]
  %s3 = inlined_call_operand.vmem [shape: f32[1,1,1,1,1,128], index: 3, kind: input, shape index: {}]
  %s4 = inlined_call_operand.vmem [shape: bf16[1,3,3,128,128], index: 4, kind: input, shape index: {}]
  %s5 = inlined_call_operand.vmem [shape: bf16[1,128,128], index: 5, kind: output, shape index: {0}]
  %s6 = inlined_call_operand.vmem [shape: f32[1,2,1,128], index: 6, kind: output, shape index: {1}]
  %s7 = inlined_call_operand.vmem [shape: f32[1,2,1,128], index: 7, kind: output, shape index: {2}]
  %8 = xla_tuple %s5, %s6, %s7
  %s9 = sld [smem:[#allocation0]]
  $region110: #{_lambda_.6} parent=0
    _
  %s11 = ssub.s32 1, %s9
  %s12 = scalar_select 0, %s11, %s9
  $region1: #{_lambda_.6} parent=0
    #allocation3 [shape = 'u8[294912]{0}', space=vmem, size = 0x48000, scoped, tag = 'input window, operand 0']
    loop: start=0, step=1, limit=4
    $region2: #{_lambda_.6} parent=1 // loop_pre_header
      _
    $region3: #{_lambda_.6} parent=1 // loop_header
      %s14 = sphi 0, %s18
      %p15 = scmp.ge.s32.totalorder %s14, 4
      %s21 = sphi 0, %s33
      %s22 = sphi 0, %s29
      %s23 = sphi 0, %s21
      %s24 = sphi 0, %s22
      %s25 = sphi 0, %s23
      %s26 = sphi 0, %s24
      %s38 = sphi 0, %s40
      %s41 = sphi 0, %s38
      %s42 = sphi 0, %s41
      %s58 = sphi 0, %s42
      %s62 = sphi 0, %s62
      %s64 = sphi 0, %s62
      %s65 = sphi 0, %s64
      %s79 = sphi 0, %s65
      %s85 = sphi 0, %s87
      %s88 = sphi 0, %s85
      %s89 = sphi 0, %s88
      %s105 = sphi 0, %s89
      %s111 = sphi 0, %s113
      %s114 = sphi 0, %s111
      %s115 = sphi 0, %s114
      %s131 = sphi 0, %s115
      %s137 = sphi 0, %s139
      %s140 = sphi 0, %s137
      %s141 = sphi 0, %s140
      %s157 = sphi 0, %s141
      %s165 = sphi 0, %s167
      %s168 = sphi 0, %s165
      %s169 = sphi 0, %s168
      %s185 = sphi 0, %s169
      %s193 = sphi 0, %s195
      %s196 = sphi 0, %s193
      %s197 = sphi 0, %s196
      %s213 = sphi 0, %s197
      %s221 = sphi 0, %s223
      %s224 = sphi 0, %s221
      %s225 = sphi 0, %s224
      %s241 = sphi 0, %s225
    $region4: #{_lambda_.6} parent=1 // loop_header_branch
      %17 = sbr.rel (%p15) target = $region8
    $region5: #{_lambda_.6} parent=1 // loop_body
      %s19 = ssub.s32 %s14, 1
      %s20 = ssub.s32 %s14, 2
      %s27 = sadd.s32 1, %s22
      %p28 = scmp.ge.s32.totalorder %s27, 2
      %s29 = scalar_select %p28, 0, %s27
      %s30 = sadd.s32 1, %s21
      %s31 = scalar_select %p28, %s30, %s21
      %p32 = scmp.ge.s32.totalorder %s31, 1
      %s33 = scalar_select %p32, 0, %s31
      %s34 = ssub.s32 %s21, %s33
      %s35 = ssub.s32 %s22, %s29
      %s36 = sor.u32 %s34, %s35
      %p37 = scmp.eq.s32.totalorder %s36, 0
      %s39 = sadd.s32 %s38, 1
      %s40 = scalar_select %p37, %s38, %s39
      %p43 = pneg %p37
      %p44 = scmp.eq.s32.totalorder %s14, 1
      %p45 = por %p43, %p44
      %p46 = scmp.ne.s32.totalorder %s38, %s41
      %p47 = scmp.eq.s32.totalorder %s14, 0
      %p48 = por %p46, %p47
      %p49 = scmp.ne.s32.totalorder %s38, %s41
      %p50 = scmp.eq.s32.totalorder %s19, 1
      %p51 = por %p49, %p50
      %p52 = scmp.ne.s32.totalorder %s41, %s42
      %p53 = scmp.eq.s32.totalorder %s19, 0
      %p54 = por %p52, %p53
      %p55 = scmp.ne.s32.totalorder %s41, %s42
      %p56 = scmp.eq.s32.totalorder %s20, 1
      %p57 = por %p55, %p56
      %p59 = scmp.ne.s32.totalorder %s42, %s58
      %p60 = scmp.eq.s32.totalorder %s20, 0
      %p61 = por %p59, %p60
      %s63 = sadd.s32 %s62, 1
      %p66 = scmp.eq.s32.totalorder %s14, 1
      %p67 = scmp.ne.s32.totalorder %s62, %s64
      %p68 = scmp.eq.s32.totalorder %s14, 0
      %p69 = por %p67, %p68
      %p70 = scmp.ne.s32.totalorder %s62, %s64
      %p71 = scmp.eq.s32.totalorder %s19, 1
      %p72 = por %p70, %p71
      %p73 = scmp.ne.s32.totalorder %s64, %s65
      %p74 = scmp.eq.s32.totalorder %s19, 0
      %p75 = por %p73, %p74
      %p76 = scmp.ne.s32.totalorder %s64, %s65
      %p77 = scmp.eq.s32.totalorder %s20, 1
      %p78 = por %p76, %p77
      %p80 = scmp.ne.s32.totalorder %s65, %s79
      %p81 = scmp.eq.s32.totalorder %s20, 0
      %p82 = por %p80, %p81
      %s83 = ssub.s32 %s21, %s33
      %p84 = scmp.eq.s32.totalorder %s83, 0
      %s86 = sadd.s32 %s85, 1
      %s87 = scalar_select %p84, %s85, %s86
      %p90 = pneg %p84
      %p91 = scmp.eq.s32.totalorder %s14, 1
      %p92 = por %p90, %p91
      %p93 = scmp.ne.s32.totalorder %s85, %s88
      %p94 = scmp.eq.s32.totalorder %s14, 0
      %p95 = por %p93, %p94
      %p96 = scmp.ne.s32.totalorder %s85, %s88
      %p97 = scmp.eq.s32.totalorder %s19, 1
      %p98 = por %p96, %p97
      %p99 = scmp.ne.s32.totalorder %s88, %s89
      %p100 = scmp.eq.s32.totalorder %s19, 0
      %p101 = por %p99, %p100
      %p102 = scmp.ne.s32.totalorder %s88, %s89
      %p103 = scmp.eq.s32.totalorder %s20, 1
      %p104 = por %p102, %p103
      %p106 = scmp.ne.s32.totalorder %s89, %s105
      %p107 = scmp.eq.s32.totalorder %s20, 0
      %p108 = por %p106, %p107
      %s109 = ssub.s32 %s21, %s33
      %p110 = scmp.eq.s32.totalorder %s109, 0
      %s112 = sadd.s32 %s111, 1
      %s113 = scalar_select %p110, %s111, %s112
      %p116 = pneg %p110
      %p117 = scmp.eq.s32.totalorder %s14, 1
      %p118 = por %p116, %p117
      %p119 = scmp.ne.s32.totalorder %s111, %s114
      %p120 = scmp.eq.s32.totalorder %s14, 0
      %p121 = por %p119, %p120
      %p122 = scmp.ne.s32.totalorder %s111, %s114
      %p123 = scmp.eq.s32.totalorder %s19, 1
      %p124 = por %p122, %p123
      %p125 = scmp.ne.s32.totalorder %s114, %s115
      %p126 = scmp.eq.s32.totalorder %s19, 0
      %p127 = por %p125, %p126
      %p128 = scmp.ne.s32.totalorder %s114, %s115
      %p129 = scmp.eq.s32.totalorder %s20, 1
      %p130 = por %p128, %p129
      %p132 = scmp.ne.s32.totalorder %s115, %s131
      %p133 = scmp.eq.s32.totalorder %s20, 0
      %p134 = por %p132, %p133
      %s135 = ssub.s32 %s21, %s33
      %p136 = scmp.eq.s32.totalorder %s135, 0
      %s138 = sadd.s32 %s137, 1
      %s139 = scalar_select %p136, %s137, %s138
      %p142 = pneg %p136
      %p143 = scmp.eq.s32.totalorder %s14, 1
      %p144 = por %p142, %p143
      %p145 = scmp.ne.s32.totalorder %s137, %s140
      %p146 = scmp.eq.s32.totalorder %s14, 0
      %p147 = por %p145, %p146
      %p148 = scmp.ne.s32.totalorder %s137, %s140
      %p149 = scmp.eq.s32.totalorder %s19, 1
      %p150 = por %p148, %p149
      %p151 = scmp.ne.s32.totalorder %s140, %s141
      %p152 = scmp.eq.s32.totalorder %s19, 0
      %p153 = por %p151, %p152
      %p154 = scmp.ne.s32.totalorder %s140, %s141
      %p155 = scmp.eq.s32.totalorder %s20, 1
      %p156 = por %p154, %p155
      %p158 = scmp.ne.s32.totalorder %s141, %s157
      %p159 = scmp.eq.s32.totalorder %s20, 0
      %p160 = por %p158, %p159
      %s161 = ssub.s32 %s21, %s33
      %s162 = ssub.s32 %s22, %s29
      %s163 = sor.u32 %s161, %s162
      %p164 = scmp.eq.s32.totalorder %s163, 0
      %s166 = sadd.s32 %s165, 1
      %s167 = scalar_select %p164, %s165, %s166
      %p170 = pneg %p164
      %p171 = scmp.eq.s32.totalorder %s14, 1
      %p172 = por %p170, %p171
      %p173 = scmp.ne.s32.totalorder %s165, %s168
      %p174 = scmp.eq.s32.totalorder %s14, 0
      %p175 = por %p173, %p174
      %p176 = scmp.ne.s32.totalorder %s165, %s168
      %p177 = scmp.eq.s32.totalorder %s19, 1
      %p178 = por %p176, %p177
      %p179 = scmp.ne.s32.totalorder %s168, %s169
      %p180 = scmp.eq.s32.totalorder %s19, 0
      %p181 = por %p179, %p180
      %p182 = scmp.ne.s32.totalorder %s168, %s169
      %p183 = scmp.eq.s32.totalorder %s20, 1
      %p184 = por %p182, %p183
      %p186 = scmp.ne.s32.totalorder %s169, %s185
      %p187 = scmp.eq.s32.totalorder %s20, 0
      %p188 = por %p186, %p187
      %s189 = ssub.s32 %s21, %s33
      %s190 = ssub.s32 %s22, %s29
      %s191 = sor.u32 %s189, %s190
      %p192 = scmp.eq.s32.totalorder %s191, 0
      %s194 = sadd.s32 %s193, 1
      %s195 = scalar_select %p192, %s193, %s194
      %p198 = pneg %p192
      %p199 = scmp.eq.s32.totalorder %s14, 1
      %p200 = por %p198, %p199
      %p201 = scmp.ne.s32.totalorder %s193, %s196
      %p202 = scmp.eq.s32.totalorder %s14, 0
      %p203 = por %p201, %p202
      %p204 = scmp.ne.s32.totalorder %s193, %s196
      %p205 = scmp.eq.s32.totalorder %s19, 1
      %p206 = por %p204, %p205
      %p207 = scmp.ne.s32.totalorder %s196, %s197
      %p208 = scmp.eq.s32.totalorder %s19, 0
      %p209 = por %p207, %p208
      %p210 = scmp.ne.s32.totalorder %s196, %s197
      %p211 = scmp.eq.s32.totalorder %s20, 1
      %p212 = por %p210, %p211
      %p214 = scmp.ne.s32.totalorder %s197, %s213
      %p215 = scmp.eq.s32.totalorder %s20, 0
      %p216 = por %p214, %p215
      %s217 = ssub.s32 %s21, %s33
      %s218 = ssub.s32 %s22, %s29
      %s219 = sor.u32 %s217, %s218
      %p220 = scmp.eq.s32.totalorder %s219, 0
      %s222 = sadd.s32 %s221, 1
      %s223 = scalar_select %p220, %s221, %s222
      %p226 = pneg %p220
      %p227 = scmp.eq.s32.totalorder %s14, 1
      %p228 = por %p226, %p227
      %p229 = scmp.ne.s32.totalorder %s221, %s224
      %p230 = scmp.eq.s32.totalorder %s14, 0
      %p231 = por %p229, %p230
      %p232 = scmp.ne.s32.totalorder %s221, %s224
      %p233 = scmp.eq.s32.totalorder %s19, 1
      %p234 = por %p232, %p233
      %p235 = scmp.ne.s32.totalorder %s224, %s225
      %p236 = scmp.eq.s32.totalorder %s19, 0
      %p237 = por %p235, %p236
      %p238 = scmp.ne.s32.totalorder %s224, %s225
      %p239 = scmp.eq.s32.totalorder %s20, 1
      %p240 = por %p238, %p239
      %p242 = scmp.ne.s32.totalorder %s225, %s241
      %p243 = scmp.eq.s32.totalorder %s20, 0
      %p244 = por %p242, %p243
      %p245 = scmp.le.s32.totalorder 1, %s14
      %p246 = scmp.lt.s32.totalorder %s14, 3
      %p247 = pnand %p245, %p246
      %p248 = pneg %p247
      // Predicated region
      $region9: #{_lambda_.6} parent=5 // pred_check
        _
      $region10: #{_lambda_.6} parent=5 // pred_check_branch
        %250 = sbr.rel (%p247) target = $region12
      $region11: #{_lambda_.6} parent=5 // pred_region
        %s251 = ssub.s32 %s14, 1
        // Predicated region
        $region13: #{_lambda_.6} parent=11 // pred_check
          %p252 = pneg %p75
        $region14: #{_lambda_.6} parent=11 // pred_check_branch
          %254 = sbr.rel (%p252) target = $region16
        $region15: #{_lambda_.6} parent=11 // pred_region
          _
        $region16: #{_lambda_.6} parent=11 // pred_fallthru
          _
        // Predicated region
        $region17: #{_lambda_.6} parent=11 // pred_check
          %p255 = pneg %p101
        $region18: #{_lambda_.6} parent=11 // pred_check_branch
          %257 = sbr.rel (%p255) target = $region20
        $region19: #{_lambda_.6} parent=11 // pred_region
          %p258 = scmp.lt.s32.totalorder %s23, 0
          %s259 = scalar_select %p258, %s23, 0
          %s260 = scalar_lea.vmem %s2, %s259
        $region20: #{_lambda_.6} parent=11 // pred_fallthru
          _
        // Predicated region
        $region21: #{_lambda_.6} parent=11 // pred_check
          %p261 = pneg %p127
        $region22: #{_lambda_.6} parent=11 // pred_check_branch
          %263 = sbr.rel (%p261) target = $region24
        $region23: #{_lambda_.6} parent=11 // pred_region
          %p264 = scmp.lt.s32.totalorder %s23, 0
          %s265 = scalar_select %p264, %s23, 0
          %s266 = scalar_lea.vmem %s3, %s265
        $region24: #{_lambda_.6} parent=11 // pred_fallthru
          _
        // Predicated region
        $region25: #{_lambda_.6} parent=11 // pred_check
          %p267 = pneg %p153
        $region26: #{_lambda_.6} parent=11 // pred_check_branch
          %269 = sbr.rel (%p267) target = $region28
        $region27: #{_lambda_.6} parent=11 // pred_region
          %p270 = scmp.lt.s32.totalorder %s23, 0
          %s271 = scalar_select %p270, %s23, 0
          %s272 = smul.addr %s271, 144
          %s273 = smul.addr %s272, 4
          %s274 = scalar_lea.vmem %s4, %s273
        $region28: #{_lambda_.6} parent=11 // pred_fallthru
          _
      $region12: #{_lambda_.6} parent=5 // pred_fallthru
        _
      %p275 = scmp.lt.s32.totalorder %s14, 2
      // Predicated region
      $region29: #{_lambda_.6} parent=5 // pred_check
        %p276 = pneg %p275
      $region30: #{_lambda_.6} parent=5 // pred_check_branch
        %278 = sbr.rel (%p276) target = $region32
      $region31: #{_lambda_.6} parent=5 // pred_region
        // Predicated region
        $region33: #{_lambda_.6} parent=31 // pred_check
          %p279 = pneg %p48
        $region34: #{_lambda_.6} parent=31 // pred_check_branch
          %281 = sbr.rel (%p279) target = $region36
        $region35: #{_lambda_.6} parent=31 // pred_region
          %s282 = sand.u32 %s38, 1
          %s283 = sand.u32 %s38, 1
          %s284 = smul.addr %s283, 288
          %s285 = scalar_lea.vmem [#allocation3], %s284
          %s286 = smul.addr %s22, 18
          %s287 = smul.addr %s21, 144
          %s288 = sadd.s32 %s286, %s287
          %s289 = smul.addr %s288, 4
          %s290 = scalar_lea.vmem %s0, %s289
          // Predicated region
          $region37: #{_lambda_.6} parent=35 // pred_check
            _
          $region38: #{_lambda_.6} parent=35 // pred_check_branch
            %292 = sbr.rel (0) target = $region40
          $region39: #{_lambda_.6} parent=35 // pred_region
            // Predicated region
            $region41: #{_lambda_.6} parent=39 // pred_check
              _
            $region42: #{_lambda_.6} parent=39 // pred_check_branch
              %294 = sbr.rel target = $region44
            $region43: #{_lambda_.6} parent=39 // pred_region
              // Predicated region
              $region56: #{_lambda_.6} parent=43 // pred_check
                _
              $region57: #{_lambda_.6} parent=43 // pred_check_branch
                %452 = sbr.rel (0) target = $region59
              $region58: #{_lambda_.6} parent=43 // pred_region
                loop: start=0, step=1, limit=1
                $region60: #{_lambda_.6} parent=58 // loop_pre_header
                  _
                $region61: #{_lambda_.6} parent=58 // loop_header
                  %s454 = sphi 0, %s458
                  %p455 = scmp.ge.s32.totalorder %s454, 1
                  %s459 = sphi %s290, %s290
                  %s460 = sphi %s285, %s285
                $region62: #{_lambda_.6} parent=58 // loop_header_branch
                  %457 = sbr.rel (%p455) target = $region66
                $region63: #{_lambda_.6} parent=58 // loop_body
                  _
                $region64: #{_lambda_.6} parent=58 // loop_footer
                  %s458 = sadd.s32 1, %s454
                $region65: #{_lambda_.6} parent=58 // loop_footer_branch
                  %453 = sbr.rel target = $region61
                $region66: #{_lambda_.6} parent=58 // loop_exit
                  _
                %s462 = ssub.s32 16, 1
                loop: start=0, step=1, limit=1
                $region67: #{_lambda_.6} parent=58 // loop_pre_header
                  _
                $region68: #{_lambda_.6} parent=58 // loop_header
                  %s464 = sphi 0, %s468
                  %p465 = scmp.ge.s32.totalorder %s464, 1
                  %s469 = sphi %s290, %s290
                  %s470 = sphi %s285, %s285
                $region69: #{_lambda_.6} parent=58 // loop_header_branch
                  %467 = sbr.rel (%p465) target = $region73
                $region70: #{_lambda_.6} parent=58 // loop_body
                  %v471 = vld [vmem:[%s469] sm:%s462]
                  %472 = vst [vmem:[%s470] sm:%s462] %v471
                  %v473 = vld [vmem:[%s469 + $0x4] sm:%s462]
                  %474 = vst [vmem:[%s470 + $0x4] sm:%s462] %v473
                  %v475 = vld [vmem:[%s469 + $0x8] sm:%s462]
                  %476 = vst [vmem:[%s470 + $0x8] sm:%s462] %v475
                  %v477 = vld [vmem:[%s469 + $0xc] sm:%s462]
                  %478 = vst [vmem:[%s470 + $0xc] sm:%s462] %v477
                  %v479 = vld [vmem:[%s469 + $0x10] sm:%s462]
                  %480 = vst [vmem:[%s470 + $0x10] sm:%s462] %v479
                  %v481 = vld [vmem:[%s469 + $0x14] sm:%s462]
                  %482 = vst [vmem:[%s470 + $0x14] sm:%s462] %v481
                  %v483 = vld [vmem:[%s469 + $0x18] sm:%s462]
                  %484 = vst [vmem:[%s470 + $0x18] sm:%s462] %v483
                  %v485 = vld [vmem:[%s469 + $0x1c] sm:%s462]
                  %486 = vst [vmem:[%s470 + $0x1c] sm:%s462] %v485
                  %v487 = vld [vmem:[%s469 + $0x20] sm:%s462]
                  %488 = vst [vmem:[%s470 + $0x20] sm:%s462] %v487
                  %v489 = vld [vmem:[%s469 + $0x24] sm:%s462]
                  %490 = vst [vmem:[%s470 + $0x24] sm:%s462] %v489
                  %v491 = vld [vmem:[%s469 + $0x28] sm:%s462]
                  %492 = vst [vmem:[%s470 + $0x28] sm:%s462] %v491
                  %v493 = vld [vmem:[%s469 + $0x2c] sm:%s462]
                  %494 = vst [vmem:[%s470 + $0x2c] sm:%s462] %v493
                  %v495 = vld [vmem:[%s469 + $0x30] sm:%s462]
                  %496 = vst [vmem:[%s470 + $0x30] sm:%s462] %v495
                  %v497 = vld [vmem:[%s469 + $0x34] sm:%s462]
                  %498 = vst [vmem:[%s470 + $0x34] sm:%s462] %v497
                  %v499 = vld [vmem:[%s469 + $0x38] sm:%s462]
                  %500 = vst [vmem:[%s470 + $0x38] sm:%s462] %v499
                  %v501 = vld [vmem:[%s469 + $0x3c] sm:%s462]
                  %502 = vst [vmem:[%s470 + $0x3c] sm:%s462] %v501
                  %v503 = vld [vmem:[%s469 + $0x40] sm:%s462]
                  %504 = vst [vmem:[%s470 + $0x40] sm:%s462] %v503
                  %v505 = vld [vmem:[%s469 + $0x44] sm:%s462]
                  %506 = vst [vmem:[%s470 + $0x44] sm:%s462] %v505
                  %v507 = vld [vmem:[%s469 + $0x90] sm:%s462]
                  %508 = vst [vmem:[%s470 + $0x48] sm:%s462] %v507
                  %v509 = vld [vmem:[%s469 + $0x94] sm:%s462]
                  %510 = vst [vmem:[%s470 + $0x4c] sm:%s462] %v509
                  %v511 = vld [vmem:[%s469 + $0x98] sm:%s462]
                  %512 = vst [vmem:[%s470 + $0x50] sm:%s462] %v511
                  %v513 = vld [vmem:[%s469 + $0x9c] sm:%s462]
                  %514 = vst [vmem:[%s470 + $0x54] sm:%s462] %v513
                  %v515 = vld [vmem:[%s469 + $0xa0] sm:%s462]
                  %516 = vst [vmem:[%s470 + $0x58] sm:%s462] %v515
                  %v517 = vld [vmem:[%s469 + $0xa4] sm:%s462]
                  %518 = vst [vmem:[%s470 + $0x5c] sm:%s462] %v517
                  %v519 = vld [vmem:[%s469 + $0xa8] sm:%s462]
                  %520 = vst [vmem:[%s470 + $0x60] sm:%s462] %v519
                  %v521 = vld [vmem:[%s469 + $0xac] sm:%s462]
                  %522 = vst [vmem:[%s470 + $0x64] sm:%s462] %v521
                  %v523 = vld [vmem:[%s469 + $0xb0] sm:%s462]
                  %524 = vst [vmem:[%s470 + $0x68] sm:%s462] %v523
                  %v525 = vld [vmem:[%s469 + $0xb4] sm:%s462]
                  %526 = vst [vmem:[%s470 + $0x6c] sm:%s462] %v525
                  %v527 = vld [vmem:[%s469 + $0xb8] sm:%s462]
                  %528 = vst [vmem:[%s470 + $0x70] sm:%s462] %v527
                  %v529 = vld [vmem:[%s469 + $0xbc] sm:%s462]
                  %530 = vst [vmem:[%s470 + $0x74] sm:%s462] %v529
                  %v531 = vld [vmem:[%s469 + $0xc0] sm:%s462]
                  %532 = vst [vmem:[%s470 + $0x78] sm:%s462] %v531
                  %v533 = vld [vmem:[%s469 + $0xc4] sm:%s462]
                  %534 = vst [vmem:[%s470 + $0x7c] sm:%s462] %v533
                  %v535 = vld [vmem:[%s469 + $0xc8] sm:%s462]
                  %536 = vst [vmem:[%s470 + $0x80] sm:%s462] %v535
                  %v537 = vld [vmem:[%s469 + $0xcc] sm:%s462]
                  %538 = vst [vmem:[%s470 + $0x84] sm:%s462] %v537
                  %v539 = vld [vmem:[%s469 + $0xd0] sm:%s462]
                  %540 = vst [vmem:[%s470 + $0x88] sm:%s462] %v539
                  %v541 = vld [vmem:[%s469 + $0xd4] sm:%s462]
                  %542 = vst [vmem:[%s470 + $0x8c] sm:%s462] %v541
                  %v543 = vld [vmem:[%s469 + $0x120] sm:%s462]
                  %544 = vst [vmem:[%s470 + $0x90] sm:%s462] %v543
                  %v545 = vld [vmem:[%s469 + $0x124] sm:%s462]
                  %546 = vst [vmem:[%s470 + $0x94] sm:%s462] %v545
                  %v547 = vld [vmem:[%s469 + $0x128] sm:%s462]
                  %548 = vst [vmem:[%s470 + $0x98] sm:%s462] %v547
                  %v549 = vld [vmem:[%s469 + $0x12c] sm:%s462]
                  %550 = vst [vmem:[%s470 + $0x9c] sm:%s462] %v549
                  %v551 = vld [vmem:[%s469 + $0x130] sm:%s462]
                  %552 = vst [vmem:[%s470 + $0xa0] sm:%s462] %v551
                  %v553 = vld [vmem:[%s469 + $0x134] sm:%s462]
                  %554 = vst [vmem:[%s470 + $0xa4] sm:%s462] %v553
                  %v555 = vld [vmem:[%s469 + $0x138] sm:%s462]
                  %556 = vst [vmem:[%s470 + $0xa8] sm:%s462] %v555
                  %v557 = vld [vmem:[%s469 + $0x13c] sm:%s462]
                  %558 = vst [vmem:[%s470 + $0xac] sm:%s462] %v557
                  %v559 = vld [vmem:[%s469 + $0x140] sm:%s462]
                  %560 = vst [vmem:[%s470 + $0xb0] sm:%s462] %v559
                  %v561 = vld [vmem:[%s469 + $0x144] sm:%s462]
                  %562 = vst [vmem:[%s470 + $0xb4] sm:%s462] %v561
                  %v563 = vld [vmem:[%s469 + $0x148] sm:%s462]
                  %564 = vst [vmem:[%s470 + $0xb8] sm:%s462] %v563
                  %v565 = vld [vmem:[%s469 + $0x14c] sm:%s462]
                  %566 = vst [vmem:[%s470 + $0xbc] sm:%s462] %v565
                  %v567 = vld [vmem:[%s469 + $0x150] sm:%s462]
                  %568 = vst [vmem:[%s470 + $0xc0] sm:%s462] %v567
                  %v569 = vld [vmem:[%s469 + $0x154] sm:%s462]
                  %570 = vst [vmem:[%s470 + $0xc4] sm:%s462] %v569
                  %v571 = vld [vmem:[%s469 + $0x158] sm:%s462]
                  %572 = vst [vmem:[%s470 + $0xc8] sm:%s462] %v571
                  %v573 = vld [vmem:[%s469 + $0x15c] sm:%s462]
                  %574 = vst [vmem:[%s470 + $0xcc] sm:%s462] %v573
                  %v575 = vld [vmem:[%s469 + $0x160] sm:%s462]
                  %576 = vst [vmem:[%s470 + $0xd0] sm:%s462] %v575
                  %v577 = vld [vmem:[%s469 + $0x164] sm:%s462]
                  %578 = vst [vmem:[%s470 + $0xd4] sm:%s462] %v577
                  %v579 = vld [vmem:[%s469 + $0x1b0] sm:%s462]
                  %580 = vst [vmem:[%s470 + $0xd8] sm:%s462] %v579
                  %v581 = vld [vmem:[%s469 + $0x1b4] sm:%s462]
                  %582 = vst [vmem:[%s470 + $0xdc] sm:%s462] %v581
                  %v583 = vld [vmem:[%s469 + $0x1b8] sm:%s462]
                  %584 = vst [vmem:[%s470 + $0xe0] sm:%s462] %v583
                  %v585 = vld [vmem:[%s469 + $0x1bc] sm:%s462]
                  %586 = vst [vmem:[%s470 + $0xe4] sm:%s462] %v585
                  %v587 = vld [vmem:[%s469 + $0x1c0] sm:%s462]
                  %588 = vst [vmem:[%s470 + $0xe8] sm:%s462] %v587
                  %v589 = vld [vmem:[%s469 + $0x1c4] sm:%s462]
                  %590 = vst [vmem:[%s470 + $0xec] sm:%s462] %v589
                  %v591 = vld [vmem:[%s469 + $0x1c8] sm:%s462]
                  %592 = vst [vmem:[%s470 + $0xf0] sm:%s462] %v591
                  %v593 = vld [vmem:[%s469 + $0x1cc] sm:%s462]
                  %594 = vst [vmem:[%s470 + $0xf4] sm:%s462] %v593
                  %v595 = vld [vmem:[%s469 + $0x1d0] sm:%s462]
                  %596 = vst [vmem:[%s470 + $0xf8] sm:%s462] %v595
                  %v597 = vld [vmem:[%s469 + $0x1d4] sm:%s462]
                  %598 = vst [vmem:[%s470 + $0xfc] sm:%s462] %v597
                  %v599 = vld [vmem:[%s469 + $0x1d8] sm:%s462]
                  %600 = vst [vmem:[%s470 + $0x100] sm:%s462] %v599
                  %v601 = vld [vmem:[%s469 + $0x1dc] sm:%s462]
                  %602 = vst [vmem:[%s470 + $0x104] sm:%s462] %v601
                  %v603 = vld [vmem:[%s469 + $0x1e0] sm:%s462]
                  %604 = vst [vmem:[%s470 + $0x108] sm:%s462] %v603
                  %v605 = vld [vmem:[%s469 + $0x1e4] sm:%s462]
                  %606 = vst [vmem:[%s470 + $0x10c] sm:%s462] %v605
                  %v607 = vld [vmem:[%s469 + $0x1e8] sm:%s462]
                  %608 = vst [vmem:[%s470 + $0x110] sm:%s462] %v607
                  %v609 = vld [vmem:[%s469 + $0x1ec] sm:%s462]
                  %610 = vst [vmem:[%s470 + $0x114] sm:%s462] %v609
                  %v611 = vld [vmem:[%s469 + $0x1f0] sm:%s462]
                  %612 = vst [vmem:[%s470 + $0x118] sm:%s462] %v611
                  %v613 = vld [vmem:[%s469 + $0x1f4] sm:%s462]
                  %614 = vst [vmem:[%s470 + $0x11c] sm:%s462] %v613
                $region71: #{_lambda_.6} parent=58 // loop_footer
                  %s468 = sadd.s32 1, %s464
                $region72: #{_lambda_.6} parent=58 // loop_footer_branch
                  %463 = sbr.rel target = $region68
                $region73: #{_lambda_.6} parent=58 // loop_exit
                  _
              $region59: #{_lambda_.6} parent=43 // pred_fallthru
                _
            $region44: #{_lambda_.6} parent=39 // pred_fallthru
              _
            // Predicated region
            $region45: #{_lambda_.6} parent=39 // pred_check
              _
            $region46: #{_lambda_.6} parent=39 // pred_check_branch
              %296 = sbr.rel (0) target = $region48
            $region47: #{_lambda_.6} parent=39 // pred_region
              %s298 = ssub.s32 16, 1
              loop: start=0, step=1, limit=1
              $region49: #{_lambda_.6} parent=47 // loop_pre_header
                _
              $region50: #{_lambda_.6} parent=47 // loop_header
                %s300 = sphi 0, %s304
                %p301 = scmp.ge.s32.totalorder %s300, 1
                %s305 = sphi %s290, %s290
                %s306 = sphi %s285, %s285
              $region51: #{_lambda_.6} parent=47 // loop_header_branch
                %303 = sbr.rel (%p301) target = $region55
              $region52: #{_lambda_.6} parent=47 // loop_body
                %v307 = vld [vmem:[%s305] sm:%s298]
                %308 = vst [vmem:[%s306] sm:%s298] %v307
                %v309 = vld [vmem:[%s305 + $0x4] sm:%s298]
                %310 = vst [vmem:[%s306 + $0x4] sm:%s298] %v309
                %v311 = vld [vmem:[%s305 + $0x8] sm:%s298]
                %312 = vst [vmem:[%s306 + $0x8] sm:%s298] %v311
                %v313 = vld [vmem:[%s305 + $0xc] sm:%s298]
                %314 = vst [vmem:[%s306 + $0xc] sm:%s298] %v313
                %v315 = vld [vmem:[%s305 + $0x10] sm:%s298]
                %316 = vst [vmem:[%s306 + $0x10] sm:%s298] %v315
                %v317 = vld [vmem:[%s305 + $0x14] sm:%s298]
                %318 = vst [vmem:[%s306 + $0x14] sm:%s298] %v317
                %v319 = vld [vmem:[%s305 + $0x18] sm:%s298]
                %320 = vst [vmem:[%s306 + $0x18] sm:%s298] %v319
                %v321 = vld [vmem:[%s305 + $0x1c] sm:%s298]
                %322 = vst [vmem:[%s306 + $0x1c] sm:%s298] %v321
                %v323 = vld [vmem:[%s305 + $0x20] sm:%s298]
                %324 = vst [vmem:[%s306 + $0x20] sm:%s298] %v323
                %v325 = vld [vmem:[%s305 + $0x24] sm:%s298]
                %326 = vst [vmem:[%s306 + $0x24] sm:%s298] %v325
                %v327 = vld [vmem:[%s305 + $0x28] sm:%s298]
                %328 = vst [vmem:[%s306 + $0x28] sm:%s298] %v327
                %v329 = vld [vmem:[%s305 + $0x2c] sm:%s298]
                %330 = vst [vmem:[%s306 + $0x2c] sm:%s298] %v329
                %v331 = vld [vmem:[%s305 + $0x30] sm:%s298]
                %332 = vst [vmem:[%s306 + $0x30] sm:%s298] %v331
                %v333 = vld [vmem:[%s305 + $0x34] sm:%s298]
                %334 = vst [vmem:[%s306 + $0x34] sm:%s298] %v333
                %v335 = vld [vmem:[%s305 + $0x38] sm:%s298]
                %336 = vst [vmem:[%s306 + $0x38] sm:%s298] %v335
                %v337 = vld [vmem:[%s305 + $0x3c] sm:%s298]
                %338 = vst [vmem:[%s306 + $0x3c] sm:%s298] %v337
                %v339 = vld [vmem:[%s305 + $0x40] sm:%s298]
                %340 = vst [vmem:[%s306 + $0x40] sm:%s298] %v339
                %v341 = vld [vmem:[%s305 + $0x44] sm:%s298]
                %342 = vst [vmem:[%s306 + $0x44] sm:%s298] %v341
                %v343 = vld [vmem:[%s305 + $0x90] sm:%s298]
                %344 = vst [vmem:[%s306 + $0x48] sm:%s298] %v343
                %v345 = vld [vmem:[%s305 + $0x94] sm:%s298]
                %346 = vst [vmem:[%s306 + $0x4c] sm:%s298] %v345
                %v347 = vld [vmem:[%s305 + $0x98] sm:%s298]
                %348 = vst [vmem:[%s306 + $0x50] sm:%s298] %v347
                %v349 = vld [vmem:[%s305 + $0x9c] sm:%s298]
                %350 = vst [vmem:[%s306 + $0x54] sm:%s298] %v349
                %v351 = vld [vmem:[%s305 + $0xa0] sm:%s298]
                %352 = vst [vmem:[%s306 + $0x58] sm:%s298] %v351
                %v353 = vld [vmem:[%s305 + $0xa4] sm:%s298]
                %354 = vst [vmem:[%s306 + $0x5c] sm:%s298] %v353
                %v355 = vld [vmem:[%s305 + $0xa8] sm:%s298]
                %356 = vst [vmem:[%s306 + $0x60] sm:%s298] %v355
                %v357 = vld [vmem:[%s305 + $0xac] sm:%s298]
                %358 = vst [vmem:[%s306 + $0x64] sm:%s298] %v357
                %v359 = vld [vmem:[%s305 + $0xb0] sm:%s298]
                %360 = vst [vmem:[%s306 + $0x68] sm:%s298] %v359
                %v361 = vld [vmem:[%s305 + $0xb4] sm:%s298]
                %362 = vst [vmem:[%s306 + $0x6c] sm:%s298] %v361
                %v363 = vld [vmem:[%s305 + $0xb8] sm:%s298]
                %364 = vst [vmem:[%s306 + $0x70] sm:%s298] %v363
                %v365 = vld [vmem:[%s305 + $0xbc] sm:%s298]
                %366 = vst [vmem:[%s306 + $0x74] sm:%s298] %v365
                %v367 = vld [vmem:[%s305 + $0xc0] sm:%s298]
                %368 = vst [vmem:[%s306 + $0x78] sm:%s298] %v367
                %v369 = vld [vmem:[%s305 + $0xc4] sm:%s298]
                %370 = vst [vmem:[%s306 + $0x7c] sm:%s298] %v369
                %v371 = vld [vmem:[%s305 + $0xc8] sm:%s298]
                %372 = vst [vmem:[%s306 + $0x80] sm:%s298] %v371
                %v373 = vld [vmem:[%s305 + $0xcc] sm:%s298]
                %374 = vst [vmem:[%s306 + $0x84] sm:%s298] %v373
                %v375 = vld [vmem:[%s305 + $0xd0] sm:%s298]
                %376 = vst [vmem:[%s306 + $0x88] sm:%s298] %v375
                %v377 = vld [vmem:[%s305 + $0xd4] sm:%s298]
                %378 = vst [vmem:[%s306 + $0x8c] sm:%s298] %v377
                %v379 = vld [vmem:[%s305 + $0x120] sm:%s298]
                %380 = vst [vmem:[%s306 + $0x90] sm:%s298] %v379
                %v381 = vld [vmem:[%s305 + $0x124] sm:%s298]
                %382 = vst [vmem:[%s306 + $0x94] sm:%s298] %v381
                %v383 = vld [vmem:[%s305 + $0x128] sm:%s298]
                %384 = vst [vmem:[%s306 + $0x98] sm:%s298] %v383
                %v385 = vld [vmem:[%s305 + $0x12c] sm:%s298]
                %386 = vst [vmem:[%s306 + $0x9c] sm:%s298] %v385
                %v387 = vld [vmem:[%s305 + $0x130] sm:%s298]
                %388 = vst [vmem:[%s306 + $0xa0] sm:%s298] %v387
                %v389 = vld [vmem:[%s305 + $0x134] sm:%s298]
                %390 = vst [vmem:[%s306 + $0xa4] sm:%s298] %v389
                %v391 = vld [vmem:[%s305 + $0x138] sm:%s298]
                %392 = vst [vmem:[%s306 + $0xa8] sm:%s298] %v391
                %v393 = vld [vmem:[%s305 + $0x13c] sm:%s298]
                %394 = vst [vmem:[%s306 + $0xac] sm:%s298] %v393
                %v395 = vld [vmem:[%s305 + $0x140] sm:%s298]
                %396 = vst [vmem:[%s306 + $0xb0] sm:%s298] %v395
                %v397 = vld [vmem:[%s305 + $0x144] sm:%s298]
                %398 = vst [vmem:[%s306 + $0xb4] sm:%s298] %v397
                %v399 = vld [vmem:[%s305 + $0x148] sm:%s298]
                %400 = vst [vmem:[%s306 + $0xb8] sm:%s298] %v399
                %v401 = vld [vmem:[%s305 + $0x14c] sm:%s298]
                %402 = vst [vmem:[%s306 + $0xbc] sm:%s298] %v401
                %v403 = vld [vmem:[%s305 + $0x150] sm:%s298]
                %404 = vst [vmem:[%s306 + $0xc0] sm:%s298] %v403
                %v405 = vld [vmem:[%s305 + $0x154] sm:%s298]
                %406 = vst [vmem:[%s306 + $0xc4] sm:%s298] %v405
                %v407 = vld [vmem:[%s305 + $0x158] sm:%s298]
                %408 = vst [vmem:[%s306 + $0xc8] sm:%s298] %v407
                %v409 = vld [vmem:[%s305 + $0x15c] sm:%s298]
                %410 = vst [vmem:[%s306 + $0xcc] sm:%s298] %v409
                %v411 = vld [vmem:[%s305 + $0x160] sm:%s298]
                %412 = vst [vmem:[%s306 + $0xd0] sm:%s298] %v411
                %v413 = vld [vmem:[%s305 + $0x164] sm:%s298]
                %414 = vst [vmem:[%s306 + $0xd4] sm:%s298] %v413
                %v415 = vld [vmem:[%s305 + $0x1b0] sm:%s298]
                %416 = vst [vmem:[%s306 + $0xd8] sm:%s298] %v415
                %v417 = vld [vmem:[%s305 + $0x1b4] sm:%s298]
                %418 = vst [vmem:[%s306 + $0xdc] sm:%s298] %v417
                %v419 = vld [vmem:[%s305 + $0x1b8] sm:%s298]
                %420 = vst [vmem:[%s306 + $0xe0] sm:%s298] %v419
                %v421 = vld [vmem:[%s305 + $0x1bc] sm:%s298]
                %422 = vst [vmem:[%s306 + $0xe4] sm:%s298] %v421
                %v423 = vld [vmem:[%s305 + $0x1c0] sm:%s298]
                %424 = vst [vmem:[%s306 + $0xe8] sm:%s298] %v423
                %v425 = vld [vmem:[%s305 + $0x1c4] sm:%s298]
                %426 = vst [vmem:[%s306 + $0xec] sm:%s298] %v425
                %v427 = vld [vmem:[%s305 + $0x1c8] sm:%s298]
                %428 = vst [vmem:[%s306 + $0xf0] sm:%s298] %v427
                %v429 = vld [vmem:[%s305 + $0x1cc] sm:%s298]
                %430 = vst [vmem:[%s306 + $0xf4] sm:%s298] %v429
                %v431 = vld [vmem:[%s305 + $0x1d0] sm:%s298]
                %432 = vst [vmem:[%s306 + $0xf8] sm:%s298] %v431
                %v433 = vld [vmem:[%s305 + $0x1d4] sm:%s298]
                %434 = vst [vmem:[%s306 + $0xfc] sm:%s298] %v433
                %v435 = vld [vmem:[%s305 + $0x1d8] sm:%s298]
                %436 = vst [vmem:[%s306 + $0x100] sm:%s298] %v435
                %v437 = vld [vmem:[%s305 + $0x1dc] sm:%s298]
                %438 = vst [vmem:[%s306 + $0x104] sm:%s298] %v437
                %v439 = vld [vmem:[%s305 + $0x1e0] sm:%s298]
                %440 = vst [vmem:[%s306 + $0x108] sm:%s298] %v439
                %v441 = vld [vmem:[%s305 + $0x1e4] sm:%s298]
                %442 = vst [vmem:[%s306 + $0x10c] sm:%s298] %v441
                %v443 = vld [vmem:[%s305 + $0x1e8] sm:%s298]
                %444 = vst [vmem:[%s306 + $0x110] sm:%s298] %v443
                %v445 = vld [vmem:[%s305 + $0x1ec] sm:%s298]
                %446 = vst [vmem:[%s306 + $0x114] sm:%s298] %v445
                %v447 = vld [vmem:[%s305 + $0x1f0] sm:%s298]
                %448 = vst [vmem:[%s306 + $0x118] sm:%s298] %v447
                %v449 = vld [vmem:[%s305 + $0x1f4] sm:%s298]
                %450 = vst [vmem:[%s306 + $0x11c] sm:%s298] %v449
              $region53: #{_lambda_.6} parent=47 // loop_footer
                %s304 = sadd.s32 1, %s300
              $region54: #{_lambda_.6} parent=47 // loop_footer_branch
                %299 = sbr.rel target = $region50
              $region55: #{_lambda_.6} parent=47 // loop_exit
                _
            $region48: #{_lambda_.6} parent=39 // pred_fallthru
              _
          $region40: #{_lambda_.6} parent=35 // pred_fallthru
            _
          %615 = vnop
        $region36: #{_lambda_.6} parent=31 // pred_fallthru
          _
      $region32: #{_lambda_.6} parent=5 // pred_fallthru
        _
      %p616 = scmp.le.s32.totalorder 1, %s14
      %p617 = scmp.lt.s32.totalorder %s14, 3
      %p618 = pnand %p616, %p617
      %p619 = pneg %p618
      // Predicated region
      $region74: #{_lambda_.6} parent=5 // pred_check
        _
      $region75: #{_lambda_.6} parent=5 // pred_check_branch
        %621 = sbr.rel (%p618) target = $region77
      $region76: #{_lambda_.6} parent=5 // pred_region
        %s622 = ssub.s32 %s14, 1
        %s623 = sand.u32 %s41, 1
        %s624 = sand.u32 %s41, 1
        %s625 = smul.addr %s624, 288
        %s626 = scalar_lea.vmem [#allocation3], %s625
        // Predicated region
        $region78: #{_lambda_.6} parent=76 // pred_check
          %p627 = pneg %p54
        $region79: #{_lambda_.6} parent=76 // pred_check_branch
          %629 = sbr.rel (%p627) target = $region81
        $region80: #{_lambda_.6} parent=76 // pred_region
          _
        $region81: #{_lambda_.6} parent=76 // pred_fallthru
          _
        %s630 = sand.u32 %s41, 1
        %s631 = sand.u32 %s41, 1
        %s632 = smul.addr %s631, 288
        %s633 = scalar_lea.vmem [#allocation3], %s632
        %p634 = pneg %p54
        %p635 = pneg %p51
        %p636 = pneg %p75
        %p637 = pneg %p72
        %p638 = scmp.lt.s32.totalorder %s23, 0
        %s639 = scalar_select %p638, %s23, 0
        %s640 = scalar_lea.vmem %s2, %s639
        %p641 = pneg %p101
        %p642 = pneg %p98
        %p643 = scmp.lt.s32.totalorder %s23, 0
        %s644 = scalar_select %p643, %s23, 0
        %s645 = scalar_lea.vmem %s3, %s644
        %p646 = pneg %p127
        %p647 = pneg %p124
        %p648 = scmp.lt.s32.totalorder %s23, 0
        %s649 = scalar_select %p648, %s23, 0
        %s650 = smul.addr %s649, 144
        %s651 = smul.addr %s650, 4
        %s652 = scalar_lea.vmem %s4, %s651
        %p653 = pneg %p153
        %p654 = pneg %p150
        %p655 = pneg %p181
        %p656 = pneg %p178
        %s657 = smul.u32 8, %s24
        %p658 = scmp.lt.s32.totalorder %s23, 0
        %s659 = scalar_select %p658, %s23, 0
        %p660 = scmp.lt.s32.totalorder %s657, 15
        %s661 = scalar_select %p660, %s657, 15
        %s662 = smul.addr %s659, 16
        %s663 = sadd.s32 %s661, %s662
        %s664 = smul.addr %s663, 4
        %s665 = scalar_lea.vmem %s5, %s664
        %p666 = pneg %p209
        %p667 = pneg %p206
        %p668 = scmp.lt.s32.totalorder %s23, 0
        %s669 = scalar_select %p668, %s23, 0
        %p670 = scmp.lt.s32.totalorder %s24, 1
        %s671 = scalar_select %p670, %s24, 1
        %s672 = smul.addr %s669, 2
        %s673 = sadd.s32 %s671, %s672
        %s674 = scalar_lea.vmem %s6, %s673
        %p675 = pneg %p237
        %p676 = pneg %p234
        %p677 = scmp.lt.s32.totalorder %s23, 0
        %s678 = scalar_select %p677, %s23, 0
        %p679 = scmp.lt.s32.totalorder %s24, 1
        %s680 = scalar_select %p679, %s24, 1
        %s681 = smul.addr %s678, 2
        %s682 = sadd.s32 %s680, %s681
        %s683 = scalar_lea.vmem %s7, %s682
        %p684 = scmp.lt.s32.totalorder %s23, 0
        %s685 = scalar_select %p684, %s23, 0
        %s686 = scalar_lea.vmem %s2, %s685
        %p687 = scmp.lt.s32.totalorder %s23, 0
        %s688 = scalar_select %p687, %s23, 0
        %s689 = scalar_lea.vmem %s3, %s688
        %p690 = scmp.lt.s32.totalorder %s23, 0
        %s691 = scalar_select %p690, %s23, 0
        %s692 = smul.addr %s691, 144
        %s693 = smul.addr %s692, 4
        %s694 = scalar_lea.vmem %s4, %s693
        %s695 = smul.u32 8, %s24
        %p696 = scmp.lt.s32.totalorder %s23, 0
        %s697 = scalar_select %p696, %s23, 0
        %p698 = scmp.lt.s32.totalorder %s695, 15
        %s699 = scalar_select %p698, %s695, 15
        %s700 = smul.addr %s697, 16
        %s701 = sadd.s32 %s699, %s700
        %s702 = smul.addr %s701, 4
        %s703 = scalar_lea.vmem %s5, %s702
        %s704 = smul.u32 8, %s24
        %p705 = scmp.lt.s32.totalorder %s23, 0
        %s706 = scalar_select %p705, %s23, 0
        %p707 = scmp.lt.s32.totalorder %s24, 1
        %s708 = scalar_select %p707, %s24, 1
        %s709 = smul.addr %s706, 2
        %s710 = sadd.s32 %s708, %s709
        %s711 = scalar_lea.vmem %s6, %s710
        %p712 = scmp.lt.s32.totalorder %s23, 0
        %s713 = scalar_select %p712, %s23, 0
        %p714 = scmp.lt.s32.totalorder %s24, 1
        %s715 = scalar_select %p714, %s24, 1
        %s716 = smul.addr %s713, 2
        %s717 = sadd.s32 %s715, %s716
        %s718 = scalar_lea.vmem %s7, %s717
        %v719 = vld [vmem:[%s626] sm:$0xf]
        %v720 = vld [vmem:[%s626 + $0x4] sm:$0x1]
        %v721 = vld [vmem:[%s626 + $0x8] sm:$0xf]
        %v722 = vld [vmem:[%s626 + $0xc] sm:$0x1]
        %v723 = vld [vmem:[%s626 + $0x10] sm:$0xf]
        %v724 = vld [vmem:[%s626 + $0x14] sm:$0x1]
        %v725 = vld [vmem:[%s626 + $0x18] sm:$0xf]
        %v726 = vld [vmem:[%s626 + $0x1c] sm:$0x1]
        %v727 = vld [vmem:[%s626 + $0x20] sm:$0xf]
        %v728 = vld [vmem:[%s626 + $0x24] sm:$0x1]
        %v729 = vld [vmem:[%s626 + $0x28] sm:$0xf]
        %v730 = vld [vmem:[%s626 + $0x2c] sm:$0x1]
        %v731 = vld [vmem:[%s626 + $0x30] sm:$0xf]
        %v732 = vld [vmem:[%s626 + $0x34] sm:$0x1]
        %v733 = vld [vmem:[%s626 + $0x38] sm:$0xf]
        %v734 = vld [vmem:[%s626 + $0x3c] sm:$0x1]
        %v735 = vld [vmem:[%s626 + $0x40] sm:$0xf]
        %v736 = vld [vmem:[%s626 + $0x44] sm:$0x1]
        %v737 = vld [vmem:[%s626 + $0x48] sm:$0xf]
        %v738 = vld [vmem:[%s626 + $0x50] sm:$0xf]
        %v739 = vld [vmem:[%s626 + $0x58] sm:$0xf]
        %v740 = vld [vmem:[%s626 + $0x60] sm:$0xf]
        %v741 = vld [vmem:[%s626 + $0x68] sm:$0xf]
        %v742 = vld [vmem:[%s626 + $0x70] sm:$0xf]
        %v743 = vld [vmem:[%s626 + $0x78] sm:$0xf]
        %v744 = vld [vmem:[%s626 + $0x80] sm:$0xf]
        %v745 = vld [vmem:[%s626 + $0x88] sm:$0xf]
        %v746 = vld [vmem:[%s626 + $0x90] sm:$0xf]
        %v747 = vld [vmem:[%s626 + $0x94] sm:$0x1]
        %v748 = vld [vmem:[%s626 + $0x98] sm:$0xf]
        %v749 = vld [vmem:[%s626 + $0x9c] sm:$0x1]
        %v750 = vld [vmem:[%s626 + $0xa0] sm:$0xf]
        %v751 = vld [vmem:[%s626 + $0xa4] sm:$0x1]
        %v752 = vld [vmem:[%s626 + $0xa8] sm:$0xf]
        %v753 = vld [vmem:[%s626 + $0xac] sm:$0x1]
        %v754 = vld [vmem:[%s626 + $0xb0] sm:$0xf]
        %v755 = vld [vmem:[%s626 + $0xb4] sm:$0x1]
        %v756 = vld [vmem:[%s626 + $0xb8] sm:$0xf]
        %v757 = vld [vmem:[%s626 + $0xbc] sm:$0x1]
        %v758 = vld [vmem:[%s626 + $0xc0] sm:$0xf]
        %v759 = vld [vmem:[%s626 + $0xc4] sm:$0x1]
        %v760 = vld [vmem:[%s626 + $0xc8] sm:$0xf]
        %v761 = vld [vmem:[%s626 + $0xcc] sm:$0x1]
        %v762 = vld [vmem:[%s626 + $0xd8] sm:$0xf]
        %v763 = vld [vmem:[%s626 + $0xe0] sm:$0xf]
        %v764 = vld [vmem:[%s626 + $0xe8] sm:$0xf]
        %v765 = vld [vmem:[%s626 + $0xf0] sm:$0xf]
        %v766 = vld [vmem:[%s626 + $0xf8] sm:$0xf]
        %v767 = vld [vmem:[%s626 + $0x100] sm:$0xf]
        %v768 = vld [vmem:[%s626 + $0x108] sm:$0xf]
        %v769 = vld [vmem:[%s626 + $0x110] sm:$0xf]
        %v770 = vunpack.c.l.bf16 %v719
        %v771 = vunpack.c.l.bf16 %v720
        %v772 = vunpack.c.l.bf16 %v721
        %v773 = vunpack.c.l.bf16 %v722
        %v774 = vunpack.c.l.bf16 %v723
        %v775 = vunpack.c.l.bf16 %v724
        %v776 = vunpack.c.l.bf16 %v725
        %v777 = vunpack.c.l.bf16 %v726
        %v778 = vunpack.c.l.bf16 %v727
        %v779 = vunpack.c.l.bf16 %v728
        %v780 = vunpack.c.l.bf16 %v729
        %v781 = vunpack.c.l.bf16 %v730
        %v782 = vunpack.c.l.bf16 %v731
        %v783 = vunpack.c.l.bf16 %v732
        %v784 = vunpack.c.l.bf16 %v733
        %v785 = vunpack.c.l.bf16 %v734
        %v786 = vunpack.c.l.bf16 %v735
        %v787 = vunpack.c.l.bf16 %v736
        %v788 = vunpack.c.l.bf16 %v737
        %v789 = vunpack.c.l.bf16 %v738
        %v790 = vunpack.c.l.bf16 %v739
        %v791 = vunpack.c.l.bf16 %v740
        %v792 = vunpack.c.l.bf16 %v741
        %v793 = vunpack.c.l.bf16 %v742
        %v794 = vunpack.c.l.bf16 %v743
        %v795 = vunpack.c.l.bf16 %v744
        %v796 = vunpack.c.l.bf16 %v745
        %v797 = vunpack.c.l.bf16 %v746
        %v798 = vunpack.c.l.bf16 %v747
        %v799 = vunpack.c.l.bf16 %v748
        %v800 = vunpack.c.l.bf16 %v749
        %v801 = vunpack.c.l.bf16 %v750
        %v802 = vunpack.c.l.bf16 %v751
        %v803 = vunpack.c.l.bf16 %v752
        %v804 = vunpack.c.l.bf16 %v753
        %v805 = vunpack.c.l.bf16 %v754
        %v806 = vunpack.c.l.bf16 %v755
        %v807 = vunpack.c.l.bf16 %v756
        %v808 = vunpack.c.l.bf16 %v757
        %v809 = vunpack.c.l.bf16 %v758
        %v810 = vunpack.c.l.bf16 %v759
        %v811 = vunpack.c.l.bf16 %v760
        %v812 = vunpack.c.l.bf16 %v761
        %v813 = vunpack.c.l.bf16 %v762
        %v814 = vunpack.c.l.bf16 %v763
        %v815 = vunpack.c.l.bf16 %v764
        %v816 = vunpack.c.l.bf16 %v765
        %v817 = vunpack.c.l.bf16 %v766
        %v818 = vunpack.c.l.bf16 %v767
        %v819 = vunpack.c.l.bf16 %v768
        %v820 = vunpack.c.l.bf16 %v769
        %v821 = vld [vmem:[%s686] sm:$0x1]
        %v823 = vperm.slane %v821, 0
        %v825 = vmul.f32 %v770, %v823
        %v826 = vmul.f32 %v771, %v823
        %v827 = vmul.f32 %v772, %v823
        %v828 = vmul.f32 %v773, %v823
        %v829 = vmul.f32 %v774, %v823
        %v830 = vmul.f32 %v775, %v823
        %v831 = vmul.f32 %v776, %v823
        %v832 = vmul.f32 %v777, %v823
        %v833 = vmul.f32 %v778, %v823
        %v834 = vmul.f32 %v779, %v823
        %v835 = vmul.f32 %v780, %v823
        %v836 = vmul.f32 %v781, %v823
        %v837 = vmul.f32 %v782, %v823
        %v838 = vmul.f32 %v783, %v823
        %v839 = vmul.f32 %v784, %v823
        %v840 = vmul.f32 %v785, %v823
        %v841 = vmul.f32 %v786, %v823
        %v842 = vmul.f32 %v787, %v823
        %v843 = vmul.f32 %v788, %v823
        %v844 = vmul.f32 %v789, %v823
        %v845 = vmul.f32 %v790, %v823
        %v846 = vmul.f32 %v791, %v823
        %v847 = vmul.f32 %v792, %v823
        %v848 = vmul.f32 %v793, %v823
        %v849 = vmul.f32 %v794, %v823
        %v850 = vmul.f32 %v795, %v823
        %v851 = vmul.f32 %v796, %v823
        %v852 = vmul.f32 %v797, %v823
        %v853 = vmul.f32 %v798, %v823
        %v854 = vmul.f32 %v799, %v823
        %v855 = vmul.f32 %v800, %v823
        %v856 = vmul.f32 %v801, %v823
        %v857 = vmul.f32 %v802, %v823
        %v858 = vmul.f32 %v803, %v823
        %v859 = vmul.f32 %v804, %v823
        %v860 = vmul.f32 %v805, %v823
        %v861 = vmul.f32 %v806, %v823
        %v862 = vmul.f32 %v807, %v823
        %v863 = vmul.f32 %v808, %v823
        %v864 = vmul.f32 %v809, %v823
        %v865 = vmul.f32 %v810, %v823
        %v866 = vmul.f32 %v811, %v823
        %v867 = vmul.f32 %v812, %v823
        %v868 = vmul.f32 %v813, %v823
        %v869 = vmul.f32 %v814, %v823
        %v870 = vmul.f32 %v815, %v823
        %v871 = vmul.f32 %v816, %v823
        %v872 = vmul.f32 %v817, %v823
        %v873 = vmul.f32 %v818, %v823
        %v874 = vmul.f32 %v819, %v823
        %v875 = vmul.f32 %v820, %v823
        %v876 = vld [vmem:[%s689] sm:$0x1]
        %v878 = vperm.slane %v876, 0
        %v880 = vadd.f32 %v825, %v878
        %v881 = vadd.f32 %v826, %v878
        %v882 = vadd.f32 %v827, %v878
        %v883 = vadd.f32 %v828, %v878
        %v884 = vadd.f32 %v829, %v878
        %v885 = vadd.f32 %v830, %v878
        %v886 = vadd.f32 %v831, %v878
        %v887 = vadd.f32 %v832, %v878
        %v888 = vadd.f32 %v833, %v878
        %v889 = vadd.f32 %v834, %v878
        %v890 = vadd.f32 %v835, %v878
        %v891 = vadd.f32 %v836, %v878
        %v892 = vadd.f32 %v837, %v878
        %v893 = vadd.f32 %v838, %v878
        %v894 = vadd.f32 %v839, %v878
        %v895 = vadd.f32 %v840, %v878
        %v896 = vadd.f32 %v841, %v878
        %v897 = vadd.f32 %v842, %v878
        %v898 = vadd.f32 %v843, %v878
        %v899 = vadd.f32 %v844, %v878
        %v900 = vadd.f32 %v845, %v878
        %v901 = vadd.f32 %v846, %v878
        %v902 = vadd.f32 %v847, %v878
        %v903 = vadd.f32 %v848, %v878
        %v904 = vadd.f32 %v849, %v878
        %v905 = vadd.f32 %v850, %v878
        %v906 = vadd.f32 %v851, %v878
        %v907 = vadd.f32 %v852, %v878
        %v908 = vadd.f32 %v853, %v878
        %v909 = vadd.f32 %v854, %v878
        %v910 = vadd.f32 %v855, %v878
        %v911 = vadd.f32 %v856, %v878
        %v912 = vadd.f32 %v857, %v878
        %v913 = vadd.f32 %v858, %v878
        %v914 = vadd.f32 %v859, %v878
        %v915 = vadd.f32 %v860, %v878
        %v916 = vadd.f32 %v861, %v878
        %v917 = vadd.f32 %v862, %v878
        %v918 = vadd.f32 %v863, %v878
        %v919 = vadd.f32 %v864, %v878
        %v920 = vadd.f32 %v865, %v878
        %v921 = vadd.f32 %v866, %v878
        %v922 = vadd.f32 %v867, %v878
        %v923 = vadd.f32 %v868, %v878
        %v924 = vadd.f32 %v869, %v878
        %v925 = vadd.f32 %v870, %v878
        %v926 = vadd.f32 %v871, %v878
        %v927 = vadd.f32 %v872, %v878
        %v928 = vadd.f32 %v873, %v878
        %v929 = vadd.f32 %v874, %v878
        %v930 = vadd.f32 %v875, %v878
        %v931 = vmax.f32 %v880, 0.0
        %v932 = vmax.f32 %v881, 0.0
        %v933 = vmax.f32 %v882, 0.0
        %v934 = vmax.f32 %v883, 0.0
        %v935 = vmax.f32 %v884, 0.0
        %v936 = vmax.f32 %v885, 0.0
        %v937 = vmax.f32 %v886, 0.0
        %v938 = vmax.f32 %v887, 0.0
        %v939 = vmax.f32 %v888, 0.0
        %v940 = vmax.f32 %v889, 0.0
        %v941 = vmax.f32 %v890, 0.0
        %v942 = vmax.f32 %v891, 0.0
        %v943 = vmax.f32 %v892, 0.0
        %v944 = vmax.f32 %v893, 0.0
        %v945 = vmax.f32 %v894, 0.0
        %v946 = vmax.f32 %v895, 0.0
        %v947 = vmax.f32 %v896, 0.0
        %v948 = vmax.f32 %v897, 0.0
        %v949 = vmax.f32 %v898, 0.0
        %v950 = vmax.f32 %v899, 0.0
        %v951 = vmax.f32 %v900, 0.0
        %v952 = vmax.f32 %v901, 0.0
        %v953 = vmax.f32 %v902, 0.0
        %v954 = vmax.f32 %v903, 0.0
        %v955 = vmax.f32 %v904, 0.0
        %v956 = vmax.f32 %v905, 0.0
        %v957 = vmax.f32 %v906, 0.0
        %v958 = vmax.f32 %v907, 0.0
        %v959 = vmax.f32 %v908, 0.0
        %v960 = vmax.f32 %v909, 0.0
        %v961 = vmax.f32 %v910, 0.0
        %v962 = vmax.f32 %v911, 0.0
        %v963 = vmax.f32 %v912, 0.0
        %v964 = vmax.f32 %v913, 0.0
        %v965 = vmax.f32 %v914, 0.0
        %v966 = vmax.f32 %v915, 0.0
        %v967 = vmax.f32 %v916, 0.0
        %v968 = vmax.f32 %v917, 0.0
        %v969 = vmax.f32 %v918, 0.0
        %v970 = vmax.f32 %v919, 0.0
        %v971 = vmax.f32 %v920, 0.0
        %v972 = vmax.f32 %v921, 0.0
        %v973 = vmax.f32 %v922, 0.0
        %v974 = vmax.f32 %v923, 0.0
        %v975 = vmax.f32 %v924, 0.0
        %v976 = vmax.f32 %v925, 0.0
        %v977 = vmax.f32 %v926, 0.0
        %v978 = vmax.f32 %v927, 0.0
        %v979 = vmax.f32 %v928, 0.0
        %v980 = vmax.f32 %v929, 0.0
        %v981 = vmax.f32 %v930, 0.0
        %v982 = vld [vmem:[%s1] sm:$0xff]
        %v983 = vld [vmem:[%s1 + $0x8] sm:$0x1]
        %v984 = vld [vmem:[%s1 + $0x10] sm:$0xff]
        %v985 = vld [vmem:[%s1 + $0x18] sm:$0x1]
        %v986 = vld [vmem:[%s1 + $0x20] sm:$0xff]
        %v987 = vld [vmem:[%s1 + $0x28] sm:$0x1]
        %v988 = vld [vmem:[%s1 + $0x30] sm:$0xff]
        %v989 = vld [vmem:[%s1 + $0x38] sm:$0x1]
        %v990 = vld [vmem:[%s1 + $0x40] sm:$0xff]
        %v991 = vld [vmem:[%s1 + $0x48] sm:$0x1]
        %v992 = vld [vmem:[%s1 + $0x50] sm:$0xff]
        %v993 = vld [vmem:[%s1 + $0x58] sm:$0x1]
        %v994 = vld [vmem:[%s1 + $0x60] sm:$0xff]
        %v995 = vld [vmem:[%s1 + $0x68] sm:$0x1]
        %v996 = vld [vmem:[%s1 + $0x70] sm:$0xff]
        %v997 = vld [vmem:[%s1 + $0x78] sm:$0x1]
        %v998 = vld [vmem:[%s1 + $0x80] sm:$0xff]
        %v999 = vld [vmem:[%s1 + $0x88] sm:$0x1]
        %v1000 = vld [vmem:[%s1 + $0x90] sm:$0xff]
        %v1001 = vld [vmem:[%s1 + $0xa0] sm:$0xff]
        %v1002 = vld [vmem:[%s1 + $0xb0] sm:$0xff]
        %v1003 = vld [vmem:[%s1 + $0xc0] sm:$0xff]
        %v1004 = vld [vmem:[%s1 + $0xd0] sm:$0xff]
        %v1005 = vld [vmem:[%s1 + $0xe0] sm:$0xff]
        %v1006 = vld [vmem:[%s1 + $0xf0] sm:$0xff]
        %v1007 = vld [vmem:[%s1 + $0x100] sm:$0xff]
        %v1008 = vld [vmem:[%s1 + $0x110] sm:$0xff]
        %v1009 = vld [vmem:[%s1 + $0x120] sm:$0xff]
        %v1010 = vld [vmem:[%s1 + $0x128] sm:$0x1]
        %v1011 = vld [vmem:[%s1 + $0x130] sm:$0xff]
        %v1012 = vld [vmem:[%s1 + $0x138] sm:$0x1]
        %v1013 = vld [vmem:[%s1 + $0x140] sm:$0xff]
        %v1014 = vld [vmem:[%s1 + $0x148] sm:$0x1]
        %v1015 = vld [vmem:[%s1 + $0x150] sm:$0xff]
        %v1016 = vld [vmem:[%s1 + $0x158] sm:$0x1]
        %v1017 = vld [vmem:[%s1 + $0x160] sm:$0xff]
        %v1018 = vld [vmem:[%s1 + $0x168] sm:$0x1]
        %v1019 = vld [vmem:[%s1 + $0x170] sm:$0xff]
        %v1020 = vld [vmem:[%s1 + $0x178] sm:$0x1]
        %v1021 = vld [vmem:[%s1 + $0x180] sm:$0xff]
        %v1022 = vld [vmem:[%s1 + $0x188] sm:$0x1]
        %v1023 = vld [vmem:[%s1 + $0x190] sm:$0xff]
        %v1024 = vld [vmem:[%s1 + $0x198] sm:$0x1]
        %v1025 = vld [vmem:[%s1 + $0x1b0] sm:$0xff]
        %v1026 = vld [vmem:[%s1 + $0x1c0] sm:$0xff]
        %v1027 = vld [vmem:[%s1 + $0x1d0] sm:$0xff]
        %v1028 = vld [vmem:[%s1 + $0x1e0] sm:$0xff]
        %v1029 = vld [vmem:[%s1 + $0x1f0] sm:$0xff]
        %v1030 = vld [vmem:[%s1 + $0x200] sm:$0xff]
        %v1031 = vld [vmem:[%s1 + $0x210] sm:$0xff]
        %v1032 = vld [vmem:[%s1 + $0x220] sm:$0xff]
        %v1033 = vmul.f32 %v931, %v982
        %v1034 = vmul.f32 %v932, %v983
        %v1035 = vmul.f32 %v933, %v984
        %v1036 = vmul.f32 %v934, %v985
        %v1037 = vmul.f32 %v935, %v986
        %v1038 = vmul.f32 %v936, %v987
        %v1039 = vmul.f32 %v937, %v988
        %v1040 = vmul.f32 %v938, %v989
        %v1041 = vmul.f32 %v939, %v990
        %v1042 = vmul.f32 %v940, %v991
        %v1043 = vmul.f32 %v941, %v992
        %v1044 = vmul.f32 %v942, %v993
        %v1045 = vmul.f32 %v943, %v994
        %v1046 = vmul.f32 %v944, %v995
        %v1047 = vmul.f32 %v945, %v996
        %v1048 = vmul.f32 %v946, %v997
        %v1049 = vmul.f32 %v947, %v998
        %v1050 = vmul.f32 %v948, %v999
        %v1051 = vmul.f32 %v949, %v1000
        %v1052 = vmul.f32 %v950, %v1001
        %v1053 = vmul.f32 %v951, %v1002
        %v1054 = vmul.f32 %v952, %v1003
        %v1055 = vmul.f32 %v953, %v1004
        %v1056 = vmul.f32 %v954, %v1005
        %v1057 = vmul.f32 %v955, %v1006
        %v1058 = vmul.f32 %v956, %v1007
        %v1059 = vmul.f32 %v957, %v1008
        %v1060 = vmul.f32 %v958, %v1009
        %v1061 = vmul.f32 %v959, %v1010
        %v1062 = vmul.f32 %v960, %v1011
        %v1063 = vmul.f32 %v961, %v1012
        %v1064 = vmul.f32 %v962, %v1013
        %v1065 = vmul.f32 %v963, %v1014
        %v1066 = vmul.f32 %v964, %v1015
        %v1067 = vmul.f32 %v965, %v1016
        %v1068 = vmul.f32 %v966, %v1017
        %v1069 = vmul.f32 %v967, %v1018
        %v1070 = vmul.f32 %v968, %v1019
        %v1071 = vmul.f32 %v969, %v1020
        %v1072 = vmul.f32 %v970, %v1021
        %v1073 = vmul.f32 %v971, %v1022
        %v1074 = vmul.f32 %v972, %v1023
        %v1075 = vmul.f32 %v973, %v1024
        %v1076 = vmul.f32 %v974, %v1025
        %v1077 = vmul.f32 %v975, %v1026
        %v1078 = vmul.f32 %v976, %v1027
        %v1079 = vmul.f32 %v977, %v1028
        %v1080 = vmul.f32 %v978, %v1029
        %v1081 = vmul.f32 %v979, %v1030
        %v1082 = vmul.f32 %v980, %v1031
        %v1083 = vmul.f32 %v981, %v1032
        %v1084 = vpack.c.bf16 %v1033, %v1033
        %v1085 = vpack.c.bf16 %v1034, %v1034
        %v1086 = vpack.c.bf16 %v1035, %v1035
        %v1087 = vpack.c.bf16 %v1036, %v1036
        %v1088 = vpack.c.bf16 %v1037, %v1037
        %v1089 = vpack.c.bf16 %v1038, %v1038
        %v1090 = vpack.c.bf16 %v1039, %v1039
        %v1091 = vpack.c.bf16 %v1040, %v1040
        %v1092 = vpack.c.bf16 %v1041, %v1041
        %v1093 = vpack.c.bf16 %v1042, %v1042
        %v1094 = vpack.c.bf16 %v1043, %v1043
        %v1095 = vpack.c.bf16 %v1044, %v1044
        %v1096 = vpack.c.bf16 %v1045, %v1045
        %v1097 = vpack.c.bf16 %v1046, %v1046
        %v1098 = vpack.c.bf16 %v1047, %v1047
        %v1099 = vpack.c.bf16 %v1048, %v1048
        %v1100 = vpack.c.bf16 %v1049, %v1049
        %v1101 = vpack.c.bf16 %v1050, %v1050
        %v1102 = vpack.c.bf16 %v1051, %v1051
        %v1103 = vpack.c.bf16 %v1052, %v1052
        %v1104 = vpack.c.bf16 %v1053, %v1053
        %v1105 = vpack.c.bf16 %v1054, %v1054
        %v1106 = vpack.c.bf16 %v1055, %v1055
        %v1107 = vpack.c.bf16 %v1056, %v1056
        %v1108 = vpack.c.bf16 %v1057, %v1057
        %v1109 = vpack.c.bf16 %v1058, %v1058
        %v1110 = vpack.c.bf16 %v1059, %v1059
        %v1111 = vpack.c.bf16 %v1060, %v1060
        %v1112 = vpack.c.bf16 %v1061, %v1061
        %v1113 = vpack.c.bf16 %v1062, %v1062
        %v1114 = vpack.c.bf16 %v1063, %v1063
        %v1115 = vpack.c.bf16 %v1064, %v1064
        %v1116 = vpack.c.bf16 %v1065, %v1065
        %v1117 = vpack.c.bf16 %v1066, %v1066
        %v1118 = vpack.c.bf16 %v1067, %v1067
        %v1119 = vpack.c.bf16 %v1068, %v1068
        %v1120 = vpack.c.bf16 %v1069, %v1069
        %v1121 = vpack.c.bf16 %v1070, %v1070
        %v1122 = vpack.c.bf16 %v1071, %v1071
        %v1123 = vpack.c.bf16 %v1072, %v1072
        %v1124 = vpack.c.bf16 %v1073, %v1073
        %v1125 = vpack.c.bf16 %v1074, %v1074
        %v1126 = vpack.c.bf16 %v1075, %v1075
        %v1127 = vpack.c.bf16 %v1076, %v1076
        %v1128 = vpack.c.bf16 %v1077, %v1077
        %v1129 = vpack.c.bf16 %v1078, %v1078
        %v1130 = vpack.c.bf16 %v1079, %v1079
        %v1131 = vpack.c.bf16 %v1080, %v1080
        %v1132 = vpack.c.bf16 %v1081, %v1081
        %v1133 = vpack.c.bf16 %v1082, %v1082
        %v1134 = vpack.c.bf16 %v1083, %v1083
        %1135 = vst [vmem:[#allocation2] sm:$0xff] 0.0
        %1136 = vst [vmem:[#allocation2 + $0x8] sm:$0xff] 0.0
        %1137 = vst [vmem:[#allocation2 + $0x10] sm:$0xff] 0.0
        %1138 = vst [vmem:[#allocation2 + $0x18] sm:$0xff] 0.0
        %1139 = vst [vmem:[#allocation2 + $0x20] sm:$0xff] 0.0
        %1140 = vst [vmem:[#allocation2 + $0x28] sm:$0xff] 0.0
        %1141 = vst [vmem:[#allocation2 + $0x30] sm:$0xff] 0.0
        %1142 = vst [vmem:[#allocation2 + $0x38] sm:$0xff] 0.0
        %v1143 = vld [vmem:[#allocation2] sm:$0xff]
        %v1144 = vld [vmem:[#allocation2 + $0x8] sm:$0xff]
        %v1145 = vld [vmem:[#allocation2 + $0x10] sm:$0xff]
        %v1146 = vld [vmem:[#allocation2 + $0x18] sm:$0xff]
        %v1147 = vld [vmem:[#allocation2 + $0x20] sm:$0xff]
        %v1148 = vld [vmem:[#allocation2 + $0x28] sm:$0xff]
        %v1149 = vld [vmem:[#allocation2 + $0x30] sm:$0xff]
        %v1150 = vld [vmem:[#allocation2 + $0x38] sm:$0xff]
        %v1151 = vld [vmem:[%s694] sm:$0xf]
        %v1152 = vld [vmem:[%s694 + $0x4] sm:$0xf]
        %v1153 = vld [vmem:[%s694 + $0x8] sm:$0xf]
        %v1154 = vld [vmem:[%s694 + $0xc] sm:$0xf]
        %v1155 = vld [vmem:[%s694 + $0x10] sm:$0xf]
        %v1156 = vld [vmem:[%s694 + $0x14] sm:$0xf]
        %v1157 = vld [vmem:[%s694 + $0x18] sm:$0xf]
        %v1158 = vld [vmem:[%s694 + $0x1c] sm:$0xf]
        %v1159 = vld [vmem:[%s694 + $0x20] sm:$0xf]
        %v1160 = vld [vmem:[%s694 + $0x24] sm:$0xf]
        %v1161 = vld [vmem:[%s694 + $0x28] sm:$0xf]
        %v1162 = vld [vmem:[%s694 + $0x2c] sm:$0xf]
        %v1163 = vld [vmem:[%s694 + $0x30] sm:$0xf]
        %v1164 = vld [vmem:[%s694 + $0x34] sm:$0xf]
        %v1165 = vld [vmem:[%s694 + $0x38] sm:$0xf]
        %v1166 = vld [vmem:[%s694 + $0x3c] sm:$0xf]
        %v1175 = vunpack.c.l.b16 %v1084
        %v1176 = vunpack.c.l.b16 %v1086
        %v1177 = vunpack.c.l.b16 %v1088
        %v1178 = vunpack.c.l.b16 %v1090
        %v1179 = vunpack.c.l.b16 %v1092
        %v1180 = vunpack.c.l.b16 %v1094
        %v1181 = vunpack.c.l.b16 %v1096
        %v1182 = vunpack.c.l.b16 %v1098
        %v1183 = vpack.c.b16 %v1176, %v1175
        %v1184 = vpack.c.b16 %v1178, %v1177
        %v1185 = vpack.c.b16 %v1180, %v1179
        %v1186 = vpack.c.b16 %v1182, %v1181
        %v1207 = vunpack.c.l.b16 %v1151
        %v1208 = vunpack.c.l.b16 %v1152
        %v1209 = vunpack.c.l.b16 %v1153
        %v1210 = vunpack.c.l.b16 %v1154
        %v1211 = vunpack.c.l.b16 %v1155
        %v1212 = vunpack.c.l.b16 %v1156
        %v1213 = vunpack.c.l.b16 %v1157
        %v1214 = vunpack.c.l.b16 %v1158
        %v1215 = vunpack.c.l.b16 %v1159
        %v1216 = vunpack.c.l.b16 %v1160
        %v1217 = vunpack.c.l.b16 %v1161
        %v1218 = vunpack.c.l.b16 %v1162
        %v1219 = vunpack.c.l.b16 %v1163
        %v1220 = vunpack.c.l.b16 %v1164
        %v1221 = vunpack.c.l.b16 %v1165
        %v1222 = vunpack.c.l.b16 %v1166
        %v1223 = vpack.c.b16 %v1208, %v1207
        %v1224 = vpack.c.b16 %v1210, %v1209
        %v1225 = vpack.c.b16 %v1212, %v1211
        %v1226 = vpack.c.b16 %v1214, %v1213
        %v1227 = vpack.c.b16 %v1216, %v1215
        %v1228 = vpack.c.b16 %v1218, %v1217
        %v1229 = vpack.c.b16 %v1220, %v1219
        %v1230 = vpack.c.b16 %v1222, %v1221
        %1239 = vmatpush.bf16.msra.mxu0 %v1230
        %1240 = vmatpush.bf16.msra.mxu0 %v1229
        %1241 = vmatpush.bf16.msra.mxu0 %v1228
        %1242 = vmatpush.bf16.msra.mxu0 %v1227
        %1243 = vmatpush.bf16.msra.mxu0 %v1226
        %1244 = vmatpush.bf16.msra.mxu0 %v1225
        %1245 = vmatpush.bf16.msra.mxu0 %v1224
        %1246 = vmatpush.bf16.msra.mxu0 %v1223
        %1247 = vmatmul.bf16.gmra.mxu0 %v1183
        %v1248 = vpop.f32.mrf.mxu0
        %v1249 = vadd.f32 0.0, %v1248
        %v1250 = vpop.f32.mrf.mxu0
        %v1251 = vadd.f32 0.0, %v1250
        %1252 = vmatmul.bf16.gmra.mxu0 %v1184
        %v1253 = vpop.f32.mrf.mxu0
        %v1254 = vadd.f32 0.0, %v1253
        %v1255 = vpop.f32.mrf.mxu0
        %v1256 = vadd.f32 0.0, %v1255
        %1257 = vmatmul.bf16.gmra.mxu0 %v1185
        %v1258 = vpop.f32.mrf.mxu0
        %v1259 = vadd.f32 0.0, %v1258
        %v1260 = vpop.f32.mrf.mxu0
        %v1261 = vadd.f32 0.0, %v1260
        %1262 = vmatmul.bf16.gmra.mxu0 %v1186
        %v1263 = vpop.f32.mrf.mxu0
        %v1264 = vadd.f32 0.0, %v1263
        %v1265 = vpop.f32.mrf.mxu0
        %v1266 = vadd.f32 0.0, %v1265
        %1267 = vdwg.mxu0
        %v1268 = vadd.f32 %v1143, %v1249
        %v1269 = vadd.f32 %v1144, %v1251
        %v1270 = vadd.f32 %v1145, %v1254
        %v1271 = vadd.f32 %v1146, %v1256
        %v1272 = vadd.f32 %v1147, %v1259
        %v1273 = vadd.f32 %v1148, %v1261
        %v1274 = vadd.f32 %v1149, %v1264
        %v1275 = vadd.f32 %v1150, %v1266
        %1276 = vst [vmem:[#allocation2] sm:$0xff] %v1268
        %1277 = vst [vmem:[#allocation2 + $0x8] sm:$0xff] %v1269
        %1278 = vst [vmem:[#allocation2 + $0x10] sm:$0xff] %v1270
        %1279 = vst [vmem:[#allocation2 + $0x18] sm:$0xff] %v1271
        %1280 = vst [vmem:[#allocation2 + $0x20] sm:$0xff] %v1272
        %1281 = vst [vmem:[#allocation2 + $0x28] sm:$0xff] %v1273
        %1282 = vst [vmem:[#allocation2 + $0x30] sm:$0xff] %v1274
        %1283 = vst [vmem:[#allocation2 + $0x38] sm:$0xff] %v1275
        %v1284 = vld [vmem:[#allocation2] sm:$0xff]
        %v1285 = vld [vmem:[#allocation2 + $0x8] sm:$0xff]
        %v1286 = vld [vmem:[#allocation2 + $0x10] sm:$0xff]
        %v1287 = vld [vmem:[#allocation2 + $0x18] sm:$0xff]
        %v1288 = vld [vmem:[#allocation2 + $0x20] sm:$0xff]
        %v1289 = vld [vmem:[#allocation2 + $0x28] sm:$0xff]
        %v1290 = vld [vmem:[#allocation2 + $0x30] sm:$0xff]
        %v1291 = vld [vmem:[#allocation2 + $0x38] sm:$0xff]
        %s1292 = scalar_lea.vmem %s694, 64
        %v1293 = vld [vmem:[%s1292] sm:$0xf]
        %v1294 = vld [vmem:[%s1292 + $0x4] sm:$0xf]
        %v1295 = vld [vmem:[%s1292 + $0x8] sm:$0xf]
        %v1296 = vld [vmem:[%s1292 + $0xc] sm:$0xf]
        %v1297 = vld [vmem:[%s1292 + $0x10] sm:$0xf]
        %v1298 = vld [vmem:[%s1292 + $0x14] sm:$0xf]
        %v1299 = vld [vmem:[%s1292 + $0x18] sm:$0xf]
        %v1300 = vld [vmem:[%s1292 + $0x1c] sm:$0xf]
        %v1301 = vld [vmem:[%s1292 + $0x20] sm:$0xf]
        %v1302 = vld [vmem:[%s1292 + $0x24] sm:$0xf]
        %v1303 = vld [vmem:[%s1292 + $0x28] sm:$0xf]
        %v1304 = vld [vmem:[%s1292 + $0x2c] sm:$0xf]
        %v1305 = vld [vmem:[%s1292 + $0x30] sm:$0xf]
        %v1306 = vld [vmem:[%s1292 + $0x34] sm:$0xf]
        %v1307 = vld [vmem:[%s1292 + $0x38] sm:$0xf]
        %v1308 = vld [vmem:[%s1292 + $0x3c] sm:$0xf]
        %v1317 = vunpack.c.l.b16 %v1102
        %v1318 = vunpack.c.l.b16 %v1103
        %v1319 = vunpack.c.l.b16 %v1104
        %v1320 = vunpack.c.l.b16 %v1105
        %v1321 = vunpack.c.l.b16 %v1106
        %v1322 = vunpack.c.l.b16 %v1107
        %v1323 = vunpack.c.l.b16 %v1108
        %v1324 = vunpack.c.l.b16 %v1109
        %v1325 = vpack.c.b16 %v1318, %v1317
        %v1326 = vpack.c.b16 %v1320, %v1319
        %v1327 = vpack.c.b16 %v1322, %v1321
        %v1328 = vpack.c.b16 %v1324, %v1323
        %v1349 = vunpack.c.l.b16 %v1293
        %v1350 = vunpack.c.l.b16 %v1294
        %v1351 = vunpack.c.l.b16 %v1295
        %v1352 = vunpack.c.l.b16 %v1296
        %v1353 = vunpack.c.l.b16 %v1297
        %v1354 = vunpack.c.l.b16 %v1298
        %v1355 = vunpack.c.l.b16 %v1299
        %v1356 = vunpack.c.l.b16 %v1300
        %v1357 = vunpack.c.l.b16 %v1301
        %v1358 = vunpack.c.l.b16 %v1302
        %v1359 = vunpack.c.l.b16 %v1303
        %v1360 = vunpack.c.l.b16 %v1304
        %v1361 = vunpack.c.l.b16 %v1305
        %v1362 = vunpack.c.l.b16 %v1306
        %v1363 = vunpack.c.l.b16 %v1307
        %v1364 = vunpack.c.l.b16 %v1308
        %v1365 = vpack.c.b16 %v1350, %v1349
        %v1366 = vpack.c.b16 %v1352, %v1351
        %v1367 = vpack.c.b16 %v1354, %v1353
        %v1368 = vpack.c.b16 %v1356, %v1355
        %v1369 = vpack.c.b16 %v1358, %v1357
        %v1370 = vpack.c.b16 %v1360, %v1359
        %v1371 = vpack.c.b16 %v1362, %v1361
        %v1372 = vpack.c.b16 %v1364, %v1363
        %1381 = vmatpush.bf16.msra.mxu0 %v1372
        %1382 = vmatpush.bf16.msra.mxu0 %v1371
        %1383 = vmatpush.bf16.msra.mxu0 %v1370
        %1384 = vmatpush.bf16.msra.mxu0 %v1369
        %1385 = vmatpush.bf16.msra.mxu0 %v1368
        %1386 = vmatpush.bf16.msra.mxu0 %v1367
        %1387 = vmatpush.bf16.msra.mxu0 %v1366
        %1388 = vmatpush.bf16.msra.mxu0 %v1365
        %1389 = vmatmul.bf16.gmra.mxu0 %v1325
        %v1390 = vpop.f32.mrf.mxu0
        %v1391 = vadd.f32 0.0, %v1390
        %v1392 = vpop.f32.mrf.mxu0
        %v1393 = vadd.f32 0.0, %v1392
        %1394 = vmatmul.bf16.gmra.mxu0 %v1326
        %v1395 = vpop.f32.mrf.mxu0
        %v1396 = vadd.f32 0.0, %v1395
        %v1397 = vpop.f32.mrf.mxu0
        %v1398 = vadd.f32 0.0, %v1397
        %1399 = vmatmul.bf16.gmra.mxu0 %v1327
        %v1400 = vpop.f32.mrf.mxu0
        %v1401 = vadd.f32 0.0, %v1400
        %v1402 = vpop.f32.mrf.mxu0
        %v1403 = vadd.f32 0.0, %v1402
        %1404 = vmatmul.bf16.gmra.mxu0 %v1328
        %v1405 = vpop.f32.mrf.mxu0
        %v1406 = vadd.f32 0.0, %v1405
        %v1407 = vpop.f32.mrf.mxu0
        %v1408 = vadd.f32 0.0, %v1407
        %1409 = vdwg.mxu0
        %v1410 = vadd.f32 %v1284, %v1391
        %v1411 = vadd.f32 %v1285, %v1393
        %v1412 = vadd.f32 %v1286, %v1396
        %v1413 = vadd.f32 %v1287, %v1398
        %v1414 = vadd.f32 %v1288, %v1401
        %v1415 = vadd.f32 %v1289, %v1403
        %v1416 = vadd.f32 %v1290, %v1406
        %v1417 = vadd.f32 %v1291, %v1408
        %1418 = vst [vmem:[#allocation2] sm:$0xff] %v1410
        %1419 = vst [vmem:[#allocation2 + $0x8] sm:$0xff] %v1411
        %1420 = vst [vmem:[#allocation2 + $0x10] sm:$0xff] %v1412
        %1421 = vst [vmem:[#allocation2 + $0x18] sm:$0xff] %v1413
        %1422 = vst [vmem:[#allocation2 + $0x20] sm:$0xff] %v1414
        %1423 = vst [vmem:[#allocation2 + $0x28] sm:$0xff] %v1415
        %1424 = vst [vmem:[#allocation2 + $0x30] sm:$0xff] %v1416
        %1425 = vst [vmem:[#allocation2 + $0x38] sm:$0xff] %v1417
        %v1426 = vld [vmem:[#allocation2] sm:$0xff]
        %v1427 = vld [vmem:[#allocation2 + $0x8] sm:$0xff]
        %v1428 = vld [vmem:[#allocation2 + $0x10] sm:$0xff]
        %v1429 = vld [vmem:[#allocation2 + $0x18] sm:$0xff]
        %v1430 = vld [vmem:[#allocation2 + $0x20] sm:$0xff]
        %v1431 = vld [vmem:[#allocation2 + $0x28] sm:$0xff]
        %v1432 = vld [vmem:[#allocation2 + $0x30] sm:$0xff]
        %v1433 = vld [vmem:[#allocation2 + $0x38] sm:$0xff]
        %vm1434 = vsmask.f32 3328
        %vm1435 = vsmask.f32 7440
        %vm1436 = vmor %vm1434, %vm1435
        %v1438 = vshrl.u32 %v1084, 16
        %v1440 = vrot.slane %v1438, 4
        %v1441 = vshll.u32 %v1084, 16
        %v1443 = vrot.slane %v1441, 5
        %v1444 = vor.u32 %v1440, %v1443
        %v1445 = vrot.slane %v1444, 4
        %v1447 = vshll.u32 %v1085, 16
        %v1449 = vrot.slane %v1447, 5
        %v1450 = vsel %vm1436, %v1445, %v1449
        %v1452 = vshrl.u32 %v1086, 16
        %v1454 = vrot.slane %v1452, 4
        %v1455 = vshll.u32 %v1086, 16
        %v1457 = vrot.slane %v1455, 5
        %v1458 = vor.u32 %v1454, %v1457
        %v1459 = vrot.slane %v1458, 4
        %v1461 = vshll.u32 %v1087, 16
        %v1463 = vrot.slane %v1461, 5
        %v1464 = vsel %vm1436, %v1459, %v1463
        %v1466 = vshrl.u32 %v1088, 16
        %v1468 = vrot.slane %v1466, 4
        %v1469 = vshll.u32 %v1088, 16
        %v1471 = vrot.slane %v1469, 5
        %v1472 = vor.u32 %v1468, %v1471
        %v1473 = vrot.slane %v1472, 4
        %v1475 = vshll.u32 %v1089, 16
        %v1477 = vrot.slane %v1475, 5
        %v1478 = vsel %vm1436, %v1473, %v1477
        %v1480 = vshrl.u32 %v1090, 16
        %v1482 = vrot.slane %v1480, 4
        %v1483 = vshll.u32 %v1090, 16
        %v1485 = vrot.slane %v1483, 5
        %v1486 = vor.u32 %v1482, %v1485
        %v1487 = vrot.slane %v1486, 4
        %v1489 = vshll.u32 %v1091, 16
        %v1491 = vrot.slane %v1489, 5
        %v1492 = vsel %vm1436, %v1487, %v1491
        %v1494 = vshrl.u32 %v1092, 16
        %v1496 = vrot.slane %v1494, 4
        %v1497 = vshll.u32 %v1092, 16
        %v1499 = vrot.slane %v1497, 5
        %v1500 = vor.u32 %v1496, %v1499
        %v1501 = vrot.slane %v1500, 4
        %v1503 = vshll.u32 %v1093, 16
        %v1505 = vrot.slane %v1503, 5
        %v1506 = vsel %vm1436, %v1501, %v1505
        %v1508 = vshrl.u32 %v1094, 16
        %v1510 = vrot.slane %v1508, 4
        %v1511 = vshll.u32 %v1094, 16
        %v1513 = vrot.slane %v1511, 5
        %v1514 = vor.u32 %v1510, %v1513
        %v1515 = vrot.slane %v1514, 4
        %v1517 = vshll.u32 %v1095, 16
        %v1519 = vrot.slane %v1517, 5
        %v1520 = vsel %vm1436, %v1515, %v1519
        %v1522 = vshrl.u32 %v1096, 16
        %v1524 = vrot.slane %v1522, 4
        %v1525 = vshll.u32 %v1096, 16
        %v1527 = vrot.slane %v1525, 5
        %v1528 = vor.u32 %v1524, %v1527
        %v1529 = vrot.slane %v1528, 4
        %v1531 = vshll.u32 %v1097, 16
        %v1533 = vrot.slane %v1531, 5
        %v1534 = vsel %vm1436, %v1529, %v1533
        %v1536 = vshrl.u32 %v1098, 16
        %v1538 = vrot.slane %v1536, 4
        %v1539 = vshll.u32 %v1098, 16
        %v1541 = vrot.slane %v1539, 5
        %v1542 = vor.u32 %v1538, %v1541
        %v1543 = vrot.slane %v1542, 4
        %v1545 = vshll.u32 %v1099, 16
        %v1547 = vrot.slane %v1545, 5
        %v1548 = vsel %vm1436, %v1543, %v1547
        %s1549 = scalar_lea.vmem %s694, 128
        %v1550 = vld [vmem:[%s1549] sm:$0xf]
        %v1551 = vld [vmem:[%s1549 + $0x4] sm:$0xf]
        %v1552 = vld [vmem:[%s1549 + $0x8] sm:$0xf]
        %v1553 = vld [vmem:[%s1549 + $0xc] sm:$0xf]
        %v1554 = vld [vmem:[%s1549 + $0x10] sm:$0xf]
        %v1555 = vld [vmem:[%s1549 + $0x14] sm:$0xf]
        %v1556 = vld [vmem:[%s1549 + $0x18] sm:$0xf]
        %v1557 = vld [vmem:[%s1549 + $0x1c] sm:$0xf]
        %v1558 = vld [vmem:[%s1549 + $0x20] sm:$0xf]
        %v1559 = vld [vmem:[%s1549 + $0x24] sm:$0xf]
        %v1560 = vld [vmem:[%s1549 + $0x28] sm:$0xf]
        %v1561 = vld [vmem:[%s1549 + $0x2c] sm:$0xf]
        %v1562 = vld [vmem:[%s1549 + $0x30] sm:$0xf]
        %v1563 = vld [vmem:[%s1549 + $0x34] sm:$0xf]
        %v1564 = vld [vmem:[%s1549 + $0x38] sm:$0xf]
        %v1565 = vld [vmem:[%s1549 + $0x3c] sm:$0xf]
        %v1566 = vunpack.c.l.b16 %v1450
        %v1567 = vunpack.c.l.b16 %v1464
        %v1568 = vunpack.c.l.b16 %v1478
        %v1569 = vunpack.c.l.b16 %v1492
        %v1570 = vunpack.c.l.b16 %v1506
        %v1571 = vunpack.c.l.b16 %v1520
        %v1572 = vunpack.c.l.b16 %v1534
        %v1573 = vunpack.c.l.b16 %v1548
        %v1574 = vpack.c.b16 %v1567, %v1566
        %v1575 = vpack.c.b16 %v1569, %v1568
        %v1576 = vpack.c.b16 %v1571, %v1570
        %v1577 = vpack.c.b16 %v1573, %v1572
        %v1598 = vunpack.c.l.b16 %v1550
        %v1599 = vunpack.c.l.b16 %v1551
        %v1600 = vunpack.c.l.b16 %v1552
        %v1601 = vunpack.c.l.b16 %v1553
        %v1602 = vunpack.c.l.b16 %v1554
        %v1603 = vunpack.c.l.b16 %v1555
        %v1604 = vunpack.c.l.b16 %v1556
        %v1605 = vunpack.c.l.b16 %v1557
        %v1606 = vunpack.c.l.b16 %v1558
        %v1607 = vunpack.c.l.b16 %v1559
        %v1608 = vunpack.c.l.b16 %v1560
        %v1609 = vunpack.c.l.b16 %v1561
        %v1610 = vunpack.c.l.b16 %v1562
        %v1611 = vunpack.c.l.b16 %v1563
        %v1612 = vunpack.c.l.b16 %v1564
        %v1613 = vunpack.c.l.b16 %v1565
        %v1614 = vpack.c.b16 %v1599, %v1598
        %v1615 = vpack.c.b16 %v1601, %v1600
        %v1616 = vpack.c.b16 %v1603, %v1602
        %v1617 = vpack.c.b16 %v1605, %v1604
        %v1618 = vpack.c.b16 %v1607, %v1606
        %v1619 = vpack.c.b16 %v1609, %v1608
        %v1620 = vpack.c.b16 %v1611, %v1610
        %v1621 = vpack.c.b16 %v1613, %v1612
        %1630 = vmatpush.bf16.msra.mxu0 %v1621
        %1631 = vmatpush.bf16.msra.mxu0 %v1620
        %1632 = vmatpush.bf16.msra.mxu0 %v1619
        %1633 = vmatpush.bf16.msra.mxu0 %v1618
        %1634 = vmatpush.bf16.msra.mxu0 %v1617
        %1635 = vmatpush.bf16.msra.mxu0 %v1616
        %1636 = vmatpush.bf16.msra.mxu0 %v1615
        %1637 = vmatpush.bf16.msra.mxu0 %v1614
        %1638 = vmatmul.bf16.gmra.mxu0 %v1574
        %v1639 = vpop.f32.mrf.mxu0
        %v1640 = vadd.f32 0.0, %v1639
        %v1641 = vpop.f32.mrf.mxu0
        %v1642 = vadd.f32 0.0, %v1641
        %1643 = vmatmul.bf16.gmra.mxu0 %v1575
        %v1644 = vpop.f32.mrf.mxu0
        %v1645 = vadd.f32 0.0, %v1644
        %v1646 = vpop.f32.mrf.mxu0
        %v1647 = vadd.f32 0.0, %v1646
        %1648 = vmatmul.bf16.gmra.mxu0 %v1576
        %v1649 = vpop.f32.mrf.mxu0
        %v1650 = vadd.f32 0.0, %v1649
        %v1651 = vpop.f32.mrf.mxu0
        %v1652 = vadd.f32 0.0, %v1651
        %1653 = vmatmul.bf16.gmra.mxu0 %v1577
        %v1654 = vpop.f32.mrf.mxu0
        %v1655 = vadd.f32 0.0, %v1654
        %v1656 = vpop.f32.mrf.mxu0
        %v1657 = vadd.f32 0.0, %v1656
        %1658 = vdwg.mxu0
        %v1659 = vadd.f32 %v1426, %v1640
        %v1660 = vadd.f32 %v1427, %v1642
        %v1661 = vadd.f32 %v1428, %v1645
        %v1662 = vadd.f32 %v1429, %v1647
        %v1663 = vadd.f32 %v1430, %v1650
        %v1664 = vadd.f32 %v1431, %v1652
        %v1665 = vadd.f32 %v1432, %v1655
        %v1666 = vadd.f32 %v1433, %v1657
        %1667 = vst [vmem:[#allocation2] sm:$0xff] %v1659
        %1668 = vst [vmem:[#allocation2 + $0x8] sm:$0xff] %v1660
        %1669 = vst [vmem:[#allocation2 + $0x10] sm:$0xff] %v1661
        %1670 = vst [vmem:[#allocation2 + $0x18] sm:$0xff] %v1662
        %1671 = vst [vmem:[#allocation2 + $0x20] sm:$0xff] %v1663
        %1672 = vst [vmem:[#allocation2 + $0x28] sm:$0xff] %v1664
        %1673 = vst [vmem:[#allocation2 + $0x30] sm:$0xff] %v1665
        %1674 = vst [vmem:[#allocation2 + $0x38] sm:$0xff] %v1666
        %v1675 = vld [vmem:[#allocation2] sm:$0xff]
        %v1676 = vld [vmem:[#allocation2 + $0x8] sm:$0xff]
        %v1677 = vld [vmem:[#allocation2 + $0x10] sm:$0xff]
        %v1678 = vld [vmem:[#allocation2 + $0x18] sm:$0xff]
        %v1679 = vld [vmem:[#allocation2 + $0x20] sm:$0xff]
        %v1680 = vld [vmem:[#allocation2 + $0x28] sm:$0xff]
        %v1681 = vld [vmem:[#allocation2 + $0x30] sm:$0xff]
        %v1682 = vld [vmem:[#allocation2 + $0x38] sm:$0xff]
        %s1683 = scalar_lea.vmem %s694, 192
        %v1684 = vld [vmem:[%s1683] sm:$0xf]
        %v1685 = vld [vmem:[%s1683 + $0x4] sm:$0xf]
        %v1686 = vld [vmem:[%s1683 + $0x8] sm:$0xf]
        %v1687 = vld [vmem:[%s1683 + $0xc] sm:$0xf]
        %v1688 = vld [vmem:[%s1683 + $0x10] sm:$0xf]
        %v1689 = vld [vmem:[%s1683 + $0x14] sm:$0xf]
        %v1690 = vld [vmem:[%s1683 + $0x18] sm:$0xf]
        %v1691 = vld [vmem:[%s1683 + $0x1c] sm:$0xf]
        %v1692 = vld [vmem:[%s1683 + $0x20] sm:$0xf]
        %v1693 = vld [vmem:[%s1683 + $0x24] sm:$0xf]
        %v1694 = vld [vmem:[%s1683 + $0x28] sm:$0xf]
        %v1695 = vld [vmem:[%s1683 + $0x2c] sm:$0xf]
        %v1696 = vld [vmem:[%s1683 + $0x30] sm:$0xf]
        %v1697 = vld [vmem:[%s1683 + $0x34] sm:$0xf]
        %v1698 = vld [vmem:[%s1683 + $0x38] sm:$0xf]
        %v1699 = vld [vmem:[%s1683 + $0x3c] sm:$0xf]
        %v1708 = vunpack.c.l.b16 %v1111
        %v1709 = vunpack.c.l.b16 %v1113
        %v1710 = vunpack.c.l.b16 %v1115
        %v1711 = vunpack.c.l.b16 %v1117
        %v1712 = vunpack.c.l.b16 %v1119
        %v1713 = vunpack.c.l.b16 %v1121
        %v1714 = vunpack.c.l.b16 %v1123
        %v1715 = vunpack.c.l.b16 %v1125
        %v1716 = vpack.c.b16 %v1709, %v1708
        %v1717 = vpack.c.b16 %v1711, %v1710
        %v1718 = vpack.c.b16 %v1713, %v1712
        %v1719 = vpack.c.b16 %v1715, %v1714
        %v1740 = vunpack.c.l.b16 %v1684
        %v1741 = vunpack.c.l.b16 %v1685
        %v1742 = vunpack.c.l.b16 %v1686
        %v1743 = vunpack.c.l.b16 %v1687
        %v1744 = vunpack.c.l.b16 %v1688
        %v1745 = vunpack.c.l.b16 %v1689
        %v1746 = vunpack.c.l.b16 %v1690
        %v1747 = vunpack.c.l.b16 %v1691
        %v1748 = vunpack.c.l.b16 %v1692
        %v1749 = vunpack.c.l.b16 %v1693
        %v1750 = vunpack.c.l.b16 %v1694
        %v1751 = vunpack.c.l.b16 %v1695
        %v1752 = vunpack.c.l.b16 %v1696
        %v1753 = vunpack.c.l.b16 %v1697
        %v1754 = vunpack.c.l.b16 %v1698
        %v1755 = vunpack.c.l.b16 %v1699
        %v1756 = vpack.c.b16 %v1741, %v1740
        %v1757 = vpack.c.b16 %v1743, %v1742
        %v1758 = vpack.c.b16 %v1745, %v1744
        %v1759 = vpack.c.b16 %v1747, %v1746
        %v1760 = vpack.c.b16 %v1749, %v1748
        %v1761 = vpack.c.b16 %v1751, %v1750
        %v1762 = vpack.c.b16 %v1753, %v1752
        %v1763 = vpack.c.b16 %v1755, %v1754
        %1772 = vmatpush.bf16.msra.mxu0 %v1763
        %1773 = vmatpush.bf16.msra.mxu0 %v1762
        %1774 = vmatpush.bf16.msra.mxu0 %v1761
        %1775 = vmatpush.bf16.msra.mxu0 %v1760
        %1776 = vmatpush.bf16.msra.mxu0 %v1759
        %1777 = vmatpush.bf16.msra.mxu0 %v1758
        %1778 = vmatpush.bf16.msra.mxu0 %v1757
        %1779 = vmatpush.bf16.msra.mxu0 %v1756
        %1780 = vmatmul.bf16.gmra.mxu0 %v1716
        %v1781 = vpop.f32.mrf.mxu0
        %v1782 = vadd.f32 0.0, %v1781
        %v1783 = vpop.f32.mrf.mxu0
        %v1784 = vadd.f32 0.0, %v1783
        %1785 = vmatmul.bf16.gmra.mxu0 %v1717
        %v1786 = vpop.f32.mrf.mxu0
        %v1787 = vadd.f32 0.0, %v1786
        %v1788 = vpop.f32.mrf.mxu0
        %v1789 = vadd.f32 0.0, %v1788
        %1790 = vmatmul.bf16.gmra.mxu0 %v1718
        %v1791 = vpop.f32.mrf.mxu0
        %v1792 = vadd.f32 0.0, %v1791
        %v1793 = vpop.f32.mrf.mxu0
        %v1794 = vadd.f32 0.0, %v1793
        %1795 = vmatmul.bf16.gmra.mxu0 %v1719
        %v1796 = vpop.f32.mrf.mxu0
        %v1797 = vadd.f32 0.0, %v1796
        %v1798 = vpop.f32.mrf.mxu0
        %v1799 = vadd.f32 0.0, %v1798
        %1800 = vdwg.mxu0
        %v1801 = vadd.f32 %v1675, %v1782
        %v1802 = vadd.f32 %v1676, %v1784
        %v1803 = vadd.f32 %v1677, %v1787
        %v1804 = vadd.f32 %v1678, %v1789
        %v1805 = vadd.f32 %v1679, %v1792
        %v1806 = vadd.f32 %v1680, %v1794
        %v1807 = vadd.f32 %v1681, %v1797
        %v1808 = vadd.f32 %v1682, %v1799
        %1809 = vst [vmem:[#allocation2] sm:$0xff] %v1801
        %1810 = vst [vmem:[#allocation2 + $0x8] sm:$0xff] %v1802
        %1811 = vst [vmem:[#allocation2 + $0x10] sm:$0xff] %v1803
        %1812 = vst [vmem:[#allocation2 + $0x18] sm:$0xff] %v1804
        %1813 = vst [vmem:[#allocation2 + $0x20] sm:$0xff] %v1805
        %1814 = vst [vmem:[#allocation2 + $0x28] sm:$0xff] %v1806
        %1815 = vst [vmem:[#allocation2 + $0x30] sm:$0xff] %v1807
        %1816 = vst [vmem:[#allocation2 + $0x38] sm:$0xff] %v1808
        %v1817 = vld [vmem:[#allocation2] sm:$0xff]
        %v1818 = vld [vmem:[#allocation2 + $0x8] sm:$0xff]
        %v1819 = vld [vmem:[#allocation2 + $0x10] sm:$0xff]
        %v1820 = vld [vmem:[#allocation2 + $0x18] sm:$0xff]
        %v1821 = vld [vmem:[#allocation2 + $0x20] sm:$0xff]
        %v1822 = vld [vmem:[#allocation2 + $0x28] sm:$0xff]
        %v1823 = vld [vmem:[#allocation2 + $0x30] sm:$0xff]
        %v1824 = vld [vmem:[#allocation2 + $0x38] sm:$0xff]
        %s1825 = scalar_lea.vmem %s694, 256
        %v1826 = vld [vmem:[%s1825] sm:$0xf]
        %v1827 = vld [vmem:[%s1825 + $0x4] sm:$0xf]
        %v1828 = vld [vmem:[%s1825 + $0x8] sm:$0xf]
        %v1829 = vld [vmem:[%s1825 + $0xc] sm:$0xf]
        %v1830 = vld [vmem:[%s1825 + $0x10] sm:$0xf]
        %v1831 = vld [vmem:[%s1825 + $0x14] sm:$0xf]
        %v1832 = vld [vmem:[%s1825 + $0x18] sm:$0xf]
        %v1833 = vld [vmem:[%s1825 + $0x1c] sm:$0xf]
        %v1834 = vld [vmem:[%s1825 + $0x20] sm:$0xf]
        %v1835 = vld [vmem:[%s1825 + $0x24] sm:$0xf]
        %v1836 = vld [vmem:[%s1825 + $0x28] sm:$0xf]
        %v1837 = vld [vmem:[%s1825 + $0x2c] sm:$0xf]
        %v1838 = vld [vmem:[%s1825 + $0x30] sm:$0xf]
        %v1839 = vld [vmem:[%s1825 + $0x34] sm:$0xf]
        %v1840 = vld [vmem:[%s1825 + $0x38] sm:$0xf]
        %v1841 = vld [vmem:[%s1825 + $0x3c] sm:$0xf]
        %v1850 = vunpack.c.l.b16 %v1127
        %v1851 = vunpack.c.l.b16 %v1128
        %v1852 = vunpack.c.l.b16 %v1129
        %v1853 = vunpack.c.l.b16 %v1130
        %v1854 = vunpack.c.l.b16 %v1131
        %v1855 = vunpack.c.l.b16 %v1132
        %v1856 = vunpack.c.l.b16 %v1133
        %v1857 = vunpack.c.l.b16 %v1134
        %v1858 = vpack.c.b16 %v1851, %v1850
        %v1859 = vpack.c.b16 %v1853, %v1852
        %v1860 = vpack.c.b16 %v1855, %v1854
        %v1861 = vpack.c.b16 %v1857, %v1856
        %v1882 = vunpack.c.l.b16 %v1826
        %v1883 = vunpack.c.l.b16 %v1827
        %v1884 = vunpack.c.l.b16 %v1828
        %v1885 = vunpack.c.l.b16 %v1829
        %v1886 = vunpack.c.l.b16 %v1830
        %v1887 = vunpack.c.l.b16 %v1831
        %v1888 = vunpack.c.l.b16 %v1832
        %v1889 = vunpack.c.l.b16 %v1833
        %v1890 = vunpack.c.l.b16 %v1834
        %v1891 = vunpack.c.l.b16 %v1835
        %v1892 = vunpack.c.l.b16 %v1836
        %v1893 = vunpack.c.l.b16 %v1837
        %v1894 = vunpack.c.l.b16 %v1838
        %v1895 = vunpack.c.l.b16 %v1839
        %v1896 = vunpack.c.l.b16 %v1840
        %v1897 = vunpack.c.l.b16 %v1841
        %v1898 = vpack.c.b16 %v1883, %v1882
        %v1899 = vpack.c.b16 %v1885, %v1884
        %v1900 = vpack.c.b16 %v1887, %v1886
        %v1901 = vpack.c.b16 %v1889, %v1888
        %v1902 = vpack.c.b16 %v1891, %v1890
        %v1903 = vpack.c.b16 %v1893, %v1892
        %v1904 = vpack.c.b16 %v1895, %v1894
        %v1905 = vpack.c.b16 %v1897, %v1896
        %1914 = vmatpush.bf16.msra.mxu0 %v1905
        %1915 = vmatpush.bf16.msra.mxu0 %v1904
        %1916 = vmatpush.bf16.msra.mxu0 %v1903
        %1917 = vmatpush.bf16.msra.mxu0 %v1902
        %1918 = vmatpush.bf16.msra.mxu0 %v1901
        %1919 = vmatpush.bf16.msra.mxu0 %v1900
        %1920 = vmatpush.bf16.msra.mxu0 %v1899
        %1921 = vmatpush.bf16.msra.mxu0 %v1898
        %1922 = vmatmul.bf16.gmra.mxu0 %v1858
        %v1923 = vpop.f32.mrf.mxu0
        %v1924 = vadd.f32 0.0, %v1923
        %v1925 = vpop.f32.mrf.mxu0
        %v1926 = vadd.f32 0.0, %v1925
        %1927 = vmatmul.bf16.gmra.mxu0 %v1859
        %v1928 = vpop.f32.mrf.mxu0
        %v1929 = vadd.f32 0.0, %v1928
        %v1930 = vpop.f32.mrf.mxu0
        %v1931 = vadd.f32 0.0, %v1930
        %1932 = vmatmul.bf16.gmra.mxu0 %v1860
        %v1933 = vpop.f32.mrf.mxu0
        %v1934 = vadd.f32 0.0, %v1933
        %v1935 = vpop.f32.mrf.mxu0
        %v1936 = vadd.f32 0.0, %v1935
        %1937 = vmatmul.bf16.gmra.mxu0 %v1861
        %v1938 = vpop.f32.mrf.mxu0
        %v1939 = vadd.f32 0.0, %v1938
        %v1940 = vpop.f32.mrf.mxu0
        %v1941 = vadd.f32 0.0, %v1940
        %1942 = vdwg.mxu0
        %v1943 = vadd.f32 %v1817, %v1924
        %v1944 = vadd.f32 %v1818, %v1926
        %v1945 = vadd.f32 %v1819, %v1929
        %v1946 = vadd.f32 %v1820, %v1931
        %v1947 = vadd.f32 %v1821, %v1934
        %v1948 = vadd.f32 %v1822, %v1936
        %v1949 = vadd.f32 %v1823, %v1939
        %v1950 = vadd.f32 %v1824, %v1941
        %1951 = vst [vmem:[#allocation2] sm:$0xff] %v1943
        %1952 = vst [vmem:[#allocation2 + $0x8] sm:$0xff] %v1944
        %1953 = vst [vmem:[#allocation2 + $0x10] sm:$0xff] %v1945
        %1954 = vst [vmem:[#allocation2 + $0x18] sm:$0xff] %v1946
        %1955 = vst [vmem:[#allocation2 + $0x20] sm:$0xff] %v1947
        %1956 = vst [vmem:[#allocation2 + $0x28] sm:$0xff] %v1948
        %1957 = vst [vmem:[#allocation2 + $0x30] sm:$0xff] %v1949
        %1958 = vst [vmem:[#allocation2 + $0x38] sm:$0xff] %v1950
        %v1959 = vld [vmem:[#allocation2] sm:$0xff]
        %v1960 = vld [vmem:[#allocation2 + $0x8] sm:$0xff]
        %v1961 = vld [vmem:[#allocation2 + $0x10] sm:$0xff]
        %v1962 = vld [vmem:[#allocation2 + $0x18] sm:$0xff]
        %v1963 = vld [vmem:[#allocation2 + $0x20] sm:$0xff]
        %v1964 = vld [vmem:[#allocation2 + $0x28] sm:$0xff]
        %v1965 = vld [vmem:[#allocation2 + $0x30] sm:$0xff]
        %v1966 = vld [vmem:[#allocation2 + $0x38] sm:$0xff]
        %v1968 = vshrl.u32 %v1111, 16
        %v1970 = vrot.slane %v1968, 4
        %v1971 = vshll.u32 %v1111, 16
        %v1973 = vrot.slane %v1971, 5
        %v1974 = vor.u32 %v1970, %v1973
        %v1975 = vrot.slane %v1974, 4
        %v1977 = vshll.u32 %v1112, 16
        %v1979 = vrot.slane %v1977, 5
        %v1980 = vsel %vm1436, %v1975, %v1979
        %v1982 = vshrl.u32 %v1113, 16
        %v1984 = vrot.slane %v1982, 4
        %v1985 = vshll.u32 %v1113, 16
        %v1987 = vrot.slane %v1985, 5
        %v1988 = vor.u32 %v1984, %v1987
        %v1989 = vrot.slane %v1988, 4
        %v1991 = vshll.u32 %v1114, 16
        %v1993 = vrot.slane %v1991, 5
        %v1994 = vsel %vm1436, %v1989, %v1993
        %v1996 = vshrl.u32 %v1115, 16
        %v1998 = vrot.slane %v1996, 4
        %v1999 = vshll.u32 %v1115, 16
        %v2001 = vrot.slane %v1999, 5
        %v2002 = vor.u32 %v1998, %v2001
        %v2003 = vrot.slane %v2002, 4
        %v2005 = vshll.u32 %v1116, 16
        %v2007 = vrot.slane %v2005, 5
        %v2008 = vsel %vm1436, %v2003, %v2007
        %v2010 = vshrl.u32 %v1117, 16
        %v2012 = vrot.slane %v2010, 4
        %v2013 = vshll.u32 %v1117, 16
        %v2015 = vrot.slane %v2013, 5
        %v2016 = vor.u32 %v2012, %v2015
        %v2017 = vrot.slane %v2016, 4
        %v2019 = vshll.u32 %v1118, 16
        %v2021 = vrot.slane %v2019, 5
        %v2022 = vsel %vm1436, %v2017, %v2021
        %v2024 = vshrl.u32 %v1119, 16
        %v2026 = vrot.slane %v2024, 4
        %v2027 = vshll.u32 %v1119, 16
        %v2029 = vrot.slane %v2027, 5
        %v2030 = vor.u32 %v2026, %v2029
        %v2031 = vrot.slane %v2030, 4
        %v2033 = vshll.u32 %v1120, 16
        %v2035 = vrot.slane %v2033, 5
        %v2036 = vsel %vm1436, %v2031, %v2035
        %v2038 = vshrl.u32 %v1121, 16
        %v2040 = vrot.slane %v2038, 4
        %v2041 = vshll.u32 %v1121, 16
        %v2043 = vrot.slane %v2041, 5
        %v2044 = vor.u32 %v2040, %v2043
        %v2045 = vrot.slane %v2044, 4
        %v2047 = vshll.u32 %v1122, 16
        %v2049 = vrot.slane %v2047, 5
        %v2050 = vsel %vm1436, %v2045, %v2049
        %v2052 = vshrl.u32 %v1123, 16
        %v2054 = vrot.slane %v2052, 4
        %v2055 = vshll.u32 %v1123, 16
        %v2057 = vrot.slane %v2055, 5
        %v2058 = vor.u32 %v2054, %v2057
        %v2059 = vrot.slane %v2058, 4
        %v2061 = vshll.u32 %v1124, 16
        %v2063 = vrot.slane %v2061, 5
        %v2064 = vsel %vm1436, %v2059, %v2063
        %v2066 = vshrl.u32 %v1125, 16
        %v2068 = vrot.slane %v2066, 4
        %v2069 = vshll.u32 %v1125, 16
        %v2071 = vrot.slane %v2069, 5
        %v2072 = vor.u32 %v2068, %v2071
        %v2073 = vrot.slane %v2072, 4
        %v2075 = vshll.u32 %v1126, 16
        %v2077 = vrot.slane %v2075, 5
        %v2078 = vsel %vm1436, %v2073, %v2077
        %s2079 = scalar_lea.vmem %s694, 320
        %v2080 = vld [vmem:[%s2079] sm:$0xf]
        %v2081 = vld [vmem:[%s2079 + $0x4] sm:$0xf]
        %v2082 = vld [vmem:[%s2079 + $0x8] sm:$0xf]
        %v2083 = vld [vmem:[%s2079 + $0xc] sm:$0xf]
        %v2084 = vld [vmem:[%s2079 + $0x10] sm:$0xf]
        %v2085 = vld [vmem:[%s2079 + $0x14] sm:$0xf]
        %v2086 = vld [vmem:[%s2079 + $0x18] sm:$0xf]
        %v2087 = vld [vmem:[%s2079 + $0x1c] sm:$0xf]
        %v2088 = vld [vmem:[%s2079 + $0x20] sm:$0xf]
        %v2089 = vld [vmem:[%s2079 + $0x24] sm:$0xf]
        %v2090 = vld [vmem:[%s2079 + $0x28] sm:$0xf]
        %v2091 = vld [vmem:[%s2079 + $0x2c] sm:$0xf]
        %v2092 = vld [vmem:[%s2079 + $0x30] sm:$0xf]
        %v2093 = vld [vmem:[%s2079 + $0x34] sm:$0xf]
        %v2094 = vld [vmem:[%s2079 + $0x38] sm:$0xf]
        %v2095 = vld [vmem:[%s2079 + $0x3c] sm:$0xf]
        %v2096 = vunpack.c.l.b16 %v1980
        %v2097 = vunpack.c.l.b16 %v1994
        %v2098 = vunpack.c.l.b16 %v2008
        %v2099 = vunpack.c.l.b16 %v2022
        %v2100 = vunpack.c.l.b16 %v2036
        %v2101 = vunpack.c.l.b16 %v2050
        %v2102 = vunpack.c.l.b16 %v2064
        %v2103 = vunpack.c.l.b16 %v2078
        %v2104 = vpack.c.b16 %v2097, %v2096
        %v2105 = vpack.c.b16 %v2099, %v2098
        %v2106 = vpack.c.b16 %v2101, %v2100
        %v2107 = vpack.c.b16 %v2103, %v2102
        %v2128 = vunpack.c.l.b16 %v2080
        %v2129 = vunpack.c.l.b16 %v2081
        %v2130 = vunpack.c.l.b16 %v2082
        %v2131 = vunpack.c.l.b16 %v2083
        %v2132 = vunpack.c.l.b16 %v2084
        %v2133 = vunpack.c.l.b16 %v2085
        %v2134 = vunpack.c.l.b16 %v2086
        %v2135 = vunpack.c.l.b16 %v2087
        %v2136 = vunpack.c.l.b16 %v2088
        %v2137 = vunpack.c.l.b16 %v2089
        %v2138 = vunpack.c.l.b16 %v2090
        %v2139 = vunpack.c.l.b16 %v2091
        %v2140 = vunpack.c.l.b16 %v2092
        %v2141 = vunpack.c.l.b16 %v2093
        %v2142 = vunpack.c.l.b16 %v2094
        %v2143 = vunpack.c.l.b16 %v2095
        %v2144 = vpack.c.b16 %v2129, %v2128
        %v2145 = vpack.c.b16 %v2131, %v2130
        %v2146 = vpack.c.b16 %v2133, %v2132
        %v2147 = vpack.c.b16 %v2135, %v2134
        %v2148 = vpack.c.b16 %v2137, %v2136
        %v2149 = vpack.c.b16 %v2139, %v2138
        %v2150 = vpack.c.b16 %v2141, %v2140
        %v2151 = vpack.c.b16 %v2143, %v2142
        %2160 = vmatpush.bf16.msra.mxu0 %v2151
        %2161 = vmatpush.bf16.msra.mxu0 %v2150
        %2162 = vmatpush.bf16.msra.mxu0 %v2149
        %2163 = vmatpush.bf16.msra.mxu0 %v2148
        %2164 = vmatpush.bf16.msra.mxu0 %v2147
        %2165 = vmatpush.bf16.msra.mxu0 %v2146
        %2166 = vmatpush.bf16.msra.mxu0 %v2145
        %2167 = vmatpush.bf16.msra.mxu0 %v2144
        %2168 = vmatmul.bf16.gmra.mxu0 %v2104
        %v2169 = vpop.f32.mrf.mxu0
        %v2170 = vadd.f32 0.0, %v2169
        %v2171 = vpop.f32.mrf.mxu0
        %v2172 = vadd.f32 0.0, %v2171
        %2173 = vmatmul.bf16.gmra.mxu0 %v2105
        %v2174 = vpop.f32.mrf.mxu0
        %v2175 = vadd.f32 0.0, %v2174
        %v2176 = vpop.f32.mrf.mxu0
        %v2177 = vadd.f32 0.0, %v2176
        %2178 = vmatmul.bf16.gmra.mxu0 %v2106
        %v2179 = vpop.f32.mrf.mxu0
        %v2180 = vadd.f32 0.0, %v2179
        %v2181 = vpop.f32.mrf.mxu0
        %v2182 = vadd.f32 0.0, %v2181
        %2183 = vmatmul.bf16.gmra.mxu0 %v2107
        %v2184 = vpop.f32.mrf.mxu0
        %v2185 = vadd.f32 0.0, %v2184
        %v2186 = vpop.f32.mrf.mxu0
        %v2187 = vadd.f32 0.0, %v2186
        %2188 = vdwg.mxu0
        %v2189 = vadd.f32 %v1959, %v2170
        %v2190 = vadd.f32 %v1960, %v2172
        %v2191 = vadd.f32 %v1961, %v2175
        %v2192 = vadd.f32 %v1962, %v2177
        %v2193 = vadd.f32 %v1963, %v2180
        %v2194 = vadd.f32 %v1964, %v2182
        %v2195 = vadd.f32 %v1965, %v2185
        %v2196 = vadd.f32 %v1966, %v2187
        %2197 = vst [vmem:[#allocation2] sm:$0xff] %v2189
        %2198 = vst [vmem:[#allocation2 + $0x8] sm:$0xff] %v2190
        %2199 = vst [vmem:[#allocation2 + $0x10] sm:$0xff] %v2191
        %2200 = vst [vmem:[#allocation2 + $0x18] sm:$0xff] %v2192
        %2201 = vst [vmem:[#allocation2 + $0x20] sm:$0xff] %v2193
        %2202 = vst [vmem:[#allocation2 + $0x28] sm:$0xff] %v2194
        %2203 = vst [vmem:[#allocation2 + $0x30] sm:$0xff] %v2195
        %2204 = vst [vmem:[#allocation2 + $0x38] sm:$0xff] %v2196
        %v2205 = vld [vmem:[#allocation2] sm:$0xff]
        %v2206 = vld [vmem:[#allocation2 + $0x8] sm:$0xff]
        %v2207 = vld [vmem:[#allocation2 + $0x10] sm:$0xff]
        %v2208 = vld [vmem:[#allocation2 + $0x18] sm:$0xff]
        %v2209 = vld [vmem:[#allocation2 + $0x20] sm:$0xff]
        %v2210 = vld [vmem:[#allocation2 + $0x28] sm:$0xff]
        %v2211 = vld [vmem:[#allocation2 + $0x30] sm:$0xff]
        %v2212 = vld [vmem:[#allocation2 + $0x38] sm:$0xff]
        %s2213 = scalar_lea.vmem %s694, 384
        %v2214 = vld [vmem:[%s2213] sm:$0xf]
        %v2215 = vld [vmem:[%s2213 + $0x4] sm:$0xf]
        %v2216 = vld [vmem:[%s2213 + $0x8] sm:$0xf]
        %v2217 = vld [vmem:[%s2213 + $0xc] sm:$0xf]
        %v2218 = vld [vmem:[%s2213 + $0x10] sm:$0xf]
        %v2219 = vld [vmem:[%s2213 + $0x14] sm:$0xf]
        %v2220 = vld [vmem:[%s2213 + $0x18] sm:$0xf]
        %v2221 = vld [vmem:[%s2213 + $0x1c] sm:$0xf]
        %v2222 = vld [vmem:[%s2213 + $0x20] sm:$0xf]
        %v2223 = vld [vmem:[%s2213 + $0x24] sm:$0xf]
        %v2224 = vld [vmem:[%s2213 + $0x28] sm:$0xf]
        %v2225 = vld [vmem:[%s2213 + $0x2c] sm:$0xf]
        %v2226 = vld [vmem:[%s2213 + $0x30] sm:$0xf]
        %v2227 = vld [vmem:[%s2213 + $0x34] sm:$0xf]
        %v2228 = vld [vmem:[%s2213 + $0x38] sm:$0xf]
        %v2229 = vld [vmem:[%s2213 + $0x3c] sm:$0xf]
        %v2231 = vunpack.c.l.b16 %v1100
        %v2232 = vpack.c.b16 %v1177, %v1176
        %v2233 = vpack.c.b16 %v1179, %v1178
        %v2234 = vpack.c.b16 %v1181, %v1180
        %v2235 = vpack.c.b16 %v2231, %v1182
        %v2256 = vunpack.c.l.b16 %v2214
        %v2257 = vunpack.c.l.b16 %v2215
        %v2258 = vunpack.c.l.b16 %v2216
        %v2259 = vunpack.c.l.b16 %v2217
        %v2260 = vunpack.c.l.b16 %v2218
        %v2261 = vunpack.c.l.b16 %v2219
        %v2262 = vunpack.c.l.b16 %v2220
        %v2263 = vunpack.c.l.b16 %v2221
        %v2264 = vunpack.c.l.b16 %v2222
        %v2265 = vunpack.c.l.b16 %v2223
        %v2266 = vunpack.c.l.b16 %v2224
        %v2267 = vunpack.c.l.b16 %v2225
        %v2268 = vunpack.c.l.b16 %v2226
        %v2269 = vunpack.c.l.b16 %v2227
        %v2270 = vunpack.c.l.b16 %v2228
        %v2271 = vunpack.c.l.b16 %v2229
        %v2272 = vpack.c.b16 %v2257, %v2256
        %v2273 = vpack.c.b16 %v2259, %v2258
        %v2274 = vpack.c.b16 %v2261, %v2260
        %v2275 = vpack.c.b16 %v2263, %v2262
        %v2276 = vpack.c.b16 %v2265, %v2264
        %v2277 = vpack.c.b16 %v2267, %v2266
        %v2278 = vpack.c.b16 %v2269, %v2268
        %v2279 = vpack.c.b16 %v2271, %v2270
        %2288 = vmatpush.bf16.msra.mxu0 %v2279
        %2289 = vmatpush.bf16.msra.mxu0 %v2278
        %2290 = vmatpush.bf16.msra.mxu0 %v2277
        %2291 = vmatpush.bf16.msra.mxu0 %v2276
        %2292 = vmatpush.bf16.msra.mxu0 %v2275
        %2293 = vmatpush.bf16.msra.mxu0 %v2274
        %2294 = vmatpush.bf16.msra.mxu0 %v2273
        %2295 = vmatpush.bf16.msra.mxu0 %v2272
        %2296 = vmatmul.bf16.gmra.mxu0 %v2232
        %v2297 = vpop.f32.mrf.mxu0
        %v2298 = vadd.f32 0.0, %v2297
        %v2299 = vpop.f32.mrf.mxu0
        %v2300 = vadd.f32 0.0, %v2299
        %2301 = vmatmul.bf16.gmra.mxu0 %v2233
        %v2302 = vpop.f32.mrf.mxu0
        %v2303 = vadd.f32 0.0, %v2302
        %v2304 = vpop.f32.mrf.mxu0
        %v2305 = vadd.f32 0.0, %v2304
        %2306 = vmatmul.bf16.gmra.mxu0 %v2234
        %v2307 = vpop.f32.mrf.mxu0
        %v2308 = vadd.f32 0.0, %v2307
        %v2309 = vpop.f32.mrf.mxu0
        %v2310 = vadd.f32 0.0, %v2309
        %2311 = vmatmul.bf16.gmra.mxu0 %v2235
        %v2312 = vpop.f32.mrf.mxu0
        %v2313 = vadd.f32 0.0, %v2312
        %v2314 = vpop.f32.mrf.mxu0
        %v2315 = vadd.f32 0.0, %v2314
        %2316 = vdwg.mxu0
        %v2317 = vadd.f32 %v2205, %v2298
        %v2318 = vadd.f32 %v2206, %v2300
        %v2319 = vadd.f32 %v2207, %v2303
        %v2320 = vadd.f32 %v2208, %v2305
        %v2321 = vadd.f32 %v2209, %v2308
        %v2322 = vadd.f32 %v2210, %v2310
        %v2323 = vadd.f32 %v2211, %v2313
        %v2324 = vadd.f32 %v2212, %v2315
        %2325 = vst [vmem:[#allocation2] sm:$0xff] %v2317
        %2326 = vst [vmem:[#allocation2 + $0x8] sm:$0xff] %v2318
        %2327 = vst [vmem:[#allocation2 + $0x10] sm:$0xff] %v2319
        %2328 = vst [vmem:[#allocation2 + $0x18] sm:$0xff] %v2320
        %2329 = vst [vmem:[#allocation2 + $0x20] sm:$0xff] %v2321
        %2330 = vst [vmem:[#allocation2 + $0x28] sm:$0xff] %v2322
        %2331 = vst [vmem:[#allocation2 + $0x30] sm:$0xff] %v2323
        %2332 = vst [vmem:[#allocation2 + $0x38] sm:$0xff] %v2324
        %v2333 = vld [vmem:[#allocation2] sm:$0xff]
        %v2334 = vld [vmem:[#allocation2 + $0x8] sm:$0xff]
        %v2335 = vld [vmem:[#allocation2 + $0x10] sm:$0xff]
        %v2336 = vld [vmem:[#allocation2 + $0x18] sm:$0xff]
        %v2337 = vld [vmem:[#allocation2 + $0x20] sm:$0xff]
        %v2338 = vld [vmem:[#allocation2 + $0x28] sm:$0xff]
        %v2339 = vld [vmem:[#allocation2 + $0x30] sm:$0xff]
        %v2340 = vld [vmem:[#allocation2 + $0x38] sm:$0xff]
        %s2341 = scalar_lea.vmem %s694, 448
        %v2342 = vld [vmem:[%s2341] sm:$0xf]
        %v2343 = vld [vmem:[%s2341 + $0x4] sm:$0xf]
        %v2344 = vld [vmem:[%s2341 + $0x8] sm:$0xf]
        %v2345 = vld [vmem:[%s2341 + $0xc] sm:$0xf]
        %v2346 = vld [vmem:[%s2341 + $0x10] sm:$0xf]
        %v2347 = vld [vmem:[%s2341 + $0x14] sm:$0xf]
        %v2348 = vld [vmem:[%s2341 + $0x18] sm:$0xf]
        %v2349 = vld [vmem:[%s2341 + $0x1c] sm:$0xf]
        %v2350 = vld [vmem:[%s2341 + $0x20] sm:$0xf]
        %v2351 = vld [vmem:[%s2341 + $0x24] sm:$0xf]
        %v2352 = vld [vmem:[%s2341 + $0x28] sm:$0xf]
        %v2353 = vld [vmem:[%s2341 + $0x2c] sm:$0xf]
        %v2354 = vld [vmem:[%s2341 + $0x30] sm:$0xf]
        %v2355 = vld [vmem:[%s2341 + $0x34] sm:$0xf]
        %v2356 = vld [vmem:[%s2341 + $0x38] sm:$0xf]
        %v2357 = vld [vmem:[%s2341 + $0x3c] sm:$0xf]
        %v2359 = vunpack.c.l.b16 %v1110
        %v2360 = vpack.c.b16 %v1319, %v1318
        %v2361 = vpack.c.b16 %v1321, %v1320
        %v2362 = vpack.c.b16 %v1323, %v1322
        %v2363 = vpack.c.b16 %v2359, %v1324
        %v2384 = vunpack.c.l.b16 %v2342
        %v2385 = vunpack.c.l.b16 %v2343
        %v2386 = vunpack.c.l.b16 %v2344
        %v2387 = vunpack.c.l.b16 %v2345
        %v2388 = vunpack.c.l.b16 %v2346
        %v2389 = vunpack.c.l.b16 %v2347
        %v2390 = vunpack.c.l.b16 %v2348
        %v2391 = vunpack.c.l.b16 %v2349
        %v2392 = vunpack.c.l.b16 %v2350
        %v2393 = vunpack.c.l.b16 %v2351
        %v2394 = vunpack.c.l.b16 %v2352
        %v2395 = vunpack.c.l.b16 %v2353
        %v2396 = vunpack.c.l.b16 %v2354
        %v2397 = vunpack.c.l.b16 %v2355
        %v2398 = vunpack.c.l.b16 %v2356
        %v2399 = vunpack.c.l.b16 %v2357
        %v2400 = vpack.c.b16 %v2385, %v2384
        %v2401 = vpack.c.b16 %v2387, %v2386
        %v2402 = vpack.c.b16 %v2389, %v2388
        %v2403 = vpack.c.b16 %v2391, %v2390
        %v2404 = vpack.c.b16 %v2393, %v2392
        %v2405 = vpack.c.b16 %v2395, %v2394
        %v2406 = vpack.c.b16 %v2397, %v2396
        %v2407 = vpack.c.b16 %v2399, %v2398
        %2416 = vmatpush.bf16.msra.mxu0 %v2407
        %2417 = vmatpush.bf16.msra.mxu0 %v2406
        %2418 = vmatpush.bf16.msra.mxu0 %v2405
        %2419 = vmatpush.bf16.msra.mxu0 %v2404
        %2420 = vmatpush.bf16.msra.mxu0 %v2403
        %2421 = vmatpush.bf16.msra.mxu0 %v2402
        %2422 = vmatpush.bf16.msra.mxu0 %v2401
        %2423 = vmatpush.bf16.msra.mxu0 %v2400
        %2424 = vmatmul.bf16.gmra.mxu0 %v2360
        %v2425 = vpop.f32.mrf.mxu0
        %v2426 = vadd.f32 0.0, %v2425
        %v2427 = vpop.f32.mrf.mxu0
        %v2428 = vadd.f32 0.0, %v2427
        %2429 = vmatmul.bf16.gmra.mxu0 %v2361
        %v2430 = vpop.f32.mrf.mxu0
        %v2431 = vadd.f32 0.0, %v2430
        %v2432 = vpop.f32.mrf.mxu0
        %v2433 = vadd.f32 0.0, %v2432
        %2434 = vmatmul.bf16.gmra.mxu0 %v2362
        %v2435 = vpop.f32.mrf.mxu0
        %v2436 = vadd.f32 0.0, %v2435
        %v2437 = vpop.f32.mrf.mxu0
        %v2438 = vadd.f32 0.0, %v2437
        %2439 = vmatmul.bf16.gmra.mxu0 %v2363
        %v2440 = vpop.f32.mrf.mxu0
        %v2441 = vadd.f32 0.0, %v2440
        %v2442 = vpop.f32.mrf.mxu0
        %v2443 = vadd.f32 0.0, %v2442
        %2444 = vdwg.mxu0
        %v2445 = vadd.f32 %v2333, %v2426
        %v2446 = vadd.f32 %v2334, %v2428
        %v2447 = vadd.f32 %v2335, %v2431
        %v2448 = vadd.f32 %v2336, %v2433
        %v2449 = vadd.f32 %v2337, %v2436
        %v2450 = vadd.f32 %v2338, %v2438
        %v2451 = vadd.f32 %v2339, %v2441
        %v2452 = vadd.f32 %v2340, %v2443
        %2453 = vst [vmem:[#allocation2] sm:$0xff] %v2445
        %2454 = vst [vmem:[#allocation2 + $0x8] sm:$0xff] %v2446
        %2455 = vst [vmem:[#allocation2 + $0x10] sm:$0xff] %v2447
        %2456 = vst [vmem:[#allocation2 + $0x18] sm:$0xff] %v2448
        %2457 = vst [vmem:[#allocation2 + $0x20] sm:$0xff] %v2449
        %2458 = vst [vmem:[#allocation2 + $0x28] sm:$0xff] %v2450
        %2459 = vst [vmem:[#allocation2 + $0x30] sm:$0xff] %v2451
        %2460 = vst [vmem:[#allocation2 + $0x38] sm:$0xff] %v2452
        %v2461 = vld [vmem:[#allocation2] sm:$0xff]
        %v2462 = vld [vmem:[#allocation2 + $0x8] sm:$0xff]
        %v2463 = vld [vmem:[#allocation2 + $0x10] sm:$0xff]
        %v2464 = vld [vmem:[#allocation2 + $0x18] sm:$0xff]
        %v2465 = vld [vmem:[#allocation2 + $0x20] sm:$0xff]
        %v2466 = vld [vmem:[#allocation2 + $0x28] sm:$0xff]
        %v2467 = vld [vmem:[#allocation2 + $0x30] sm:$0xff]
        %v2468 = vld [vmem:[#allocation2 + $0x38] sm:$0xff]
        %v2470 = vshrl.u32 %v1100, 16
        %v2472 = vrot.slane %v2470, 4
        %v2473 = vshll.u32 %v1100, 16
        %v2475 = vrot.slane %v2473, 5
        %v2476 = vor.u32 %v2472, %v2475
        %v2477 = vrot.slane %v2476, 4
        %v2479 = vshll.u32 %v1101, 16
        %v2481 = vrot.slane %v2479, 5
        %v2482 = vsel %vm1436, %v2477, %v2481
        %s2483 = scalar_lea.vmem %s694, 512
        %v2484 = vld [vmem:[%s2483] sm:$0xf]
        %v2485 = vld [vmem:[%s2483 + $0x4] sm:$0xf]
        %v2486 = vld [vmem:[%s2483 + $0x8] sm:$0xf]
        %v2487 = vld [vmem:[%s2483 + $0xc] sm:$0xf]
        %v2488 = vld [vmem:[%s2483 + $0x10] sm:$0xf]
        %v2489 = vld [vmem:[%s2483 + $0x14] sm:$0xf]
        %v2490 = vld [vmem:[%s2483 + $0x18] sm:$0xf]
        %v2491 = vld [vmem:[%s2483 + $0x1c] sm:$0xf]
        %v2492 = vld [vmem:[%s2483 + $0x20] sm:$0xf]
        %v2493 = vld [vmem:[%s2483 + $0x24] sm:$0xf]
        %v2494 = vld [vmem:[%s2483 + $0x28] sm:$0xf]
        %v2495 = vld [vmem:[%s2483 + $0x2c] sm:$0xf]
        %v2496 = vld [vmem:[%s2483 + $0x30] sm:$0xf]
        %v2497 = vld [vmem:[%s2483 + $0x34] sm:$0xf]
        %v2498 = vld [vmem:[%s2483 + $0x38] sm:$0xf]
        %v2499 = vld [vmem:[%s2483 + $0x3c] sm:$0xf]
        %v2500 = vunpack.c.l.b16 %v2482
        %v2501 = vpack.c.b16 %v1568, %v1567
        %v2502 = vpack.c.b16 %v1570, %v1569
        %v2503 = vpack.c.b16 %v1572, %v1571
        %v2504 = vpack.c.b16 %v2500, %v1573
        %v2525 = vunpack.c.l.b16 %v2484
        %v2526 = vunpack.c.l.b16 %v2485
        %v2527 = vunpack.c.l.b16 %v2486
        %v2528 = vunpack.c.l.b16 %v2487
        %v2529 = vunpack.c.l.b16 %v2488
        %v2530 = vunpack.c.l.b16 %v2489
        %v2531 = vunpack.c.l.b16 %v2490
        %v2532 = vunpack.c.l.b16 %v2491
        %v2533 = vunpack.c.l.b16 %v2492
        %v2534 = vunpack.c.l.b16 %v2493
        %v2535 = vunpack.c.l.b16 %v2494
        %v2536 = vunpack.c.l.b16 %v2495
        %v2537 = vunpack.c.l.b16 %v2496
        %v2538 = vunpack.c.l.b16 %v2497
        %v2539 = vunpack.c.l.b16 %v2498
        %v2540 = vunpack.c.l.b16 %v2499
        %v2541 = vpack.c.b16 %v2526, %v2525
        %v2542 = vpack.c.b16 %v2528, %v2527
        %v2543 = vpack.c.b16 %v2530, %v2529
        %v2544 = vpack.c.b16 %v2532, %v2531
        %v2545 = vpack.c.b16 %v2534, %v2533
        %v2546 = vpack.c.b16 %v2536, %v2535
        %v2547 = vpack.c.b16 %v2538, %v2537
        %v2548 = vpack.c.b16 %v2540, %v2539
        %2557 = vmatpush.bf16.msra.mxu0 %v2548
        %2558 = vmatpush.bf16.msra.mxu0 %v2547
        %2559 = vmatpush.bf16.msra.mxu0 %v2546
        %2560 = vmatpush.bf16.msra.mxu0 %v2545
        %2561 = vmatpush.bf16.msra.mxu0 %v2544
        %2562 = vmatpush.bf16.msra.mxu0 %v2543
        %2563 = vmatpush.bf16.msra.mxu0 %v2542
        %2564 = vmatpush.bf16.msra.mxu0 %v2541
        %2565 = vmatmul.bf16.gmra.mxu0 %v2501
        %v2566 = vpop.f32.mrf.mxu0
        %v2567 = vadd.f32 0.0, %v2566
        %v2568 = vpop.f32.mrf.mxu0
        %v2569 = vadd.f32 0.0, %v2568
        %2570 = vmatmul.bf16.gmra.mxu0 %v2502
        %v2571 = vpop.f32.mrf.mxu0
        %v2572 = vadd.f32 0.0, %v2571
        %v2573 = vpop.f32.mrf.mxu0
        %v2574 = vadd.f32 0.0, %v2573
        %2575 = vmatmul.bf16.gmra.mxu0 %v2503
        %v2576 = vpop.f32.mrf.mxu0
        %v2577 = vadd.f32 0.0, %v2576
        %v2578 = vpop.f32.mrf.mxu0
        %v2579 = vadd.f32 0.0, %v2578
        %2580 = vmatmul.bf16.gmra.mxu0 %v2504
        %v2581 = vpop.f32.mrf.mxu0
        %v2582 = vadd.f32 0.0, %v2581
        %v2583 = vpop.f32.mrf.mxu0
        %v2584 = vadd.f32 0.0, %v2583
        %2585 = vdwg.mxu0
        %v2586 = vadd.f32 %v2461, %v2567
        %v2587 = vadd.f32 %v2462, %v2569
        %v2588 = vadd.f32 %v2463, %v2572
        %v2589 = vadd.f32 %v2464, %v2574
        %v2590 = vadd.f32 %v2465, %v2577
        %v2591 = vadd.f32 %v2466, %v2579
        %v2592 = vadd.f32 %v2467, %v2582
        %v2593 = vadd.f32 %v2468, %v2584
        %2594 = vst [vmem:[#allocation2] sm:$0xff] %v2586
        %2595 = vst [vmem:[#allocation2 + $0x8] sm:$0xff] %v2587
        %2596 = vst [vmem:[#allocation2 + $0x10] sm:$0xff] %v2588
        %2597 = vst [vmem:[#allocation2 + $0x18] sm:$0xff] %v2589
        %2598 = vst [vmem:[#allocation2 + $0x20] sm:$0xff] %v2590
        %2599 = vst [vmem:[#allocation2 + $0x28] sm:$0xff] %v2591
        %2600 = vst [vmem:[#allocation2 + $0x30] sm:$0xff] %v2592
        %2601 = vst [vmem:[#allocation2 + $0x38] sm:$0xff] %v2593
        %v2602 = vld [vmem:[#allocation2] sm:$0xff]
        %v2603 = vld [vmem:[#allocation2 + $0x8] sm:$0xff]
        %v2604 = vld [vmem:[#allocation2 + $0x10] sm:$0xff]
        %v2605 = vld [vmem:[#allocation2 + $0x18] sm:$0xff]
        %v2606 = vld [vmem:[#allocation2 + $0x20] sm:$0xff]
        %v2607 = vld [vmem:[#allocation2 + $0x28] sm:$0xff]
        %v2608 = vld [vmem:[#allocation2 + $0x30] sm:$0xff]
        %v2609 = vld [vmem:[#allocation2 + $0x38] sm:$0xff]
        %v2610 = vpack.c.bf16 %v2602, %v2602
        %v2611 = vpack.c.bf16 %v2603, %v2603
        %v2612 = vpack.c.bf16 %v2604, %v2604
        %v2613 = vpack.c.bf16 %v2605, %v2605
        %v2614 = vpack.c.bf16 %v2606, %v2606
        %v2615 = vpack.c.bf16 %v2607, %v2607
        %v2616 = vpack.c.bf16 %v2608, %v2608
        %v2617 = vpack.c.bf16 %v2609, %v2609
        %2618 = vst [vmem:[%s703] sm:$0xf] %v2610
        %2619 = vst [vmem:[%s703 + $0x4] sm:$0xf] %v2611
        %2620 = vst [vmem:[%s703 + $0x8] sm:$0xf] %v2612
        %2621 = vst [vmem:[%s703 + $0xc] sm:$0xf] %v2613
        %2622 = vst [vmem:[%s703 + $0x10] sm:$0xf] %v2614
        %2623 = vst [vmem:[%s703 + $0x14] sm:$0xf] %v2615
        %2624 = vst [vmem:[%s703 + $0x18] sm:$0xf] %v2616
        %2625 = vst [vmem:[%s703 + $0x1c] sm:$0xf] %v2617
        %v2626 = vadd.f32 %v2602, %v2603
        %v2627 = vadd.f32 %v2626, %v2604
        %v2628 = vadd.f32 %v2627, %v2605
        %v2629 = vadd.f32 %v2628, %v2606
        %v2630 = vadd.f32 %v2629, %v2607
        %v2631 = vadd.f32 %v2630, %v2608
        %v2632 = vadd.f32 %v2631, %v2609
        %v2633 = vrot.slane %v2632, 4
        %v2634 = vadd.f32 %v2632, %v2633
        %v2635 = vrot.slane %v2634, 2
        %v2636 = vadd.f32 %v2634, %v2635
        %v2637 = vrot.slane %v2636, 1
        %v2638 = vadd.f32 %v2636, %v2637
        %2639 = vst [vmem:[%s711] sm:$0x1] %v2638
        %v2640 = vmul.f32 %v2602, %v2602
        %v2641 = vmul.f32 %v2603, %v2603
        %v2642 = vmul.f32 %v2604, %v2604
        %v2643 = vmul.f32 %v2605, %v2605
        %v2644 = vmul.f32 %v2606, %v2606
        %v2645 = vmul.f32 %v2607, %v2607
        %v2646 = vmul.f32 %v2608, %v2608
        %v2647 = vmul.f32 %v2609, %v2609
        %v2648 = vadd.f32 %v2640, %v2641
        %v2649 = vadd.f32 %v2648, %v2642
        %v2650 = vadd.f32 %v2649, %v2643
        %v2651 = vadd.f32 %v2650, %v2644
        %v2652 = vadd.f32 %v2651, %v2645
        %v2653 = vadd.f32 %v2652, %v2646
        %v2654 = vadd.f32 %v2653, %v2647
        %v2655 = vrot.slane %v2654, 4
        %v2656 = vadd.f32 %v2654, %v2655
        %v2657 = vrot.slane %v2656, 2
        %v2658 = vadd.f32 %v2656, %v2657
        %v2659 = vrot.slane %v2658, 1
        %v2660 = vadd.f32 %v2658, %v2659
        %2661 = vst [vmem:[%s718] sm:$0x1] %v2660
        %s2662 = smul.u32 8, %s24
        %p2663 = scmp.lt.s32.totalorder %s23, 0
        %s2664 = scalar_select %p2663, %s23, 0
        %p2665 = scmp.lt.s32.totalorder %s2662, 15
        %s2666 = scalar_select %p2665, %s2662, 15
        %s2667 = smul.addr %s2664, 16
        %s2668 = sadd.s32 %s2666, %s2667
        %s2669 = smul.addr %s2668, 4
        %s2670 = scalar_lea.vmem %s5, %s2669
        %p2671 = scmp.lt.s32.totalorder %s23, 0
        %s2672 = scalar_select %p2671, %s23, 0
        %p2673 = scmp.lt.s32.totalorder %s24, 1
        %s2674 = scalar_select %p2673, %s24, 1
        %s2675 = smul.addr %s2672, 2
        %s2676 = sadd.s32 %s2674, %s2675
        %s2677 = scalar_lea.vmem %s6, %s2676
        %p2678 = scmp.lt.s32.totalorder %s23, 0
        %s2679 = scalar_select %p2678, %s23, 0
        %p2680 = scmp.lt.s32.totalorder %s24, 1
        %s2681 = scalar_select %p2680, %s24, 1
        %s2682 = smul.addr %s2679, 2
        %s2683 = sadd.s32 %s2681, %s2682
        %s2684 = scalar_lea.vmem %s7, %s2683
        // Predicated region
        $region82: #{_lambda_.6} parent=76 // pred_check
          %p2685 = pneg %p178
        $region83: #{_lambda_.6} parent=76 // pred_check_branch
          %2687 = sbr.rel (%p2685) target = $region85
        $region84: #{_lambda_.6} parent=76 // pred_region
          %s2688 = smul.u32 8, %s24
        $region85: #{_lambda_.6} parent=76 // pred_fallthru
          _
        // Predicated region
        $region86: #{_lambda_.6} parent=76 // pred_check
          %p2689 = pneg %p206
        $region87: #{_lambda_.6} parent=76 // pred_check_branch
          %2691 = sbr.rel (%p2689) target = $region89
        $region88: #{_lambda_.6} parent=76 // pred_region
          _
        $region89: #{_lambda_.6} parent=76 // pred_fallthru
          _
        // Predicated region
        $region90: #{_lambda_.6} parent=76 // pred_check
          %p2692 = pneg %p234
        $region91: #{_lambda_.6} parent=76 // pred_check_branch
          %2694 = sbr.rel (%p2692) target = $region93
        $region92: #{_lambda_.6} parent=76 // pred_region
          _
        $region93: #{_lambda_.6} parent=76 // pred_fallthru
          _
      $region77: #{_lambda_.6} parent=5 // pred_fallthru
        _
      %p2695 = scmp.le.s32.totalorder 2, %s14
      // Predicated region
      $region94: #{_lambda_.6} parent=5 // pred_check
        %p2696 = pneg %p2695
      $region95: #{_lambda_.6} parent=5 // pred_check_branch
        %2698 = sbr.rel (%p2696) target = $region97
      $region96: #{_lambda_.6} parent=5 // pred_region
        %s2699 = ssub.s32 %s14, 2
        // Predicated region
        $region98: #{_lambda_.6} parent=96 // pred_check
          %p2700 = pneg %p184
        $region99: #{_lambda_.6} parent=96 // pred_check_branch
          %2702 = sbr.rel (%p2700) target = $region101
        $region100: #{_lambda_.6} parent=96 // pred_region
          %s2703 = smul.u32 8, %s26
          %p2704 = scmp.lt.s32.totalorder %s25, 0
          %s2705 = scalar_select %p2704, %s25, 0
          %p2706 = scmp.lt.s32.totalorder %s2703, 15
          %s2707 = scalar_select %p2706, %s2703, 15
          %s2708 = smul.addr %s2705, 16
          %s2709 = sadd.s32 %s2707, %s2708
          %s2710 = smul.addr %s2709, 4
          %s2711 = scalar_lea.vmem %s5, %s2710
        $region101: #{_lambda_.6} parent=96 // pred_fallthru
          _
        // Predicated region
        $region102: #{_lambda_.6} parent=96 // pred_check
          %p2712 = pneg %p212
        $region103: #{_lambda_.6} parent=96 // pred_check_branch
          %2714 = sbr.rel (%p2712) target = $region105
        $region104: #{_lambda_.6} parent=96 // pred_region
          %p2715 = scmp.lt.s32.totalorder %s25, 0
          %s2716 = scalar_select %p2715, %s25, 0
          %p2717 = scmp.lt.s32.totalorder %s26, 1
          %s2718 = scalar_select %p2717, %s26, 1
          %s2719 = smul.addr %s2716, 2
          %s2720 = sadd.s32 %s2718, %s2719
          %s2721 = scalar_lea.vmem %s6, %s2720
        $region105: #{_lambda_.6} parent=96 // pred_fallthru
          _
        // Predicated region
        $region106: #{_lambda_.6} parent=96 // pred_check
          %p2722 = pneg %p240
        $region107: #{_lambda_.6} parent=96 // pred_check_branch
          %2724 = sbr.rel (%p2722) target = $region109
        $region108: #{_lambda_.6} parent=96 // pred_region
          %p2725 = scmp.lt.s32.totalorder %s25, 0
          %s2726 = scalar_select %p2725, %s25, 0
          %p2727 = scmp.lt.s32.totalorder %s26, 1
          %s2728 = scalar_select %p2727, %s26, 1
          %s2729 = smul.addr %s2726, 2
          %s2730 = sadd.s32 %s2728, %s2729
          %s2731 = scalar_lea.vmem %s7, %s2730
        $region109: #{_lambda_.6} parent=96 // pred_fallthru
          _
      $region97: #{_lambda_.6} parent=5 // pred_fallthru
        _
    $region6: #{_lambda_.6} parent=1 // loop_footer
      %s18 = sadd.s32 1, %s14
    $region7: #{_lambda_.6} parent=1 // loop_footer_branch
      %13 = sbr.rel target = $region3
    $region8: #{_lambda_.6} parent=1 // loop_exit
      _

</llo_original>
